<compile_context>
chip_gen: v7x
topology: tpu7x:2x2x1
jax: 0.10.0
libtpu: 0.0.40
codegen_flags: <defaults>
</compile_context>

<pallas_src>
import collections

import jax
import jax.numpy as jnp
from jax import lax
from jax.experimental import pallas as pl
from jax.experimental.pallas import tpu as pltpu

Genotype = collections.namedtuple("Genotype", ["aggregation", "aggregation_concat"])
GENOTYPE = Genotype(
    aggregation=[("max_pool_3x3", 0), ("dil_conv_3x3", 1), ("avg_pool_3x3", 2)],
    aggregation_concat=[1, 3],
)
STEPS = 1

_PW = 8   # sublane-aligned left/right W-pad of the in-kernel scratch planes
_SH = 8   # in-kernel H-strip height (acc bounded to 16 vregs, matmul M = _SH * W)


# ----------------------------------------------------------------------------
# Kernel: for one batch element computes
#   s3 = max_pool3x3(s0) + dil_conv3x3(s1) + avg_pool3x3(s2)
# and writes the fused concat  out = [s1, s3]  along channels.
# ----------------------------------------------------------------------------
def agg_cell_kernel(s0_ref, s1_ref, s2_ref, inv_cnt_ref, dw_ref, pw_ref, bias_ref,
                    out_ref, p0, p1, p2, copy_sem):
    H = s0_ref.shape[1]
    W = s0_ref.shape[2]
    C = s0_ref.shape[3]
    PWD = W + 2 * _PW

    # ---- concat half 1: out[..., 0:C] = s1 via local async DMA (off the vector slots),
    #      started first so it overlaps all compute below.
    concat_copy = pltpu.make_async_copy(s1_ref, out_ref.at[:, :, :, 0:C], copy_sem)
    concat_copy.start()

    # ---- stage padded planes: interior + only the halo cells the stencils read.
    #      Pad columns 0.._PW-3 and _PW+W+2.. of the 8-wide halo blocks are never read;
    #      halo is rewritten every grid step (scratch is per-core under "parallel").
    # p0: s0 with -inf border (max pool).
    p0[0:1] = jnp.full((1, PWD, C), -jnp.inf, jnp.float32)
    p0[H + 1:H + 2] = jnp.full((1, PWD, C), -jnp.inf, jnp.float32)
    p0[1:H + 1, _PW - 8:_PW, :] = jnp.full((H, 8, C), -jnp.inf, jnp.float32)
    p0[1:H + 1, _PW + W:_PW + W + 8, :] = jnp.full((H, 8, C), -jnp.inf, jnp.float32)
    p0[1:H + 1, _PW:_PW + W, :] = s0_ref[0]
    # p2: s2 with zero border (avg pool; count_include_pad=False handled by inv_cnt).
    p2[0:1] = jnp.zeros((1, PWD, C), jnp.float32)
    p2[H + 1:H + 2] = jnp.zeros((1, PWD, C), jnp.float32)
    p2[1:H + 1, _PW - 8:_PW, :] = jnp.zeros((H, 8, C), jnp.float32)
    p2[1:H + 1, _PW + W:_PW + W + 8, :] = jnp.zeros((H, 8, C), jnp.float32)
    p2[1:H + 1, _PW:_PW + W, :] = s2_ref[0]
    # p1: relu(s1) with zero border (dilated conv, pad 2).  ReLU hoisted (applied once).
    p1[0:2] = jnp.zeros((2, PWD, C), jnp.float32)
    p1[H + 2:H + 4] = jnp.zeros((2, PWD, C), jnp.float32)
    p1[2:H + 2, _PW - 8:_PW, :] = jnp.zeros((H, 8, C), jnp.float32)
    p1[2:H + 2, _PW + W:_PW + W + 8, :] = jnp.zeros((H, 8, C), jnp.float32)
    p1[2:H + 2, _PW:_PW + W, :] = jnp.maximum(s1_ref[0], 0.0)

    dw = dw_ref[...]          # (3, 3, C) depthwise weights, read once (hoisted)

    # ---- concat half 2: s3 computed per H-strip, stored exactly once per strip -------
    for si in range(H // _SH):
        h0 = si * _SH

        # op @0 : max_pool_3x3 (stride 1, pad 1) — separable: W pass then H pass.
        w0 = jnp.maximum(
            jnp.maximum(p0[h0:h0 + _SH + 2, _PW - 1:_PW - 1 + W, :],
                        p0[h0:h0 + _SH + 2, _PW:_PW + W, :]),
            p0[h0:h0 + _SH + 2, _PW + 1:_PW + 1 + W, :])
        s3 = jnp.maximum(jnp.maximum(w0[0:_SH], w0[1:_SH + 1]), w0[2:_SH + 2])

        # op @2 : avg_pool_3x3 (count_include_pad=False) — separable sum * 1/cnt.
        w2 = (p2[h0:h0 + _SH + 2, _PW - 1:_PW - 1 + W, :]
              + p2[h0:h0 + _SH + 2, _PW:_PW + W, :]
              + p2[h0:h0 + _SH + 2, _PW + 1:_PW + 1 + W, :])
        s3 = s3 + ((w2[0:_SH] + w2[1:_SH + 1] + w2[2:_SH + 2])
                   * inv_cnt_ref[h0:h0 + _SH])

        # op @1 : dil_conv_3x3 = ReLU(staged) -> depthwise 3x3 dil 2 -> 1x1 (bf16 MXU,
        #         f32 accumulate; BN scale folded into pw on host) -> + BN bias.
        acc = None
        for kh in range(3):
            r0 = h0 + 2 * kh
            for kw in range(3):
                c0 = _PW - 2 + 2 * kw
                term = p1[r0:r0 + _SH, c0:c0 + W, :] * dw[kh, kw].reshape(1, 1, C)
                acc = term if acc is None else acc + term
        h2 = (jnp.dot(acc.astype(jnp.bfloat16).reshape(_SH * W, C), pw_ref[...],
                      preferred_element_type=jnp.float32)
              + bias_ref[...]).reshape(_SH, W, C)
        s3 = s3 + h2

        out_ref[0, h0:h0 + _SH, :, C:2 * C] = s3

    concat_copy.wait()


def aggregation_cell_forward(s0, s1, s2, params, drop_prob=0.0):
    """Eval-mode forward of AggregationCell.  Inputs are NHWC, C == 128."""
    del drop_prob  # eval mode / drop_prob == 0.0 -> drop_path is a no-op
    N, H, W, C = s0.shape
    assert s1.shape == s0.shape and s2.shape == s0.shape
    assert C == 128, "AggregationCell hard-codes C == 128 (lane-aligned concat slice)"
    assert W % 8 == 0, "W must be a multiple of 8 (sublane tiling / layout-free reshape)"
    assert H % _SH == 0, "H must be a multiple of the in-kernel strip height"

    # 1/(# valid entries of each 3x3 window) — position-only, precomputed on host and
    # pre-broadcast to (H, W, C) so the in-kernel multiply is a plain vmul.
    rows = jnp.arange(H)
    cols = jnp.arange(W)
    rcnt = (jnp.minimum(rows + 1, H - 1) - jnp.maximum(rows - 1, 0) + 1).astype(jnp.float32)
    ccnt = (jnp.minimum(cols + 1, W - 1) - jnp.maximum(cols - 1, 0) + 1).astype(jnp.float32)
    inv_cnt = jnp.broadcast_to(
        (1.0 / (rcnt[:, None] * ccnt[None, :]))[:, :, None], (H, W, C))

    dw_w = params["dw"]                                                   # (3, 3, C)
    pw_scaled = (params["pw"] * params["bn_scale"][None, :]).astype(jnp.bfloat16)
    bn_bias = params["bn_bias"].reshape(1, C)

    PWD = W + 2 * _PW
    out = pl.pallas_call(
        agg_cell_kernel,
        out_shape=jax.ShapeDtypeStruct((N, H, W, 2 * C), jnp.float32),
        grid_spec=pltpu.PrefetchScalarGridSpec(
            num_scalar_prefetch=0,
            grid=(N,),
            in_specs=[
                pl.BlockSpec((1, H, W, C), lambda n: (n, 0, 0, 0)),   # s0
                pl.BlockSpec((1, H, W, C), lambda n: (n, 0, 0, 0)),   # s1
                pl.BlockSpec((1, H, W, C), lambda n: (n, 0, 0, 0)),   # s2
                pl.BlockSpec((H, W, C), lambda n: (0, 0, 0)),         # inv_cnt (const)
                pl.BlockSpec((3, 3, C), lambda n: (0, 0, 0)),         # depthwise w
                pl.BlockSpec((C, C), lambda n: (0, 0)),               # bf16 pw*bn_scale
                pl.BlockSpec((1, C), lambda n: (0, 0)),               # bn_bias
            ],
            out_specs=pl.BlockSpec((1, H, W, 2 * C), lambda n: (n, 0, 0, 0)),
            scratch_shapes=[
                pltpu.VMEM((H + 2, PWD, C), jnp.float32),   # p0 (s0, -inf halo)
                pltpu.VMEM((H + 4, PWD, C), jnp.float32),   # p1 (relu(s1), 0 halo)
                pltpu.VMEM((H + 2, PWD, C), jnp.float32),   # p2 (s2, 0 halo)
                pltpu.SemaphoreType.DMA,                    # concat-copy semaphore
            ],
        ),
        compiler_params=pltpu.CompilerParams(
            dimension_semantics=("parallel",),
            vmem_limit_bytes=32 * 1024 * 1024,
        ),
    )(s0, s1, s2, inv_cnt, dw_w, pw_scaled, bn_bias)
    return out   # already == concat([s1, s3], channel) per aggregation_concat


# ----------------------------------------------------------------------------
# Pure-JAX (XLA) reference for correctness checking.
# ----------------------------------------------------------------------------
def reference_forward(s0, s1, s2, params):
    N, H, W, C = s0.shape
    pad_hw = ((0, 0), (1, 1), (1, 1), (0, 0))

    h1 = lax.reduce_window(s0, -jnp.inf, lax.max, (1, 3, 3, 1), (1, 1, 1, 1), pad_hw)

    x = jax.nn.relu(s1)
    dn = lax.conv_dimension_numbers(x.shape, (3, 3, 1, C), ("NHWC", "HWIO", "NHWC"))
    dwout = lax.conv_general_dilated(
        x, params["dw"].reshape(3, 3, 1, C), window_strides=(1, 1),
        padding=((2, 2), (2, 2)), rhs_dilation=(2, 2),
        dimension_numbers=dn, feature_group_count=C)
    pwout = jnp.einsum("nhwc,cd->nhwd", dwout, params["pw"])
    h2 = pwout * params["bn_scale"].reshape(1, 1, 1, C) + params["bn_bias"].reshape(1, 1, 1, C)

    sums = lax.reduce_window(s2, 0.0, lax.add, (1, 3, 3, 1), (1, 1, 1, 1), pad_hw)
    cnts = lax.reduce_window(jnp.ones_like(s2), 0.0, lax.add, (1, 3, 3, 1), (1, 1, 1, 1), pad_hw)
    h3 = sums / cnts

    s3 = h1 + h2 + h3
    states = [s0, s1, s2, s3]
    return jnp.concatenate([states[i] for i in GENOTYPE.aggregation_concat], axis=-1)


def make_params(key, C):
    k_dw, k_pw, k_g, k_b, k_m, k_v = jax.random.split(key, 6)
    # PyTorch shapes: depthwise (C,1,3,3), pointwise (C_out, C_in, 1, 1), BN (C,)
    dw = 0.1 * jax.random.normal(k_dw, (3, 3, C), jnp.float32)           # HWC layout
    pw_pt = 0.05 * jax.random.normal(k_pw, (C, C), jnp.float32)          # (C_out, C_in)
    pw = pw_pt.T                                                         # (C_in, C_out)
    gamma = 1.0 + 0.1 * jax.random.normal(k_g, (C,), jnp.float32)
    beta = 0.05 * jax.random.normal(k_b, (C,), jnp.float32)
    running_mean = 0.1 * jax.random.normal(k_m, (C,), jnp.float32)
    running_var = 1.0 + 0.1 * jax.random.uniform(k_v, (C,), jnp.float32)
    eps = 1e-5
    bn_scale = gamma / jnp.sqrt(running_var + eps)
    bn_bias = beta - running_mean * bn_scale
    return {"dw": dw, "pw": pw, "bn_scale": bn_scale, "bn_bias": bn_bias}


if __name__ == "__main__":
    N, H, W, C = 2, 16, 16, 128  # C=128 is hard-coded in AggregationCell.__init__

    key = jax.random.PRNGKey(0)
    k0, k1, k2, kp = jax.random.split(key, 4)
    s0 = jax.random.normal(k0, (N, H, W, C), jnp.float32)
    s1 = jax.random.normal(k1, (N, H, W, C), jnp.float32)
    s2 = jax.random.normal(k2, (N, H, W, C), jnp.float32)
    params = make_params(kp, C)

    out = aggregation_cell_forward(s0, s1, s2, params, drop_prob=0.0)
    out = jax.block_until_ready(out)

    ref = jax.block_until_ready(reference_forward(s0, s1, s2, params))
    assert out.shape == (N, H, W, C * len(GENOTYPE.aggregation_concat)), out.shape
    max_err = float(jnp.max(jnp.abs(out - ref)))
    assert jnp.allclose(out, ref, rtol=2e-3, atol=2e-3), max_err

    print("KERNEL_OK")
</pallas_src>

<mosaic_0001>
module attributes {stable_mosaic.version = 11 : i64} {
  func.func @agg_cell_kernel(%arg0: i32, %arg1: memref<1x16x16x128xf32, #tpu.memory_space<vmem>>, %arg2: memref<1x16x16x128xf32, #tpu.memory_space<vmem>>, %arg3: memref<1x16x16x128xf32, #tpu.memory_space<vmem>>, %arg4: memref<16x16x128xf32, #tpu.memory_space<vmem>>, %arg5: memref<3x3x128xf32, #tpu.memory_space<vmem>>, %arg6: memref<128x128xbf16, #tpu.memory_space<vmem>>, %arg7: memref<1x128xf32, #tpu.memory_space<vmem>>, %arg8: memref<1x16x16x256xf32, #tpu.memory_space<vmem>>, %arg9: memref<18x32x128xf32, #tpu.memory_space<vmem>>, %arg10: memref<20x32x128xf32, #tpu.memory_space<vmem>>, %arg11: memref<18x32x128xf32, #tpu.memory_space<vmem>>, %arg12: memref<!tpu.dma_semaphore, #tpu.memory_space<semaphore_mem>>) attributes {dimension_semantics = [#tpu.dimension_semantics<parallel>], iteration_bounds = array<i64: 2>, scalar_prefetch = 0 : i64, scratch_operands = 4 : i64, tpu.core_type = #tpu.core_type<tc>, window_params = [{transform_indices = @transform_0, window_bounds = array<i64: 1, 16, 16, 128>}, {transform_indices = @transform_1, window_bounds = array<i64: 1, 16, 16, 128>}, {transform_indices = @transform_2, window_bounds = array<i64: 1, 16, 16, 128>}, {pipeline_mode = #tpu.pipeline_mode<synchronous>, transform_indices = @transform_3, window_bounds = array<i64: 16, 16, 128>}, {pipeline_mode = #tpu.pipeline_mode<synchronous>, transform_indices = @transform_4, window_bounds = array<i64: 3, 3, 128>}, {pipeline_mode = #tpu.pipeline_mode<synchronous>, transform_indices = @transform_5, window_bounds = array<i64: 128, 128>}, {pipeline_mode = #tpu.pipeline_mode<synchronous>, transform_indices = @transform_6, window_bounds = array<i64: 1, 128>}, {transform_indices = @transform_7, window_bounds = array<i64: 1, 16, 16, 256>}]} {
    %c0_i32 = arith.constant 0 : i32
    %c0_i32_0 = arith.constant 0 : i32
    %c0_i32_1 = arith.constant 0 : i32
    %c0_i32_2 = arith.constant 0 : i32
    %0 = tpu.memref_slice %arg8[%c0_i32, %c0_i32_0, %c0_i32_1, %c0_i32_2] : memref<1x16x16x256xf32, #tpu.memory_space<vmem>> -> memref<1x16x16x128xf32, #tpu.memory_space<vmem>>
    tpu.enqueue_dma source(%arg2 : memref<1x16x16x128xf32, #tpu.memory_space<vmem>>) target(%0 : memref<1x16x16x128xf32, #tpu.memory_space<vmem>>) target_semaphore(%arg12 : memref<!tpu.dma_semaphore, #tpu.memory_space<semaphore_mem>>)
    %cst = arith.constant 0xFF800000 : f32
    %1 = vector.broadcast %cst : f32 to vector<1x32x128xf32>
    %c0 = arith.constant 0 : index
    %c0_3 = arith.constant 0 : index
    %c0_4 = arith.constant 0 : index
    %2 = vector.load %arg9[%c0, %c0_3, %c0_4] : memref<18x32x128xf32, #tpu.memory_space<vmem>>, vector<1x32x128xf32>
    tpu.vector_store %arg9[%c0, %c0_3, %c0_4], %1 {strides = array<i32>} : memref<18x32x128xf32, #tpu.memory_space<vmem>>, vector<1x32x128xf32>,
    %cst_5 = arith.constant 0xFF800000 : f32
    %3 = vector.broadcast %cst_5 : f32 to vector<1x32x128xf32>
    %c17 = arith.constant 17 : index
    %c0_6 = arith.constant 0 : index
    %c0_7 = arith.constant 0 : index
    %4 = vector.load %arg9[%c17, %c0_6, %c0_7] : memref<18x32x128xf32, #tpu.memory_space<vmem>>, vector<1x32x128xf32>
    tpu.vector_store %arg9[%c17, %c0_6, %c0_7], %3 {strides = array<i32>} : memref<18x32x128xf32, #tpu.memory_space<vmem>>, vector<1x32x128xf32>,
    %cst_8 = arith.constant 0xFF800000 : f32
    %5 = vector.broadcast %cst_8 : f32 to vector<16x8x128xf32>
    %c1 = arith.constant 1 : index
    %c0_9 = arith.constant 0 : index
    %c0_10 = arith.constant 0 : index
    %6 = vector.load %arg9[%c1, %c0_9, %c0_10] : memref<18x32x128xf32, #tpu.memory_space<vmem>>, vector<16x8x128xf32>
    tpu.vector_store %arg9[%c1, %c0_9, %c0_10], %5 {strides = array<i32>} : memref<18x32x128xf32, #tpu.memory_space<vmem>>, vector<16x8x128xf32>,
    %cst_11 = arith.constant 0xFF800000 : f32
    %7 = vector.broadcast %cst_11 : f32 to vector<16x8x128xf32>
    %c1_12 = arith.constant 1 : index
    %c24 = arith.constant 24 : index
    %c0_13 = arith.constant 0 : index
    %8 = vector.load %arg9[%c1_12, %c24, %c0_13] : memref<18x32x128xf32, #tpu.memory_space<vmem>>, vector<16x8x128xf32>
    tpu.vector_store %arg9[%c1_12, %c24, %c0_13], %7 {strides = array<i32>} : memref<18x32x128xf32, #tpu.memory_space<vmem>>, vector<16x8x128xf32>,
    %c0_14 = arith.constant 0 : index
    %c0_15 = arith.constant 0 : index
    %c0_16 = arith.constant 0 : index
    %c0_17 = arith.constant 0 : index
    %9 = vector.load %arg1[%c0_14, %c0_15, %c0_16, %c0_17] : memref<1x16x16x128xf32, #tpu.memory_space<vmem>>, vector<1x16x16x128xf32>
    %10 = vector.shape_cast %9 : vector<1x16x16x128xf32> to vector<16x16x128xf32>
    %c1_18 = arith.constant 1 : index
    %c8 = arith.constant 8 : index
    %c0_19 = arith.constant 0 : index
    %11 = vector.load %arg9[%c1_18, %c8, %c0_19] : memref<18x32x128xf32, #tpu.memory_space<vmem>>, vector<16x16x128xf32>
    tpu.vector_store %arg9[%c1_18, %c8, %c0_19], %10 {strides = array<i32>} : memref<18x32x128xf32, #tpu.memory_space<vmem>>, vector<16x16x128xf32>,
    %cst_20 = arith.constant 0.000000e+00 : f32
    %12 = vector.broadcast %cst_20 : f32 to vector<1x32x128xf32>
    %c0_21 = arith.constant 0 : index
    %c0_22 = arith.constant 0 : index
    %c0_23 = arith.constant 0 : index
    %13 = vector.load %arg11[%c0_21, %c0_22, %c0_23] : memref<18x32x128xf32, #tpu.memory_space<vmem>>, vector<1x32x128xf32>
    tpu.vector_store %arg11[%c0_21, %c0_22, %c0_23], %12 {strides = array<i32>} : memref<18x32x128xf32, #tpu.memory_space<vmem>>, vector<1x32x128xf32>,
    %cst_24 = arith.constant 0.000000e+00 : f32
    %14 = vector.broadcast %cst_24 : f32 to vector<1x32x128xf32>
    %c17_25 = arith.constant 17 : index
    %c0_26 = arith.constant 0 : index
    %c0_27 = arith.constant 0 : index
    %15 = vector.load %arg11[%c17_25, %c0_26, %c0_27] : memref<18x32x128xf32, #tpu.memory_space<vmem>>, vector<1x32x128xf32>
    tpu.vector_store %arg11[%c17_25, %c0_26, %c0_27], %14 {strides = array<i32>} : memref<18x32x128xf32, #tpu.memory_space<vmem>>, vector<1x32x128xf32>,
    %cst_28 = arith.constant 0.000000e+00 : f32
    %16 = vector.broadcast %cst_28 : f32 to vector<16x8x128xf32>
    %c1_29 = arith.constant 1 : index
    %c0_30 = arith.constant 0 : index
    %c0_31 = arith.constant 0 : index
    %17 = vector.load %arg11[%c1_29, %c0_30, %c0_31] : memref<18x32x128xf32, #tpu.memory_space<vmem>>, vector<16x8x128xf32>
    tpu.vector_store %arg11[%c1_29, %c0_30, %c0_31], %16 {strides = array<i32>} : memref<18x32x128xf32, #tpu.memory_space<vmem>>, vector<16x8x128xf32>,
    %cst_32 = arith.constant 0.000000e+00 : f32
    %18 = vector.broadcast %cst_32 : f32 to vector<16x8x128xf32>
    %c1_33 = arith.constant 1 : index
    %c24_34 = arith.constant 24 : index
    %c0_35 = arith.constant 0 : index
    %19 = vector.load %arg11[%c1_33, %c24_34, %c0_35] : memref<18x32x128xf32, #tpu.memory_space<vmem>>, vector<16x8x128xf32>
    tpu.vector_store %arg11[%c1_33, %c24_34, %c0_35], %18 {strides = array<i32>} : memref<18x32x128xf32, #tpu.memory_space<vmem>>, vector<16x8x128xf32>,
    %c0_36 = arith.constant 0 : index
    %c0_37 = arith.constant 0 : index
    %c0_38 = arith.constant 0 : index
    %c0_39 = arith.constant 0 : index
    %20 = vector.load %arg3[%c0_36, %c0_37, %c0_38, %c0_39] : memref<1x16x16x128xf32, #tpu.memory_space<vmem>>, vector<1x16x16x128xf32>
    %21 = vector.shape_cast %20 : vector<1x16x16x128xf32> to vector<16x16x128xf32>
    %c1_40 = arith.constant 1 : index
    %c8_41 = arith.constant 8 : index
    %c0_42 = arith.constant 0 : index
    %22 = vector.load %arg11[%c1_40, %c8_41, %c0_42] : memref<18x32x128xf32, #tpu.memory_space<vmem>>, vector<16x16x128xf32>
    tpu.vector_store %arg11[%c1_40, %c8_41, %c0_42], %21 {strides = array<i32>} : memref<18x32x128xf32, #tpu.memory_space<vmem>>, vector<16x16x128xf32>,
    %cst_43 = arith.constant 0.000000e+00 : f32
    %23 = vector.broadcast %cst_43 : f32 to vector<2x32x128xf32>
    %c0_44 = arith.constant 0 : index
    %c0_45 = arith.constant 0 : index
    %c0_46 = arith.constant 0 : index
    %24 = vector.load %arg10[%c0_44, %c0_45, %c0_46] : memref<20x32x128xf32, #tpu.memory_space<vmem>>, vector<2x32x128xf32>
    tpu.vector_store %arg10[%c0_44, %c0_45, %c0_46], %23 {strides = array<i32>} : memref<20x32x128xf32, #tpu.memory_space<vmem>>, vector<2x32x128xf32>,
    %cst_47 = arith.constant 0.000000e+00 : f32
    %25 = vector.broadcast %cst_47 : f32 to vector<2x32x128xf32>
    %c18 = arith.constant 18 : index
    %c0_48 = arith.constant 0 : index
    %c0_49 = arith.constant 0 : index
    %26 = vector.load %arg10[%c18, %c0_48, %c0_49] : memref<20x32x128xf32, #tpu.memory_space<vmem>>, vector<2x32x128xf32>
    tpu.vector_store %arg10[%c18, %c0_48, %c0_49], %25 {strides = array<i32>} : memref<20x32x128xf32, #tpu.memory_space<vmem>>, vector<2x32x128xf32>,
    %cst_50 = arith.constant 0.000000e+00 : f32
    %27 = vector.broadcast %cst_50 : f32 to vector<16x8x128xf32>
    %c2 = arith.constant 2 : index
    %c0_51 = arith.constant 0 : index
    %c0_52 = arith.constant 0 : index
    %28 = vector.load %arg10[%c2, %c0_51, %c0_52] : memref<20x32x128xf32, #tpu.memory_space<vmem>>, vector<16x8x128xf32>
    tpu.vector_store %arg10[%c2, %c0_51, %c0_52], %27 {strides = array<i32>} : memref<20x32x128xf32, #tpu.memory_space<vmem>>, vector<16x8x128xf32>,
    %cst_53 = arith.constant 0.000000e+00 : f32
    %29 = vector.broadcast %cst_53 : f32 to vector<16x8x128xf32>
    %c2_54 = arith.constant 2 : index
    %c24_55 = arith.constant 24 : index
    %c0_56 = arith.constant 0 : index
    %30 = vector.load %arg10[%c2_54, %c24_55, %c0_56] : memref<20x32x128xf32, #tpu.memory_space<vmem>>, vector<16x8x128xf32>
    tpu.vector_store %arg10[%c2_54, %c24_55, %c0_56], %29 {strides = array<i32>} : memref<20x32x128xf32, #tpu.memory_space<vmem>>, vector<16x8x128xf32>,
    %c0_57 = arith.constant 0 : index
    %c0_58 = arith.constant 0 : index
    %c0_59 = arith.constant 0 : index
    %c0_60 = arith.constant 0 : index
    %31 = vector.load %arg2[%c0_57, %c0_58, %c0_59, %c0_60] : memref<1x16x16x128xf32, #tpu.memory_space<vmem>>, vector<1x16x16x128xf32>
    %32 = vector.shape_cast %31 : vector<1x16x16x128xf32> to vector<16x16x128xf32>
    %cst_61 = arith.constant 0.000000e+00 : f32
    %33 = vector.broadcast %cst_61 : f32 to vector<16x16x128xf32>
    %34 = arith.maximumf %32, %33 : vector<16x16x128xf32>
    %c2_62 = arith.constant 2 : index
    %c8_63 = arith.constant 8 : index
    %c0_64 = arith.constant 0 : index
    %35 = vector.load %arg10[%c2_62, %c8_63, %c0_64] : memref<20x32x128xf32, #tpu.memory_space<vmem>>, vector<16x16x128xf32>
    tpu.vector_store %arg10[%c2_62, %c8_63, %c0_64], %34 {strides = array<i32>} : memref<20x32x128xf32, #tpu.memory_space<vmem>>, vector<16x16x128xf32>,
    %c0_65 = arith.constant 0 : index
    %c0_66 = arith.constant 0 : index
    %c0_67 = arith.constant 0 : index
    %36 = vector.load %arg5[%c0_65, %c0_66, %c0_67] : memref<3x3x128xf32, #tpu.memory_space<vmem>>, vector<3x3x128xf32>
    %c0_68 = arith.constant 0 : index
    %c7 = arith.constant 7 : index
    %c0_69 = arith.constant 0 : index
    %37 = vector.load %arg9[%c0_68, %c7, %c0_69] : memref<18x32x128xf32, #tpu.memory_space<vmem>>, vector<10x16x128xf32>
    %c0_70 = arith.constant 0 : index
    %c8_71 = arith.constant 8 : index
    %c0_72 = arith.constant 0 : index
    %38 = vector.load %arg9[%c0_70, %c8_71, %c0_72] : memref<18x32x128xf32, #tpu.memory_space<vmem>>, vector<10x16x128xf32>
    %39 = arith.maximumf %37, %38 : vector<10x16x128xf32>
    %c0_73 = arith.constant 0 : index
    %c9 = arith.constant 9 : index
    %c0_74 = arith.constant 0 : index
    %40 = vector.load %arg9[%c0_73, %c9, %c0_74] : memref<18x32x128xf32, #tpu.memory_space<vmem>>, vector<10x16x128xf32>
    %41 = arith.maximumf %39, %40 : vector<10x16x128xf32>
    %42 = vector.extract_strided_slice %41 {offsets = [0, 0, 0], sizes = [8, 16, 128], strides = [1, 1, 1]} : vector<10x16x128xf32> to vector<8x16x128xf32>
    %43 = vector.extract_strided_slice %41 {offsets = [1, 0, 0], sizes = [8, 16, 128], strides = [1, 1, 1]} : vector<10x16x128xf32> to vector<8x16x128xf32>
    %44 = arith.maximumf %42, %43 : vector<8x16x128xf32>
    %45 = vector.extract_strided_slice %41 {offsets = [2, 0, 0], sizes = [8, 16, 128], strides = [1, 1, 1]} : vector<10x16x128xf32> to vector<8x16x128xf32>
    %46 = arith.maximumf %44, %45 : vector<8x16x128xf32>
    %c0_75 = arith.constant 0 : index
    %c7_76 = arith.constant 7 : index
    %c0_77 = arith.constant 0 : index
    %47 = vector.load %arg11[%c0_75, %c7_76, %c0_77] : memref<18x32x128xf32, #tpu.memory_space<vmem>>, vector<10x16x128xf32>
    %c0_78 = arith.constant 0 : index
    %c8_79 = arith.constant 8 : index
    %c0_80 = arith.constant 0 : index
    %48 = vector.load %arg11[%c0_78, %c8_79, %c0_80] : memref<18x32x128xf32, #tpu.memory_space<vmem>>, vector<10x16x128xf32>
    %49 = arith.addf %47, %48 : vector<10x16x128xf32>
    %c0_81 = arith.constant 0 : index
    %c9_82 = arith.constant 9 : index
    %c0_83 = arith.constant 0 : index
    %50 = vector.load %arg11[%c0_81, %c9_82, %c0_83] : memref<18x32x128xf32, #tpu.memory_space<vmem>>, vector<10x16x128xf32>
    %51 = arith.addf %49, %50 : vector<10x16x128xf32>
    %52 = vector.extract_strided_slice %51 {offsets = [0, 0, 0], sizes = [8, 16, 128], strides = [1, 1, 1]} : vector<10x16x128xf32> to vector<8x16x128xf32>
    %53 = vector.extract_strided_slice %51 {offsets = [1, 0, 0], sizes = [8, 16, 128], strides = [1, 1, 1]} : vector<10x16x128xf32> to vector<8x16x128xf32>
    %54 = arith.addf %52, %53 : vector<8x16x128xf32>
    %55 = vector.extract_strided_slice %51 {offsets = [2, 0, 0], sizes = [8, 16, 128], strides = [1, 1, 1]} : vector<10x16x128xf32> to vector<8x16x128xf32>
    %56 = arith.addf %54, %55 : vector<8x16x128xf32>
    %c0_84 = arith.constant 0 : index
    %c0_85 = arith.constant 0 : index
    %c0_86 = arith.constant 0 : index
    %57 = vector.load %arg4[%c0_84, %c0_85, %c0_86] : memref<16x16x128xf32, #tpu.memory_space<vmem>>, vector<8x16x128xf32>
    %58 = arith.mulf %56, %57 : vector<8x16x128xf32>
    %59 = arith.addf %46, %58 : vector<8x16x128xf32>
    %c0_87 = arith.constant 0 : index
    %c6 = arith.constant 6 : index
    %c0_88 = arith.constant 0 : index
    %60 = vector.load %arg10[%c0_87, %c6, %c0_88] : memref<20x32x128xf32, #tpu.memory_space<vmem>>, vector<8x16x128xf32>
    %61 = vector.extract_strided_slice %36 {offsets = [0, 0, 0], sizes = [1, 1, 128], strides = [1, 1, 1]} : vector<3x3x128xf32> to vector<1x1x128xf32>
    %62 = vector.shape_cast %61 : vector<1x1x128xf32> to vector<128xf32>
    %63 = vector.shape_cast %62 : vector<128xf32> to vector<1x1x128xf32>
    %64 = vector.broadcast %63 : vector<1x1x128xf32> to vector<8x16x128xf32>
    %65 = arith.mulf %60, %64 : vector<8x16x128xf32>
    %c0_89 = arith.constant 0 : index
    %c8_90 = arith.constant 8 : index
    %c0_91 = arith.constant 0 : index
    %66 = vector.load %arg10[%c0_89, %c8_90, %c0_91] : memref<20x32x128xf32, #tpu.memory_space<vmem>>, vector<8x16x128xf32>
    %67 = vector.extract_strided_slice %36 {offsets = [0, 1, 0], sizes = [1, 1, 128], strides = [1, 1, 1]} : vector<3x3x128xf32> to vector<1x1x128xf32>
    %68 = vector.shape_cast %67 : vector<1x1x128xf32> to vector<128xf32>
    %69 = vector.shape_cast %68 : vector<128xf32> to vector<1x1x128xf32>
    %70 = vector.broadcast %69 : vector<1x1x128xf32> to vector<8x16x128xf32>
    %71 = arith.mulf %66, %70 : vector<8x16x128xf32>
    %72 = arith.addf %65, %71 : vector<8x16x128xf32>
    %c0_92 = arith.constant 0 : index
    %c10 = arith.constant 10 : index
    %c0_93 = arith.constant 0 : index
    %73 = vector.load %arg10[%c0_92, %c10, %c0_93] : memref<20x32x128xf32, #tpu.memory_space<vmem>>, vector<8x16x128xf32>
    %74 = vector.extract_strided_slice %36 {offsets = [0, 2, 0], sizes = [1, 1, 128], strides = [1, 1, 1]} : vector<3x3x128xf32> to vector<1x1x128xf32>
    %75 = vector.shape_cast %74 : vector<1x1x128xf32> to vector<128xf32>
    %76 = vector.shape_cast %75 : vector<128xf32> to vector<1x1x128xf32>
    %77 = vector.broadcast %76 : vector<1x1x128xf32> to vector<8x16x128xf32>
    %78 = arith.mulf %73, %77 : vector<8x16x128xf32>
    %79 = arith.addf %72, %78 : vector<8x16x128xf32>
    %c2_94 = arith.constant 2 : index
    %c6_95 = arith.constant 6 : index
    %c0_96 = arith.constant 0 : index
    %80 = vector.load %arg10[%c2_94, %c6_95, %c0_96] : memref<20x32x128xf32, #tpu.memory_space<vmem>>, vector<8x16x128xf32>
    %81 = vector.extract_strided_slice %36 {offsets = [1, 0, 0], sizes = [1, 1, 128], strides = [1, 1, 1]} : vector<3x3x128xf32> to vector<1x1x128xf32>
    %82 = vector.shape_cast %81 : vector<1x1x128xf32> to vector<128xf32>
    %83 = vector.shape_cast %82 : vector<128xf32> to vector<1x1x128xf32>
    %84 = vector.broadcast %83 : vector<1x1x128xf32> to vector<8x16x128xf32>
    %85 = arith.mulf %80, %84 : vector<8x16x128xf32>
    %86 = arith.addf %79, %85 : vector<8x16x128xf32>
    %c2_97 = arith.constant 2 : index
    %c8_98 = arith.constant 8 : index
    %c0_99 = arith.constant 0 : index
    %87 = vector.load %arg10[%c2_97, %c8_98, %c0_99] : memref<20x32x128xf32, #tpu.memory_space<vmem>>, vector<8x16x128xf32>
    %88 = vector.extract_strided_slice %36 {offsets = [1, 1, 0], sizes = [1, 1, 128], strides = [1, 1, 1]} : vector<3x3x128xf32> to vector<1x1x128xf32>
    %89 = vector.shape_cast %88 : vector<1x1x128xf32> to vector<128xf32>
    %90 = vector.shape_cast %89 : vector<128xf32> to vector<1x1x128xf32>
    %91 = vector.broadcast %90 : vector<1x1x128xf32> to vector<8x16x128xf32>
    %92 = arith.mulf %87, %91 : vector<8x16x128xf32>
    %93 = arith.addf %86, %92 : vector<8x16x128xf32>
    %c2_100 = arith.constant 2 : index
    %c10_101 = arith.constant 10 : index
    %c0_102 = arith.constant 0 : index
    %94 = vector.load %arg10[%c2_100, %c10_101, %c0_102] : memref<20x32x128xf32, #tpu.memory_space<vmem>>, vector<8x16x128xf32>
    %95 = vector.extract_strided_slice %36 {offsets = [1, 2, 0], sizes = [1, 1, 128], strides = [1, 1, 1]} : vector<3x3x128xf32> to vector<1x1x128xf32>
    %96 = vector.shape_cast %95 : vector<1x1x128xf32> to vector<128xf32>
    %97 = vector.shape_cast %96 : vector<128xf32> to vector<1x1x128xf32>
    %98 = vector.broadcast %97 : vector<1x1x128xf32> to vector<8x16x128xf32>
    %99 = arith.mulf %94, %98 : vector<8x16x128xf32>
    %100 = arith.addf %93, %99 : vector<8x16x128xf32>
    %c4 = arith.constant 4 : index
    %c6_103 = arith.constant 6 : index
    %c0_104 = arith.constant 0 : index
    %101 = vector.load %arg10[%c4, %c6_103, %c0_104] : memref<20x32x128xf32, #tpu.memory_space<vmem>>, vector<8x16x128xf32>
    %102 = vector.extract_strided_slice %36 {offsets = [2, 0, 0], sizes = [1, 1, 128], strides = [1, 1, 1]} : vector<3x3x128xf32> to vector<1x1x128xf32>
    %103 = vector.shape_cast %102 : vector<1x1x128xf32> to vector<128xf32>
    %104 = vector.shape_cast %103 : vector<128xf32> to vector<1x1x128xf32>
    %105 = vector.broadcast %104 : vector<1x1x128xf32> to vector<8x16x128xf32>
    %106 = arith.mulf %101, %105 : vector<8x16x128xf32>
    %107 = arith.addf %100, %106 : vector<8x16x128xf32>
    %c4_105 = arith.constant 4 : index
    %c8_106 = arith.constant 8 : index
    %c0_107 = arith.constant 0 : index
    %108 = vector.load %arg10[%c4_105, %c8_106, %c0_107] : memref<20x32x128xf32, #tpu.memory_space<vmem>>, vector<8x16x128xf32>
    %109 = vector.extract_strided_slice %36 {offsets = [2, 1, 0], sizes = [1, 1, 128], strides = [1, 1, 1]} : vector<3x3x128xf32> to vector<1x1x128xf32>
    %110 = vector.shape_cast %109 : vector<1x1x128xf32> to vector<128xf32>
    %111 = vector.shape_cast %110 : vector<128xf32> to vector<1x1x128xf32>
    %112 = vector.broadcast %111 : vector<1x1x128xf32> to vector<8x16x128xf32>
    %113 = arith.mulf %108, %112 : vector<8x16x128xf32>
    %114 = arith.addf %107, %113 : vector<8x16x128xf32>
    %c4_108 = arith.constant 4 : index
    %c10_109 = arith.constant 10 : index
    %c0_110 = arith.constant 0 : index
    %115 = vector.load %arg10[%c4_108, %c10_109, %c0_110] : memref<20x32x128xf32, #tpu.memory_space<vmem>>, vector<8x16x128xf32>
    %116 = vector.extract_strided_slice %36 {offsets = [2, 2, 0], sizes = [1, 1, 128], strides = [1, 1, 1]} : vector<3x3x128xf32> to vector<1x1x128xf32>
    %117 = vector.shape_cast %116 : vector<1x1x128xf32> to vector<128xf32>
    %118 = vector.shape_cast %117 : vector<128xf32> to vector<1x1x128xf32>
    %119 = vector.broadcast %118 : vector<1x1x128xf32> to vector<8x16x128xf32>
    %120 = arith.mulf %115, %119 : vector<8x16x128xf32>
    %121 = arith.addf %114, %120 : vector<8x16x128xf32>
    %122 = arith.truncf %121 : vector<8x16x128xf32> to vector<8x16x128xbf16>
    %123 = vector.shape_cast %122 : vector<8x16x128xbf16> to vector<128x128xbf16>
    %c0_111 = arith.constant 0 : index
    %c0_112 = arith.constant 0 : index
    %124 = vector.load %arg6[%c0_111, %c0_112] : memref<128x128xbf16, #tpu.memory_space<vmem>>, vector<128x128xbf16>
    %cst_113 = arith.constant dense<0.000000e+00> : vector<128x128xf32>
    %125 = tpu.matmul %123, %124, %cst_113 {dimension_numbers = #tpu.dot_dimension_numbers<[1], [0], [0], [1], [0, 0, 1, 1], [], []>} : vector<128x128xbf16>, vector<128x128xbf16>, vector<128x128xf32> -> vector<128x128xf32>
    %c0_114 = arith.constant 0 : index
    %c0_115 = arith.constant 0 : index
    %126 = vector.load %arg7[%c0_114, %c0_115] : memref<1x128xf32, #tpu.memory_space<vmem>>, vector<1x128xf32>
    %127 = vector.broadcast %126 : vector<1x128xf32> to vector<128x128xf32>
    %128 = arith.addf %125, %127 : vector<128x128xf32>
    %129 = vector.shape_cast %128 : vector<128x128xf32> to vector<8x16x128xf32>
    %130 = arith.addf %59, %129 : vector<8x16x128xf32>
    %c0_116 = arith.constant 0 : index
    %c0_117 = arith.constant 0 : index
    %c0_118 = arith.constant 0 : index
    %c128 = arith.constant 128 : index
    %131 = vector.load %arg8[%c0_116, %c0_117, %c0_118, %c128] : memref<1x16x16x256xf32, #tpu.memory_space<vmem>>, vector<1x8x16x128xf32>
    %132 = vector.shape_cast %131 : vector<1x8x16x128xf32> to vector<8x16x128xf32>
    %133 = vector.shape_cast %130 : vector<8x16x128xf32> to vector<1x8x16x128xf32>
    tpu.vector_store %arg8[%c0_116, %c0_117, %c0_118, %c128], %133 {strides = array<i32>} : memref<1x16x16x256xf32, #tpu.memory_space<vmem>>, vector<1x8x16x128xf32>,
    %c8_119 = arith.constant 8 : index
    %c7_120 = arith.constant 7 : index
    %c0_121 = arith.constant 0 : index
    %134 = vector.load %arg9[%c8_119, %c7_120, %c0_121] : memref<18x32x128xf32, #tpu.memory_space<vmem>>, vector<10x16x128xf32>
    %c8_122 = arith.constant 8 : index
    %c8_123 = arith.constant 8 : index
    %c0_124 = arith.constant 0 : index
    %135 = vector.load %arg9[%c8_122, %c8_123, %c0_124] : memref<18x32x128xf32, #tpu.memory_space<vmem>>, vector<10x16x128xf32>
    %136 = arith.maximumf %134, %135 : vector<10x16x128xf32>
    %c8_125 = arith.constant 8 : index
    %c9_126 = arith.constant 9 : index
    %c0_127 = arith.constant 0 : index
    %137 = vector.load %arg9[%c8_125, %c9_126, %c0_127] : memref<18x32x128xf32, #tpu.memory_space<vmem>>, vector<10x16x128xf32>
    %138 = arith.maximumf %136, %137 : vector<10x16x128xf32>
    %139 = vector.extract_strided_slice %138 {offsets = [0, 0, 0], sizes = [8, 16, 128], strides = [1, 1, 1]} : vector<10x16x128xf32> to vector<8x16x128xf32>
    %140 = vector.extract_strided_slice %138 {offsets = [1, 0, 0], sizes = [8, 16, 128], strides = [1, 1, 1]} : vector<10x16x128xf32> to vector<8x16x128xf32>
    %141 = arith.maximumf %139, %140 : vector<8x16x128xf32>
    %142 = vector.extract_strided_slice %138 {offsets = [2, 0, 0], sizes = [8, 16, 128], strides = [1, 1, 1]} : vector<10x16x128xf32> to vector<8x16x128xf32>
    %143 = arith.maximumf %141, %142 : vector<8x16x128xf32>
    %c8_128 = arith.constant 8 : index
    %c7_129 = arith.constant 7 : index
    %c0_130 = arith.constant 0 : index
    %144 = vector.load %arg11[%c8_128, %c7_129, %c0_130] : memref<18x32x128xf32, #tpu.memory_space<vmem>>, vector<10x16x128xf32>
    %c8_131 = arith.constant 8 : index
    %c8_132 = arith.constant 8 : index
    %c0_133 = arith.constant 0 : index
    %145 = vector.load %arg11[%c8_131, %c8_132, %c0_133] : memref<18x32x128xf32, #tpu.memory_space<vmem>>, vector<10x16x128xf32>
    %146 = arith.addf %144, %145 : vector<10x16x128xf32>
    %c8_134 = arith.constant 8 : index
    %c9_135 = arith.constant 9 : index
    %c0_136 = arith.constant 0 : index
    %147 = vector.load %arg11[%c8_134, %c9_135, %c0_136] : memref<18x32x128xf32, #tpu.memory_space<vmem>>, vector<10x16x128xf32>
    %148 = arith.addf %146, %147 : vector<10x16x128xf32>
    %149 = vector.extract_strided_slice %148 {offsets = [0, 0, 0], sizes = [8, 16, 128], strides = [1, 1, 1]} : vector<10x16x128xf32> to vector<8x16x128xf32>
    %150 = vector.extract_strided_slice %148 {offsets = [1, 0, 0], sizes = [8, 16, 128], strides = [1, 1, 1]} : vector<10x16x128xf32> to vector<8x16x128xf32>
    %151 = arith.addf %149, %150 : vector<8x16x128xf32>
    %152 = vector.extract_strided_slice %148 {offsets = [2, 0, 0], sizes = [8, 16, 128], strides = [1, 1, 1]} : vector<10x16x128xf32> to vector<8x16x128xf32>
    %153 = arith.addf %151, %152 : vector<8x16x128xf32>
    %c8_137 = arith.constant 8 : index
    %c0_138 = arith.constant 0 : index
    %c0_139 = arith.constant 0 : index
    %154 = vector.load %arg4[%c8_137, %c0_138, %c0_139] : memref<16x16x128xf32, #tpu.memory_space<vmem>>, vector<8x16x128xf32>
    %155 = arith.mulf %153, %154 : vector<8x16x128xf32>
    %156 = arith.addf %143, %155 : vector<8x16x128xf32>
    %c8_140 = arith.constant 8 : index
    %c6_141 = arith.constant 6 : index
    %c0_142 = arith.constant 0 : index
    %157 = vector.load %arg10[%c8_140, %c6_141, %c0_142] : memref<20x32x128xf32, #tpu.memory_space<vmem>>, vector<8x16x128xf32>
    %158 = vector.extract_strided_slice %36 {offsets = [0, 0, 0], sizes = [1, 1, 128], strides = [1, 1, 1]} : vector<3x3x128xf32> to vector<1x1x128xf32>
    %159 = vector.shape_cast %158 : vector<1x1x128xf32> to vector<128xf32>
    %160 = vector.shape_cast %159 : vector<128xf32> to vector<1x1x128xf32>
    %161 = vector.broadcast %160 : vector<1x1x128xf32> to vector<8x16x128xf32>
    %162 = arith.mulf %157, %161 : vector<8x16x128xf32>
    %c8_143 = arith.constant 8 : index
    %c8_144 = arith.constant 8 : index
    %c0_145 = arith.constant 0 : index
    %163 = vector.load %arg10[%c8_143, %c8_144, %c0_145] : memref<20x32x128xf32, #tpu.memory_space<vmem>>, vector<8x16x128xf32>
    %164 = vector.extract_strided_slice %36 {offsets = [0, 1, 0], sizes = [1, 1, 128], strides = [1, 1, 1]} : vector<3x3x128xf32> to vector<1x1x128xf32>
    %165 = vector.shape_cast %164 : vector<1x1x128xf32> to vector<128xf32>
    %166 = vector.shape_cast %165 : vector<128xf32> to vector<1x1x128xf32>
    %167 = vector.broadcast %166 : vector<1x1x128xf32> to vector<8x16x128xf32>
    %168 = arith.mulf %163, %167 : vector<8x16x128xf32>
    %169 = arith.addf %162, %168 : vector<8x16x128xf32>
    %c8_146 = arith.constant 8 : index
    %c10_147 = arith.constant 10 : index
    %c0_148 = arith.constant 0 : index
    %170 = vector.load %arg10[%c8_146, %c10_147, %c0_148] : memref<20x32x128xf32, #tpu.memory_space<vmem>>, vector<8x16x128xf32>
    %171 = vector.extract_strided_slice %36 {offsets = [0, 2, 0], sizes = [1, 1, 128], strides = [1, 1, 1]} : vector<3x3x128xf32> to vector<1x1x128xf32>
    %172 = vector.shape_cast %171 : vector<1x1x128xf32> to vector<128xf32>
    %173 = vector.shape_cast %172 : vector<128xf32> to vector<1x1x128xf32>
    %174 = vector.broadcast %173 : vector<1x1x128xf32> to vector<8x16x128xf32>
    %175 = arith.mulf %170, %174 : vector<8x16x128xf32>
    %176 = arith.addf %169, %175 : vector<8x16x128xf32>
    %c10_149 = arith.constant 10 : index
    %c6_150 = arith.constant 6 : index
    %c0_151 = arith.constant 0 : index
    %177 = vector.load %arg10[%c10_149, %c6_150, %c0_151] : memref<20x32x128xf32, #tpu.memory_space<vmem>>, vector<8x16x128xf32>
    %178 = vector.extract_strided_slice %36 {offsets = [1, 0, 0], sizes = [1, 1, 128], strides = [1, 1, 1]} : vector<3x3x128xf32> to vector<1x1x128xf32>
    %179 = vector.shape_cast %178 : vector<1x1x128xf32> to vector<128xf32>
    %180 = vector.shape_cast %179 : vector<128xf32> to vector<1x1x128xf32>
    %181 = vector.broadcast %180 : vector<1x1x128xf32> to vector<8x16x128xf32>
    %182 = arith.mulf %177, %181 : vector<8x16x128xf32>
    %183 = arith.addf %176, %182 : vector<8x16x128xf32>
    %c10_152 = arith.constant 10 : index
    %c8_153 = arith.constant 8 : index
    %c0_154 = arith.constant 0 : index
    %184 = vector.load %arg10[%c10_152, %c8_153, %c0_154] : memref<20x32x128xf32, #tpu.memory_space<vmem>>, vector<8x16x128xf32>
    %185 = vector.extract_strided_slice %36 {offsets = [1, 1, 0], sizes = [1, 1, 128], strides = [1, 1, 1]} : vector<3x3x128xf32> to vector<1x1x128xf32>
    %186 = vector.shape_cast %185 : vector<1x1x128xf32> to vector<128xf32>
    %187 = vector.shape_cast %186 : vector<128xf32> to vector<1x1x128xf32>
    %188 = vector.broadcast %187 : vector<1x1x128xf32> to vector<8x16x128xf32>
    %189 = arith.mulf %184, %188 : vector<8x16x128xf32>
    %190 = arith.addf %183, %189 : vector<8x16x128xf32>
    %c10_155 = arith.constant 10 : index
    %c10_156 = arith.constant 10 : index
    %c0_157 = arith.constant 0 : index
    %191 = vector.load %arg10[%c10_155, %c10_156, %c0_157] : memref<20x32x128xf32, #tpu.memory_space<vmem>>, vector<8x16x128xf32>
    %192 = vector.extract_strided_slice %36 {offsets = [1, 2, 0], sizes = [1, 1, 128], strides = [1, 1, 1]} : vector<3x3x128xf32> to vector<1x1x128xf32>
    %193 = vector.shape_cast %192 : vector<1x1x128xf32> to vector<128xf32>
    %194 = vector.shape_cast %193 : vector<128xf32> to vector<1x1x128xf32>
    %195 = vector.broadcast %194 : vector<1x1x128xf32> to vector<8x16x128xf32>
    %196 = arith.mulf %191, %195 : vector<8x16x128xf32>
    %197 = arith.addf %190, %196 : vector<8x16x128xf32>
    %c12 = arith.constant 12 : index
    %c6_158 = arith.constant 6 : index
    %c0_159 = arith.constant 0 : index
    %198 = vector.load %arg10[%c12, %c6_158, %c0_159] : memref<20x32x128xf32, #tpu.memory_space<vmem>>, vector<8x16x128xf32>
    %199 = vector.extract_strided_slice %36 {offsets = [2, 0, 0], sizes = [1, 1, 128], strides = [1, 1, 1]} : vector<3x3x128xf32> to vector<1x1x128xf32>
    %200 = vector.shape_cast %199 : vector<1x1x128xf32> to vector<128xf32>
    %201 = vector.shape_cast %200 : vector<128xf32> to vector<1x1x128xf32>
    %202 = vector.broadcast %201 : vector<1x1x128xf32> to vector<8x16x128xf32>
    %203 = arith.mulf %198, %202 : vector<8x16x128xf32>
    %204 = arith.addf %197, %203 : vector<8x16x128xf32>
    %c12_160 = arith.constant 12 : index
    %c8_161 = arith.constant 8 : index
    %c0_162 = arith.constant 0 : index
    %205 = vector.load %arg10[%c12_160, %c8_161, %c0_162] : memref<20x32x128xf32, #tpu.memory_space<vmem>>, vector<8x16x128xf32>
    %206 = vector.extract_strided_slice %36 {offsets = [2, 1, 0], sizes = [1, 1, 128], strides = [1, 1, 1]} : vector<3x3x128xf32> to vector<1x1x128xf32>
    %207 = vector.shape_cast %206 : vector<1x1x128xf32> to vector<128xf32>
    %208 = vector.shape_cast %207 : vector<128xf32> to vector<1x1x128xf32>
    %209 = vector.broadcast %208 : vector<1x1x128xf32> to vector<8x16x128xf32>
    %210 = arith.mulf %205, %209 : vector<8x16x128xf32>
    %211 = arith.addf %204, %210 : vector<8x16x128xf32>
    %c12_163 = arith.constant 12 : index
    %c10_164 = arith.constant 10 : index
    %c0_165 = arith.constant 0 : index
    %212 = vector.load %arg10[%c12_163, %c10_164, %c0_165] : memref<20x32x128xf32, #tpu.memory_space<vmem>>, vector<8x16x128xf32>
    %213 = vector.extract_strided_slice %36 {offsets = [2, 2, 0], sizes = [1, 1, 128], strides = [1, 1, 1]} : vector<3x3x128xf32> to vector<1x1x128xf32>
    %214 = vector.shape_cast %213 : vector<1x1x128xf32> to vector<128xf32>
    %215 = vector.shape_cast %214 : vector<128xf32> to vector<1x1x128xf32>
    %216 = vector.broadcast %215 : vector<1x1x128xf32> to vector<8x16x128xf32>
    %217 = arith.mulf %212, %216 : vector<8x16x128xf32>
    %218 = arith.addf %211, %217 : vector<8x16x128xf32>
    %219 = arith.truncf %218 : vector<8x16x128xf32> to vector<8x16x128xbf16>
    %220 = vector.shape_cast %219 : vector<8x16x128xbf16> to vector<128x128xbf16>
    %c0_166 = arith.constant 0 : index
    %c0_167 = arith.constant 0 : index
    %221 = vector.load %arg6[%c0_166, %c0_167] : memref<128x128xbf16, #tpu.memory_space<vmem>>, vector<128x128xbf16>
    %cst_168 = arith.constant dense<0.000000e+00> : vector<128x128xf32>
    %222 = tpu.matmul %220, %221, %cst_168 {dimension_numbers = #tpu.dot_dimension_numbers<[1], [0], [0], [1], [0, 0, 1, 1], [], []>} : vector<128x128xbf16>, vector<128x128xbf16>, vector<128x128xf32> -> vector<128x128xf32>
    %c0_169 = arith.constant 0 : index
    %c0_170 = arith.constant 0 : index
    %223 = vector.load %arg7[%c0_169, %c0_170] : memref<1x128xf32, #tpu.memory_space<vmem>>, vector<1x128xf32>
    %224 = vector.broadcast %223 : vector<1x128xf32> to vector<128x128xf32>
    %225 = arith.addf %222, %224 : vector<128x128xf32>
    %226 = vector.shape_cast %225 : vector<128x128xf32> to vector<8x16x128xf32>
    %227 = arith.addf %156, %226 : vector<8x16x128xf32>
    %c0_171 = arith.constant 0 : index
    %c8_172 = arith.constant 8 : index
    %c0_173 = arith.constant 0 : index
    %c128_174 = arith.constant 128 : index
    %228 = vector.load %arg8[%c0_171, %c8_172, %c0_173, %c128_174] : memref<1x16x16x256xf32, #tpu.memory_space<vmem>>, vector<1x8x16x128xf32>
    %229 = vector.shape_cast %228 : vector<1x8x16x128xf32> to vector<8x16x128xf32>
    %230 = vector.shape_cast %227 : vector<8x16x128xf32> to vector<1x8x16x128xf32>
    tpu.vector_store %arg8[%c0_171, %c8_172, %c0_173, %c128_174], %230 {strides = array<i32>} : memref<1x16x16x256xf32, #tpu.memory_space<vmem>>, vector<1x8x16x128xf32>,
    %c0_i32_175 = arith.constant 0 : i32
    %c0_i32_176 = arith.constant 0 : i32
    %c0_i32_177 = arith.constant 0 : i32
    %c0_i32_178 = arith.constant 0 : i32
    %231 = tpu.memref_slice %arg8[%c0_i32_175, %c0_i32_176, %c0_i32_177, %c0_i32_178] : memref<1x16x16x256xf32, #tpu.memory_space<vmem>> -> memref<1x16x16x128xf32, #tpu.memory_space<vmem>>
    tpu.wait_dma2 semaphore(%arg12 : memref<!tpu.dma_semaphore, #tpu.memory_space<semaphore_mem>>) src(%arg2 : memref<1x16x16x128xf32, #tpu.memory_space<vmem>>) dst(%231 : memref<1x16x16x128xf32, #tpu.memory_space<vmem>>)
    return
  }
  func.func @transform_0(%arg0: i32) -> (i32, i32, i32, i32) {
    %c0_i32 = arith.constant 0 : i32
    %c0_i32_0 = arith.constant 0 : i32
    %c0_i32_1 = arith.constant 0 : i32
    %c0_i32_2 = arith.constant 0 : i32
    return %arg0, %c0_i32, %c0_i32_0, %c0_i32_1 : i32, i32, i32, i32
  }
  func.func @transform_1(%arg0: i32) -> (i32, i32, i32, i32) {
    %c0_i32 = arith.constant 0 : i32
    %c0_i32_0 = arith.constant 0 : i32
    %c0_i32_1 = arith.constant 0 : i32
    %c0_i32_2 = arith.constant 0 : i32
    return %arg0, %c0_i32, %c0_i32_0, %c0_i32_1 : i32, i32, i32, i32
  }
  func.func @transform_2(%arg0: i32) -> (i32, i32, i32, i32) {
    %c0_i32 = arith.constant 0 : i32
    %c0_i32_0 = arith.constant 0 : i32
    %c0_i32_1 = arith.constant 0 : i32
    %c0_i32_2 = arith.constant 0 : i32
    return %arg0, %c0_i32, %c0_i32_0, %c0_i32_1 : i32, i32, i32, i32
  }
  func.func @transform_3(%arg0: i32) -> (i32, i32, i32) {
    %c0_i32 = arith.constant 0 : i32
    %c0_i32_0 = arith.constant 0 : i32
    %c0_i32_1 = arith.constant 0 : i32
    %c0_i32_2 = arith.constant 0 : i32
    return %c0_i32, %c0_i32_0, %c0_i32_1 : i32, i32, i32
  }
  func.func @transform_4(%arg0: i32) -> (i32, i32, i32) {
    %c0_i32 = arith.constant 0 : i32
    %c0_i32_0 = arith.constant 0 : i32
    %c0_i32_1 = arith.constant 0 : i32
    %c0_i32_2 = arith.constant 0 : i32
    return %c0_i32, %c0_i32_0, %c0_i32_1 : i32, i32, i32
  }
  func.func @transform_5(%arg0: i32) -> (i32, i32) {
    %c0_i32 = arith.constant 0 : i32
    %c0_i32_0 = arith.constant 0 : i32
    %c0_i32_1 = arith.constant 0 : i32
    return %c0_i32, %c0_i32_0 : i32, i32
  }
  func.func @transform_6(%arg0: i32) -> (i32, i32) {
    %c0_i32 = arith.constant 0 : i32
    %c0_i32_0 = arith.constant 0 : i32
    %c0_i32_1 = arith.constant 0 : i32
    return %c0_i32, %c0_i32_0 : i32, i32
  }
  func.func @transform_7(%arg0: i32) -> (i32, i32, i32, i32) {
    %c0_i32 = arith.constant 0 : i32
    %c0_i32_0 = arith.constant 0 : i32
    %c0_i32_1 = arith.constant 0 : i32
    %c0_i32_2 = arith.constant 0 : i32
    return %arg0, %c0_i32, %c0_i32_0, %c0_i32_1 : i32, i32, i32, i32
  }
}

</mosaic_0001>

<llo_original>
// kernel: tpu_custom_call.1
$region0: #{tpu_custom_call.1}
  #allocation0 [shape = 'u32[]', space=smem, size = 0x4, offset = 0x4, fixed_abs, tag = 'smem constant byte address 0x4 - core index']
  #allocation1 [shape = 'u32[144,128]{1,0:T(1,128)}', space=vmem, size = 0x12000, scoped, tag = 'internal scratch']
  #allocation2 [shape = 'f32[18,32,128]{2,1,0:T(8,128)}', space=vmem, size = 0x48000, scoped, tag = 'scratch operand']
  #allocation3 [shape = 'f32[20,32,128]{2,1,0:T(8,128)}', space=vmem, size = 0x50000, scoped, tag = 'scratch operand']
  #allocation4 [shape = 'f32[18,32,128]{2,1,0:T(8,128)}', space=vmem, size = 0x48000, scoped, tag = 'scratch operand']
  #allocation5 [shape = 's32[1]{0}', space=sflag, size = 0x4, scoped, tag = 'scratch operand']
  #allocation16 [shape = 's32[]', space=sflag, size = 0x4, offset = 0, fixed_abs, tag = 'sflag constant byte address 0x0 - dummy sync flag']
  %s0 = inlined_call_operand.hbm [shape: f32[2,16,16,128], index: 0, kind: input, shape index: {}]
  %s1 = inlined_call_operand.hbm [shape: f32[2,16,16,128], index: 1, kind: input, shape index: {}]
  %s2 = inlined_call_operand.hbm [shape: f32[2,16,16,128], index: 2, kind: input, shape index: {}]
  %s3 = inlined_call_operand.hbm [shape: f32[16,16,128], index: 3, kind: input, shape index: {}]
  %s4 = inlined_call_operand.vmem [shape: f32[3,3,128], index: 4, kind: input, shape index: {}]
  %s5 = inlined_call_operand.hbm [shape: bf16[128,128], index: 5, kind: input, shape index: {}]
  %s6 = inlined_call_operand.vmem [shape: f32[1,128], index: 6, kind: input, shape index: {}]
  %s7 = inlined_call_operand.hbm [shape: f32[2,16,16,256], index: 7, kind: output, shape index: {}]
  %s8 = sld [smem:[#allocation0]]
  $region115: #{tpu_custom_call.1} parent=0
    _
  %s10 = ssub.s32 1, %s8
  %s11 = scalar_select 0, %s10, %s8
  $region1: #{tpu_custom_call.1} parent=0
    #allocation6 [shape = 'u8[262144]{0}', space=vmem, size = 0x40000, scoped, tag = 'input window, operand 0']
    #allocation7 [shape = 's32[2]{0}', space=sflag, size = 0x8, scoped, tag = 'scoped memory for tpu_custom_call.1']
    #allocation8 [shape = 's32[2]{0}', space=sflag, size = 0x8, scoped, tag = 'scoped memory for tpu_custom_call.1']
    #allocation9 [shape = 'u8[262144]{0}', space=vmem, size = 0x40000, scoped, tag = 'input window, operand 1']
    #allocation10 [shape = 's32[2]{0}', space=sflag, size = 0x8, scoped, tag = 'scoped memory for tpu_custom_call.1']
    #allocation11 [shape = 'u8[262144]{0}', space=vmem, size = 0x40000, scoped, tag = 'input window, operand 2']
    #allocation12 [shape = 'u8[131072]{0}', space=vmem, size = 0x20000, scoped, tag = 'input window, operand 3, single buffered']
    #allocation13 [shape = 's32[1]{0}', space=sflag, size = 0x4, scoped, tag = 'scoped memory for tpu_custom_call.1']
    #allocation14 [shape = 'u8[32768]{0}', space=vmem, size = 0x8000, scoped, tag = 'input window, operand 5, single buffered']
    #allocation15 [shape = 'u8[524288]{0}', space=vmem, size = 0x80000, scoped, tag = 'output window, operand 0']
    %12 = vsyncpa [#allocation7], 0
    %s13 = scalar_lea.sflag [#allocation7], 1
    %14 = vsyncpa %s13, 0
    %15 = vsyncpa [#allocation10], 0
    %s16 = scalar_lea.sflag [#allocation10], 1
    %17 = vsyncpa %s16, 0
    %18 = vsyncpa [#allocation13], 0
    %19 = vsyncpa [#allocation8], 0
    %s20 = scalar_lea.sflag [#allocation8], 1
    %21 = vsyncpa %s20, 0
    loop: start=0, step=1, limit=4
    $region2: #{tpu_custom_call.1} parent=1 // loop_pre_header
      _
    $region3: #{tpu_custom_call.1} parent=1 // loop_header
      %s23 = sphi 0, %s27
      %p24 = scmp.ge.s32.totalorder %s23, 4
      %s33 = sphi 0, %s35
      %s36 = sphi 0, %s33
      %s37 = sphi 0, %s36
      %s53 = sphi 0, %s37
      %s59 = sphi 0, %s61
      %s62 = sphi 0, %s59
      %s63 = sphi 0, %s62
      %s79 = sphi 0, %s63
      %s85 = sphi 0, %s87
      %s88 = sphi 0, %s85
      %s89 = sphi 0, %s88
      %s105 = sphi 0, %s89
      %s109 = sphi 0, %s109
      %s111 = sphi 0, %s109
      %s112 = sphi 0, %s111
      %s126 = sphi 0, %s112
      %s130 = sphi 0, %s130
      %s132 = sphi 0, %s130
      %s133 = sphi 0, %s132
      %s147 = sphi 0, %s133
      %s151 = sphi 0, %s151
      %s153 = sphi 0, %s151
      %s154 = sphi 0, %s153
      %s168 = sphi 0, %s154
      %s172 = sphi 0, %s172
      %s174 = sphi 0, %s172
      %s175 = sphi 0, %s174
      %s189 = sphi 0, %s175
      %s195 = sphi 0, %s197
      %s198 = sphi 0, %s195
      %s199 = sphi 0, %s198
      %s215 = sphi 0, %s199
    $region4: #{tpu_custom_call.1} parent=1 // loop_header_branch
      %26 = sbr.rel (%p24) target = $region8
    $region5: #{tpu_custom_call.1} parent=1 // loop_body
      %s28 = ssub.s32 %s23, 1
      %s29 = ssub.s32 %s23, 2
      %s30 = sadd.s32 %s23, 1
      %s31 = ssub.s32 %s23, %s30
      %p32 = scmp.eq.s32.totalorder %s31, 0
      %s34 = sadd.s32 %s33, 1
      %s35 = scalar_select %p32, %s33, %s34
      %p38 = pneg %p32
      %p39 = scmp.eq.s32.totalorder %s23, 1
      %p40 = por %p38, %p39
      %p41 = scmp.ne.s32.totalorder %s33, %s36
      %p42 = scmp.eq.s32.totalorder %s23, 0
      %p43 = por %p41, %p42
      %p44 = scmp.ne.s32.totalorder %s33, %s36
      %p45 = scmp.eq.s32.totalorder %s28, 1
      %p46 = por %p44, %p45
      %p47 = scmp.ne.s32.totalorder %s36, %s37
      %p48 = scmp.eq.s32.totalorder %s28, 0
      %p49 = por %p47, %p48
      %p50 = scmp.ne.s32.totalorder %s36, %s37
      %p51 = scmp.eq.s32.totalorder %s29, 1
      %p52 = por %p50, %p51
      %p54 = scmp.ne.s32.totalorder %s37, %s53
      %p55 = scmp.eq.s32.totalorder %s29, 0
      %p56 = por %p54, %p55
      %s57 = ssub.s32 %s23, %s30
      %p58 = scmp.eq.s32.totalorder %s57, 0
      %s60 = sadd.s32 %s59, 1
      %s61 = scalar_select %p58, %s59, %s60
      %p64 = pneg %p58
      %p65 = scmp.eq.s32.totalorder %s23, 1
      %p66 = por %p64, %p65
      %p67 = scmp.ne.s32.totalorder %s59, %s62
      %p68 = scmp.eq.s32.totalorder %s23, 0
      %p69 = por %p67, %p68
      %p70 = scmp.ne.s32.totalorder %s59, %s62
      %p71 = scmp.eq.s32.totalorder %s28, 1
      %p72 = por %p70, %p71
      %p73 = scmp.ne.s32.totalorder %s62, %s63
      %p74 = scmp.eq.s32.totalorder %s28, 0
      %p75 = por %p73, %p74
      %p76 = scmp.ne.s32.totalorder %s62, %s63
      %p77 = scmp.eq.s32.totalorder %s29, 1
      %p78 = por %p76, %p77
      %p80 = scmp.ne.s32.totalorder %s63, %s79
      %p81 = scmp.eq.s32.totalorder %s29, 0
      %p82 = por %p80, %p81
      %s83 = ssub.s32 %s23, %s30
      %p84 = scmp.eq.s32.totalorder %s83, 0
      %s86 = sadd.s32 %s85, 1
      %s87 = scalar_select %p84, %s85, %s86
      %p90 = pneg %p84
      %p91 = scmp.eq.s32.totalorder %s23, 1
      %p92 = por %p90, %p91
      %p93 = scmp.ne.s32.totalorder %s85, %s88
      %p94 = scmp.eq.s32.totalorder %s23, 0
      %p95 = por %p93, %p94
      %p96 = scmp.ne.s32.totalorder %s85, %s88
      %p97 = scmp.eq.s32.totalorder %s28, 1
      %p98 = por %p96, %p97
      %p99 = scmp.ne.s32.totalorder %s88, %s89
      %p100 = scmp.eq.s32.totalorder %s28, 0
      %p101 = por %p99, %p100
      %p102 = scmp.ne.s32.totalorder %s88, %s89
      %p103 = scmp.eq.s32.totalorder %s29, 1
      %p104 = por %p102, %p103
      %p106 = scmp.ne.s32.totalorder %s89, %s105
      %p107 = scmp.eq.s32.totalorder %s29, 0
      %p108 = por %p106, %p107
      %s110 = sadd.s32 %s109, 1
      %p113 = scmp.eq.s32.totalorder %s23, 1
      %p114 = scmp.ne.s32.totalorder %s109, %s111
      %p115 = scmp.eq.s32.totalorder %s23, 0
      %p116 = por %p114, %p115
      %p117 = scmp.ne.s32.totalorder %s109, %s111
      %p118 = scmp.eq.s32.totalorder %s28, 1
      %p119 = por %p117, %p118
      %p120 = scmp.ne.s32.totalorder %s111, %s112
      %p121 = scmp.eq.s32.totalorder %s28, 0
      %p122 = por %p120, %p121
      %p123 = scmp.ne.s32.totalorder %s111, %s112
      %p124 = scmp.eq.s32.totalorder %s29, 1
      %p125 = por %p123, %p124
      %p127 = scmp.ne.s32.totalorder %s112, %s126
      %p128 = scmp.eq.s32.totalorder %s29, 0
      %p129 = por %p127, %p128
      %s131 = sadd.s32 %s130, 1
      %p134 = scmp.eq.s32.totalorder %s23, 1
      %p135 = scmp.ne.s32.totalorder %s130, %s132
      %p136 = scmp.eq.s32.totalorder %s23, 0
      %p137 = por %p135, %p136
      %p138 = scmp.ne.s32.totalorder %s130, %s132
      %p139 = scmp.eq.s32.totalorder %s28, 1
      %p140 = por %p138, %p139
      %p141 = scmp.ne.s32.totalorder %s132, %s133
      %p142 = scmp.eq.s32.totalorder %s28, 0
      %p143 = por %p141, %p142
      %p144 = scmp.ne.s32.totalorder %s132, %s133
      %p145 = scmp.eq.s32.totalorder %s29, 1
      %p146 = por %p144, %p145
      %p148 = scmp.ne.s32.totalorder %s133, %s147
      %p149 = scmp.eq.s32.totalorder %s29, 0
      %p150 = por %p148, %p149
      %s152 = sadd.s32 %s151, 1
      %p155 = scmp.eq.s32.totalorder %s23, 1
      %p156 = scmp.ne.s32.totalorder %s151, %s153
      %p157 = scmp.eq.s32.totalorder %s23, 0
      %p158 = por %p156, %p157
      %p159 = scmp.ne.s32.totalorder %s151, %s153
      %p160 = scmp.eq.s32.totalorder %s28, 1
      %p161 = por %p159, %p160
      %p162 = scmp.ne.s32.totalorder %s153, %s154
      %p163 = scmp.eq.s32.totalorder %s28, 0
      %p164 = por %p162, %p163
      %p165 = scmp.ne.s32.totalorder %s153, %s154
      %p166 = scmp.eq.s32.totalorder %s29, 1
      %p167 = por %p165, %p166
      %p169 = scmp.ne.s32.totalorder %s154, %s168
      %p170 = scmp.eq.s32.totalorder %s29, 0
      %p171 = por %p169, %p170
      %s173 = sadd.s32 %s172, 1
      %p176 = scmp.eq.s32.totalorder %s23, 1
      %p177 = scmp.ne.s32.totalorder %s172, %s174
      %p178 = scmp.eq.s32.totalorder %s23, 0
      %p179 = por %p177, %p178
      %p180 = scmp.ne.s32.totalorder %s172, %s174
      %p181 = scmp.eq.s32.totalorder %s28, 1
      %p182 = por %p180, %p181
      %p183 = scmp.ne.s32.totalorder %s174, %s175
      %p184 = scmp.eq.s32.totalorder %s28, 0
      %p185 = por %p183, %p184
      %p186 = scmp.ne.s32.totalorder %s174, %s175
      %p187 = scmp.eq.s32.totalorder %s29, 1
      %p188 = por %p186, %p187
      %p190 = scmp.ne.s32.totalorder %s175, %s189
      %p191 = scmp.eq.s32.totalorder %s29, 0
      %p192 = por %p190, %p191
      %s193 = ssub.s32 %s23, %s30
      %p194 = scmp.eq.s32.totalorder %s193, 0
      %s196 = sadd.s32 %s195, 1
      %s197 = scalar_select %p194, %s195, %s196
      %p200 = pneg %p194
      %p201 = scmp.eq.s32.totalorder %s23, 1
      %p202 = por %p200, %p201
      %p203 = scmp.ne.s32.totalorder %s195, %s198
      %p204 = scmp.eq.s32.totalorder %s23, 0
      %p205 = por %p203, %p204
      %p206 = scmp.ne.s32.totalorder %s195, %s198
      %p207 = scmp.eq.s32.totalorder %s28, 1
      %p208 = por %p206, %p207
      %p209 = scmp.ne.s32.totalorder %s198, %s199
      %p210 = scmp.eq.s32.totalorder %s28, 0
      %p211 = por %p209, %p210
      %p212 = scmp.ne.s32.totalorder %s198, %s199
      %p213 = scmp.eq.s32.totalorder %s29, 1
      %p214 = por %p212, %p213
      %p216 = scmp.ne.s32.totalorder %s199, %s215
      %p217 = scmp.eq.s32.totalorder %s29, 0
      %p218 = por %p216, %p217
      %p219 = scmp.le.s32.totalorder 1, %s23
      %p220 = scmp.lt.s32.totalorder %s23, 3
      %p221 = pnand %p219, %p220
      %p222 = pneg %p221
      // Predicated region
      $region9: #{tpu_custom_call.1} parent=5 // pred_check
        _
      $region10: #{tpu_custom_call.1} parent=5 // pred_check_branch
        %224 = sbr.rel (%p221) target = $region12
      $region11: #{tpu_custom_call.1} parent=5 // pred_region
        %s225 = ssub.s32 %s23, 1
        // Predicated region
        $region13: #{tpu_custom_call.1} parent=11 // pred_check
          %p226 = pneg %p122
        $region14: #{tpu_custom_call.1} parent=11 // pred_check_branch
          %228 = sbr.rel (%p226) target = $region16
        $region15: #{tpu_custom_call.1} parent=11 // pred_region
          %s230 = ssub.s32 4096, 4096
          %231 = vsyncadd [#allocation13], %s230
          %s232 = sshll.u32 [#allocation12], 4
          %s233 = int_to_ptr.vmem [resolvable:$true] %s232
          %238 = dma.hbm_to_vmem [thread:$0]  %s3, 4096, %s233, [#allocation13], 128, 128, 8
        $region16: #{tpu_custom_call.1} parent=11 // pred_fallthru
          _
        // Predicated region
        $region17: #{tpu_custom_call.1} parent=11 // pred_check
          %p239 = pneg %p143
        $region18: #{tpu_custom_call.1} parent=11 // pred_check_branch
          %241 = sbr.rel (%p239) target = $region20
        $region19: #{tpu_custom_call.1} parent=11 // pred_region
          _
        $region20: #{tpu_custom_call.1} parent=11 // pred_fallthru
          _
        // Predicated region
        $region21: #{tpu_custom_call.1} parent=11 // pred_check
          %p242 = pneg %p164
        $region22: #{tpu_custom_call.1} parent=11 // pred_check_branch
          %244 = sbr.rel (%p242) target = $region24
        $region23: #{tpu_custom_call.1} parent=11 // pred_region
          %s246 = ssub.s32 1024, 1024
          %247 = vsyncadd [#allocation13], %s246
          %s248 = sshll.u32 [#allocation14], 4
          %s249 = int_to_ptr.vmem [resolvable:$true] %s248
          %254 = dma.hbm_to_vmem [thread:$0]  %s5, 1024, %s249, [#allocation13], 64, 64, 4
        $region24: #{tpu_custom_call.1} parent=11 // pred_fallthru
          _
        // Predicated region
        $region25: #{tpu_custom_call.1} parent=11 // pred_check
          %p255 = pneg %p185
        $region26: #{tpu_custom_call.1} parent=11 // pred_check_branch
          %257 = sbr.rel (%p255) target = $region28
        $region27: #{tpu_custom_call.1} parent=11 // pred_region
          _
        $region28: #{tpu_custom_call.1} parent=11 // pred_fallthru
          _
      $region12: #{tpu_custom_call.1} parent=5 // pred_fallthru
        _
      %p258 = scmp.lt.s32.totalorder %s23, 2
      // Predicated region
      $region29: #{tpu_custom_call.1} parent=5 // pred_check
        %p259 = pneg %p258
      $region30: #{tpu_custom_call.1} parent=5 // pred_check_branch
        %261 = sbr.rel (%p259) target = $region32
      $region31: #{tpu_custom_call.1} parent=5 // pred_region
        // Predicated region
        $region33: #{tpu_custom_call.1} parent=31 // pred_check
          %p262 = pneg %p43
        $region34: #{tpu_custom_call.1} parent=31 // pred_check_branch
          %264 = sbr.rel (%p262) target = $region36
        $region35: #{tpu_custom_call.1} parent=31 // pred_region
          %s265 = sand.u32 %s33, 1
          %s266 = scalar_lea.sflag [#allocation7], %s265
          %s267 = sand.u32 %s33, 1
          %s268 = smul.addr %s267, 256
          %s269 = scalar_lea.vmem [#allocation6], %s268
          %s271 = ssub.s32 4096, 4096
          %272 = vsyncadd %s266, %s271
          %s273 = smul.addr %s23, 32
          %s274 = smul.addr %s273, 128
          %s275 = scalar_lea.hbm %s0, %s274
          %s276 = sshll.u32 %s269, 4
          %s277 = int_to_ptr.vmem [resolvable:$true] %s276
          %282 = dma.hbm_to_vmem [thread:$0]  %s275, 4096, %s277, %s266, 128, 128, 8
        $region36: #{tpu_custom_call.1} parent=31 // pred_fallthru
          _
        // Predicated region
        $region37: #{tpu_custom_call.1} parent=31 // pred_check
          %p283 = pneg %p69
        $region38: #{tpu_custom_call.1} parent=31 // pred_check_branch
          %285 = sbr.rel (%p283) target = $region40
        $region39: #{tpu_custom_call.1} parent=31 // pred_region
          %s286 = sand.u32 %s23, 1
          %s287 = scalar_lea.sflag [#allocation10], %s286
          %s288 = sand.u32 %s59, 1
          %s289 = smul.addr %s288, 256
          %s290 = scalar_lea.vmem [#allocation9], %s289
          %s292 = ssub.s32 4096, 4096
          %293 = vsyncadd %s287, %s292
          %s294 = smul.addr %s23, 32
          %s295 = smul.addr %s294, 128
          %s296 = scalar_lea.hbm %s1, %s295
          %s297 = sshll.u32 %s290, 4
          %s298 = int_to_ptr.vmem [resolvable:$true] %s297
          %303 = dma.hbm_to_vmem [thread:$0]  %s296, 4096, %s298, %s287, 128, 128, 8
        $region40: #{tpu_custom_call.1} parent=31 // pred_fallthru
          _
        // Predicated region
        $region41: #{tpu_custom_call.1} parent=31 // pred_check
          %p304 = pneg %p95
        $region42: #{tpu_custom_call.1} parent=31 // pred_check_branch
          %306 = sbr.rel (%p304) target = $region44
        $region43: #{tpu_custom_call.1} parent=31 // pred_region
          %s307 = sand.u32 %s23, 1
          %s308 = scalar_lea.sflag [#allocation10], %s307
          %s309 = sand.u32 %s85, 1
          %s310 = smul.addr %s309, 256
          %s311 = scalar_lea.vmem [#allocation11], %s310
          %s313 = ssub.s32 4096, 4096
          %314 = vsyncadd %s308, %s313
          %s315 = smul.addr %s23, 32
          %s316 = smul.addr %s315, 128
          %s317 = scalar_lea.hbm %s2, %s316
          %s318 = sshll.u32 %s311, 4
          %s319 = int_to_ptr.vmem [resolvable:$true] %s318
          %324 = dma.hbm_to_vmem [thread:$0]  %s317, 4096, %s319, %s308, 128, 128, 8
        $region44: #{tpu_custom_call.1} parent=31 // pred_fallthru
          _
      $region32: #{tpu_custom_call.1} parent=5 // pred_fallthru
        _
      %p325 = scmp.le.s32.totalorder 1, %s23
      %p326 = scmp.lt.s32.totalorder %s23, 3
      %p327 = pnand %p325, %p326
      %p328 = pneg %p327
      // Predicated region
      $region45: #{tpu_custom_call.1} parent=5 // pred_check
        _
      $region46: #{tpu_custom_call.1} parent=5 // pred_check_branch
        %330 = sbr.rel (%p327) target = $region48
      $region47: #{tpu_custom_call.1} parent=5 // pred_region
        %s331 = ssub.s32 %s23, 1
        %s332 = sand.u32 %s36, 1
        %s333 = scalar_lea.sflag [#allocation7], %s332
        %s334 = sand.u32 %s36, 1
        %s335 = smul.addr %s334, 256
        %s336 = scalar_lea.vmem [#allocation6], %s335
        // Predicated region
        $region49: #{tpu_custom_call.1} parent=47 // pred_check
          %p337 = pneg %p49
        $region50: #{tpu_custom_call.1} parent=47 // pred_check_branch
          %339 = sbr.rel (%p337) target = $region52
        $region51: #{tpu_custom_call.1} parent=47 // pred_region
          %340 = dma.done %s333, 4096
        $region52: #{tpu_custom_call.1} parent=47 // pred_fallthru
          _
        %s341 = sand.u32 %s28, 1
        %s342 = scalar_lea.sflag [#allocation10], %s341
        %s343 = sand.u32 %s62, 1
        %s344 = smul.addr %s343, 256
        %s345 = scalar_lea.vmem [#allocation9], %s344
        // Predicated region
        $region53: #{tpu_custom_call.1} parent=47 // pred_check
          %p346 = pneg %p75
        $region54: #{tpu_custom_call.1} parent=47 // pred_check_branch
          %348 = sbr.rel (%p346) target = $region56
        $region55: #{tpu_custom_call.1} parent=47 // pred_region
          %349 = dma.done %s342, 4096
        $region56: #{tpu_custom_call.1} parent=47 // pred_fallthru
          _
        %s350 = sand.u32 %s28, 1
        %s351 = scalar_lea.sflag [#allocation10], %s350
        %s352 = sand.u32 %s88, 1
        %s353 = smul.addr %s352, 256
        %s354 = scalar_lea.vmem [#allocation11], %s353
        // Predicated region
        $region57: #{tpu_custom_call.1} parent=47 // pred_check
          %p355 = pneg %p101
        $region58: #{tpu_custom_call.1} parent=47 // pred_check_branch
          %357 = sbr.rel (%p355) target = $region60
        $region59: #{tpu_custom_call.1} parent=47 // pred_region
          %358 = dma.done %s351, 4096
        $region60: #{tpu_custom_call.1} parent=47 // pred_fallthru
          _
        // Predicated region
        $region61: #{tpu_custom_call.1} parent=47 // pred_check
          %p359 = pneg %p122
        $region62: #{tpu_custom_call.1} parent=47 // pred_check_branch
          %361 = sbr.rel (%p359) target = $region64
        $region63: #{tpu_custom_call.1} parent=47 // pred_region
          %362 = dma.done [#allocation13], 4096
        $region64: #{tpu_custom_call.1} parent=47 // pred_fallthru
          _
        // Predicated region
        $region65: #{tpu_custom_call.1} parent=47 // pred_check
          %p363 = pneg %p164
        $region66: #{tpu_custom_call.1} parent=47 // pred_check_branch
          %365 = sbr.rel (%p363) target = $region68
        $region67: #{tpu_custom_call.1} parent=47 // pred_region
          %366 = dma.done [#allocation13], 1024
        $region68: #{tpu_custom_call.1} parent=47 // pred_fallthru
          _
        %s367 = sand.u32 %s36, 1
        %s368 = scalar_lea.sflag [#allocation7], %s367
        %s369 = sand.u32 %s36, 1
        %s370 = smul.addr %s369, 256
        %s371 = scalar_lea.vmem [#allocation6], %s370
        %p372 = pneg %p49
        %p373 = pneg %p46
        %s374 = sand.u32 %s28, 1
        %s375 = scalar_lea.sflag [#allocation10], %s374
        %s376 = sand.u32 %s62, 1
        %s377 = smul.addr %s376, 256
        %s378 = scalar_lea.vmem [#allocation9], %s377
        %p379 = pneg %p75
        %p380 = pneg %p72
        %s381 = sand.u32 %s28, 1
        %s382 = scalar_lea.sflag [#allocation10], %s381
        %s383 = sand.u32 %s88, 1
        %s384 = smul.addr %s383, 256
        %s385 = scalar_lea.vmem [#allocation11], %s384
        %p386 = pneg %p101
        %p387 = pneg %p98
        %p388 = pneg %p122
        %p389 = pneg %p119
        %p390 = pneg %p143
        %p391 = pneg %p140
        %p392 = pneg %p164
        %p393 = pneg %p161
        %p394 = pneg %p185
        %p395 = pneg %p182
        %p396 = pneg %p211
        %p397 = pneg %p208
        %s398 = sand.u32 %s198, 1
        %s399 = scalar_lea.sflag [#allocation8], %s398
        %s400 = sand.u32 %s198, 1
        %s401 = smul.addr %s400, 512
        %s402 = scalar_lea.vmem [#allocation15], %s401
        %p405 = scmp.lt.u32.totalorder 8, 8
        %p406 = pneg %p405
        // Predicated region
        $region69: #{tpu_custom_call.1} parent=47 // pred_check
          _
        $region70: #{tpu_custom_call.1} parent=47 // pred_check_branch
          %408 = sbr.rel (%p405) target = $region72
        $region71: #{tpu_custom_call.1} parent=47 // pred_region
          %s485 = sand.u32 8, 7
          %p486 = scmp.eq.s32.totalorder %s485, 0
          // Predicated region
          $region84: #{tpu_custom_call.1} parent=71 // pred_check
            %p487 = pneg %p486
          $region85: #{tpu_custom_call.1} parent=71 // pred_check_branch
            %489 = sbr.rel (%p487) target = $region87
          $region86: #{tpu_custom_call.1} parent=71 // pred_region
            loop: start=0, step=1, limit=1
            $region88: #{tpu_custom_call.1} parent=86 // loop_pre_header
              _
            $region89: #{tpu_custom_call.1} parent=86 // loop_header
              %s491 = sphi 0, %s495
              %p492 = scmp.ge.s32.totalorder %s491, 1
              %s496 = sphi %s345, %s345
              %s497 = sphi %s402, %s402
            $region90: #{tpu_custom_call.1} parent=86 // loop_header_branch
              %494 = sbr.rel (%p492) target = $region94
            $region91: #{tpu_custom_call.1} parent=86 // loop_body
              %v498 = vld [vmem:[%s496] sm:$0xff]
              %499 = vst [vmem:[%s497] sm:$0xff] %v498
              %v500 = vld [vmem:[%s496 + $0x8] sm:$0xff]
              %501 = vst [vmem:[%s497 + $0x10] sm:$0xff] %v500
              %v502 = vld [vmem:[%s496 + $0x10] sm:$0xff]
              %503 = vst [vmem:[%s497 + $0x20] sm:$0xff] %v502
              %v504 = vld [vmem:[%s496 + $0x18] sm:$0xff]
              %505 = vst [vmem:[%s497 + $0x30] sm:$0xff] %v504
              %v506 = vld [vmem:[%s496 + $0x20] sm:$0xff]
              %507 = vst [vmem:[%s497 + $0x40] sm:$0xff] %v506
              %v508 = vld [vmem:[%s496 + $0x28] sm:$0xff]
              %509 = vst [vmem:[%s497 + $0x50] sm:$0xff] %v508
              %v510 = vld [vmem:[%s496 + $0x30] sm:$0xff]
              %511 = vst [vmem:[%s497 + $0x60] sm:$0xff] %v510
              %v512 = vld [vmem:[%s496 + $0x38] sm:$0xff]
              %513 = vst [vmem:[%s497 + $0x70] sm:$0xff] %v512
              %v514 = vld [vmem:[%s496 + $0x40] sm:$0xff]
              %515 = vst [vmem:[%s497 + $0x80] sm:$0xff] %v514
              %v516 = vld [vmem:[%s496 + $0x48] sm:$0xff]
              %517 = vst [vmem:[%s497 + $0x90] sm:$0xff] %v516
              %v518 = vld [vmem:[%s496 + $0x50] sm:$0xff]
              %519 = vst [vmem:[%s497 + $0xa0] sm:$0xff] %v518
              %v520 = vld [vmem:[%s496 + $0x58] sm:$0xff]
              %521 = vst [vmem:[%s497 + $0xb0] sm:$0xff] %v520
              %v522 = vld [vmem:[%s496 + $0x60] sm:$0xff]
              %523 = vst [vmem:[%s497 + $0xc0] sm:$0xff] %v522
              %v524 = vld [vmem:[%s496 + $0x68] sm:$0xff]
              %525 = vst [vmem:[%s497 + $0xd0] sm:$0xff] %v524
              %v526 = vld [vmem:[%s496 + $0x70] sm:$0xff]
              %527 = vst [vmem:[%s497 + $0xe0] sm:$0xff] %v526
              %v528 = vld [vmem:[%s496 + $0x78] sm:$0xff]
              %529 = vst [vmem:[%s497 + $0xf0] sm:$0xff] %v528
              %v530 = vld [vmem:[%s496 + $0x80] sm:$0xff]
              %531 = vst [vmem:[%s497 + $0x100] sm:$0xff] %v530
              %v532 = vld [vmem:[%s496 + $0x88] sm:$0xff]
              %533 = vst [vmem:[%s497 + $0x110] sm:$0xff] %v532
              %v534 = vld [vmem:[%s496 + $0x90] sm:$0xff]
              %535 = vst [vmem:[%s497 + $0x120] sm:$0xff] %v534
              %v536 = vld [vmem:[%s496 + $0x98] sm:$0xff]
              %537 = vst [vmem:[%s497 + $0x130] sm:$0xff] %v536
              %v538 = vld [vmem:[%s496 + $0xa0] sm:$0xff]
              %539 = vst [vmem:[%s497 + $0x140] sm:$0xff] %v538
              %v540 = vld [vmem:[%s496 + $0xa8] sm:$0xff]
              %541 = vst [vmem:[%s497 + $0x150] sm:$0xff] %v540
              %v542 = vld [vmem:[%s496 + $0xb0] sm:$0xff]
              %543 = vst [vmem:[%s497 + $0x160] sm:$0xff] %v542
              %v544 = vld [vmem:[%s496 + $0xb8] sm:$0xff]
              %545 = vst [vmem:[%s497 + $0x170] sm:$0xff] %v544
              %v546 = vld [vmem:[%s496 + $0xc0] sm:$0xff]
              %547 = vst [vmem:[%s497 + $0x180] sm:$0xff] %v546
              %v548 = vld [vmem:[%s496 + $0xc8] sm:$0xff]
              %549 = vst [vmem:[%s497 + $0x190] sm:$0xff] %v548
              %v550 = vld [vmem:[%s496 + $0xd0] sm:$0xff]
              %551 = vst [vmem:[%s497 + $0x1a0] sm:$0xff] %v550
              %v552 = vld [vmem:[%s496 + $0xd8] sm:$0xff]
              %553 = vst [vmem:[%s497 + $0x1b0] sm:$0xff] %v552
              %v554 = vld [vmem:[%s496 + $0xe0] sm:$0xff]
              %555 = vst [vmem:[%s497 + $0x1c0] sm:$0xff] %v554
              %v556 = vld [vmem:[%s496 + $0xe8] sm:$0xff]
              %557 = vst [vmem:[%s497 + $0x1d0] sm:$0xff] %v556
              %v558 = vld [vmem:[%s496 + $0xf0] sm:$0xff]
              %559 = vst [vmem:[%s497 + $0x1e0] sm:$0xff] %v558
              %v560 = vld [vmem:[%s496 + $0xf8] sm:$0xff]
              %561 = vst [vmem:[%s497 + $0x1f0] sm:$0xff] %v560
            $region92: #{tpu_custom_call.1} parent=86 // loop_footer
              %s495 = sadd.s32 1, %s491
            $region93: #{tpu_custom_call.1} parent=86 // loop_footer_branch
              %490 = sbr.rel target = $region89
            $region94: #{tpu_custom_call.1} parent=86 // loop_exit
              _
          $region87: #{tpu_custom_call.1} parent=71 // pred_fallthru
            _
          %p562 = pneg %p486
          // Predicated region
          $region95: #{tpu_custom_call.1} parent=71 // pred_check
            _
          $region96: #{tpu_custom_call.1} parent=71 // pred_check_branch
            %564 = sbr.rel (%p486) target = $region98
          $region97: #{tpu_custom_call.1} parent=71 // pred_region
            %s565 = sand.u32 8, 7
          $region98: #{tpu_custom_call.1} parent=71 // pred_fallthru
            _
        $region72: #{tpu_custom_call.1} parent=47 // pred_fallthru
          _
        // Predicated region
        $region73: #{tpu_custom_call.1} parent=47 // pred_check
          %p409 = pneg %p405
        $region74: #{tpu_custom_call.1} parent=47 // pred_check_branch
          %411 = sbr.rel (%p409) target = $region76
        $region75: #{tpu_custom_call.1} parent=47 // pred_region
          %s412 = sshllo.u32 0, 8
          loop: start=0, step=1, limit=1
          $region77: #{tpu_custom_call.1} parent=75 // loop_pre_header
            _
          $region78: #{tpu_custom_call.1} parent=75 // loop_header
            %s414 = sphi 0, %s418
            %p415 = scmp.ge.s32.totalorder %s414, 1
            %s419 = sphi %s345, %s345
            %s420 = sphi %s402, %s402
          $region79: #{tpu_custom_call.1} parent=75 // loop_header_branch
            %417 = sbr.rel (%p415) target = $region83
          $region80: #{tpu_custom_call.1} parent=75 // loop_body
            %v421 = vld [vmem:[%s419] sm:%s412]
            %422 = vst [vmem:[%s420] sm:%s412] %v421
            %v423 = vld [vmem:[%s419 + $0x8] sm:%s412]
            %424 = vst [vmem:[%s420 + $0x10] sm:%s412] %v423
            %v425 = vld [vmem:[%s419 + $0x10] sm:%s412]
            %426 = vst [vmem:[%s420 + $0x20] sm:%s412] %v425
            %v427 = vld [vmem:[%s419 + $0x18] sm:%s412]
            %428 = vst [vmem:[%s420 + $0x30] sm:%s412] %v427
            %v429 = vld [vmem:[%s419 + $0x20] sm:%s412]
            %430 = vst [vmem:[%s420 + $0x40] sm:%s412] %v429
            %v431 = vld [vmem:[%s419 + $0x28] sm:%s412]
            %432 = vst [vmem:[%s420 + $0x50] sm:%s412] %v431
            %v433 = vld [vmem:[%s419 + $0x30] sm:%s412]
            %434 = vst [vmem:[%s420 + $0x60] sm:%s412] %v433
            %v435 = vld [vmem:[%s419 + $0x38] sm:%s412]
            %436 = vst [vmem:[%s420 + $0x70] sm:%s412] %v435
            %v437 = vld [vmem:[%s419 + $0x40] sm:%s412]
            %438 = vst [vmem:[%s420 + $0x80] sm:%s412] %v437
            %v439 = vld [vmem:[%s419 + $0x48] sm:%s412]
            %440 = vst [vmem:[%s420 + $0x90] sm:%s412] %v439
            %v441 = vld [vmem:[%s419 + $0x50] sm:%s412]
            %442 = vst [vmem:[%s420 + $0xa0] sm:%s412] %v441
            %v443 = vld [vmem:[%s419 + $0x58] sm:%s412]
            %444 = vst [vmem:[%s420 + $0xb0] sm:%s412] %v443
            %v445 = vld [vmem:[%s419 + $0x60] sm:%s412]
            %446 = vst [vmem:[%s420 + $0xc0] sm:%s412] %v445
            %v447 = vld [vmem:[%s419 + $0x68] sm:%s412]
            %448 = vst [vmem:[%s420 + $0xd0] sm:%s412] %v447
            %v449 = vld [vmem:[%s419 + $0x70] sm:%s412]
            %450 = vst [vmem:[%s420 + $0xe0] sm:%s412] %v449
            %v451 = vld [vmem:[%s419 + $0x78] sm:%s412]
            %452 = vst [vmem:[%s420 + $0xf0] sm:%s412] %v451
            %v453 = vld [vmem:[%s419 + $0x80] sm:%s412]
            %454 = vst [vmem:[%s420 + $0x100] sm:%s412] %v453
            %v455 = vld [vmem:[%s419 + $0x88] sm:%s412]
            %456 = vst [vmem:[%s420 + $0x110] sm:%s412] %v455
            %v457 = vld [vmem:[%s419 + $0x90] sm:%s412]
            %458 = vst [vmem:[%s420 + $0x120] sm:%s412] %v457
            %v459 = vld [vmem:[%s419 + $0x98] sm:%s412]
            %460 = vst [vmem:[%s420 + $0x130] sm:%s412] %v459
            %v461 = vld [vmem:[%s419 + $0xa0] sm:%s412]
            %462 = vst [vmem:[%s420 + $0x140] sm:%s412] %v461
            %v463 = vld [vmem:[%s419 + $0xa8] sm:%s412]
            %464 = vst [vmem:[%s420 + $0x150] sm:%s412] %v463
            %v465 = vld [vmem:[%s419 + $0xb0] sm:%s412]
            %466 = vst [vmem:[%s420 + $0x160] sm:%s412] %v465
            %v467 = vld [vmem:[%s419 + $0xb8] sm:%s412]
            %468 = vst [vmem:[%s420 + $0x170] sm:%s412] %v467
            %v469 = vld [vmem:[%s419 + $0xc0] sm:%s412]
            %470 = vst [vmem:[%s420 + $0x180] sm:%s412] %v469
            %v471 = vld [vmem:[%s419 + $0xc8] sm:%s412]
            %472 = vst [vmem:[%s420 + $0x190] sm:%s412] %v471
            %v473 = vld [vmem:[%s419 + $0xd0] sm:%s412]
            %474 = vst [vmem:[%s420 + $0x1a0] sm:%s412] %v473
            %v475 = vld [vmem:[%s419 + $0xd8] sm:%s412]
            %476 = vst [vmem:[%s420 + $0x1b0] sm:%s412] %v475
            %v477 = vld [vmem:[%s419 + $0xe0] sm:%s412]
            %478 = vst [vmem:[%s420 + $0x1c0] sm:%s412] %v477
            %v479 = vld [vmem:[%s419 + $0xe8] sm:%s412]
            %480 = vst [vmem:[%s420 + $0x1d0] sm:%s412] %v479
            %v481 = vld [vmem:[%s419 + $0xf0] sm:%s412]
            %482 = vst [vmem:[%s420 + $0x1e0] sm:%s412] %v481
            %v483 = vld [vmem:[%s419 + $0xf8] sm:%s412]
            %484 = vst [vmem:[%s420 + $0x1f0] sm:%s412] %v483
          $region81: #{tpu_custom_call.1} parent=75 // loop_footer
            %s418 = sadd.s32 1, %s414
          $region82: #{tpu_custom_call.1} parent=75 // loop_footer_branch
            %413 = sbr.rel target = $region78
          $region83: #{tpu_custom_call.1} parent=75 // loop_exit
            _
        $region76: #{tpu_custom_call.1} parent=47 // pred_fallthru
          _
        // Predicated region
        $region99: #{tpu_custom_call.1} parent=47 // pred_check
          _
        $region100: #{tpu_custom_call.1} parent=47 // pred_check_branch
          %568 = sbr.rel (0) target = $region102
        $region101: #{tpu_custom_call.1} parent=47 // pred_region
          %569 = vsyncadd [#allocation5], 4096
        $region102: #{tpu_custom_call.1} parent=47 // pred_fallthru
          _
        %570 = vst [vmem:[#allocation2] sm:$0xff] -inf
        %571 = vst [vmem:[#allocation2 + $0x8] sm:$0xff] -inf
        %572 = vst [vmem:[#allocation2 + $0x10] sm:$0xff] -inf
        %573 = vst [vmem:[#allocation2 + $0x18] sm:$0xff] -inf
        %s574 = scalar_lea.vmem [#allocation2], 544
        %575 = vst [vmem:[%s574] sm:$0xff] -inf
        %576 = vst [vmem:[%s574 + $0x8] sm:$0xff] -inf
        %577 = vst [vmem:[%s574 + $0x10] sm:$0xff] -inf
        %578 = vst [vmem:[%s574 + $0x18] sm:$0xff] -inf
        %s579 = scalar_lea.vmem [#allocation2], 32
        %580 = vst [vmem:[%s579] sm:$0xff] -inf
        %581 = vst [vmem:[%s579 + $0x20] sm:$0xff] -inf
        %582 = vst [vmem:[%s579 + $0x40] sm:$0xff] -inf
        %583 = vst [vmem:[%s579 + $0x60] sm:$0xff] -inf
        %584 = vst [vmem:[%s579 + $0x80] sm:$0xff] -inf
        %585 = vst [vmem:[%s579 + $0xa0] sm:$0xff] -inf
        %586 = vst [vmem:[%s579 + $0xc0] sm:$0xff] -inf
        %587 = vst [vmem:[%s579 + $0xe0] sm:$0xff] -inf
        %588 = vst [vmem:[%s579 + $0x100] sm:$0xff] -inf
        %589 = vst [vmem:[%s579 + $0x120] sm:$0xff] -inf
        %590 = vst [vmem:[%s579 + $0x140] sm:$0xff] -inf
        %591 = vst [vmem:[%s579 + $0x160] sm:$0xff] -inf
        %592 = vst [vmem:[%s579 + $0x180] sm:$0xff] -inf
        %593 = vst [vmem:[%s579 + $0x1a0] sm:$0xff] -inf
        %594 = vst [vmem:[%s579 + $0x1c0] sm:$0xff] -inf
        %595 = vst [vmem:[%s579 + $0x1e0] sm:$0xff] -inf
        %596 = vst [vmem:[%s579 + $0x18] sm:$0xff] -inf
        %597 = vst [vmem:[%s579 + $0x38] sm:$0xff] -inf
        %598 = vst [vmem:[%s579 + $0x58] sm:$0xff] -inf
        %599 = vst [vmem:[%s579 + $0x78] sm:$0xff] -inf
        %600 = vst [vmem:[%s579 + $0x98] sm:$0xff] -inf
        %601 = vst [vmem:[%s579 + $0xb8] sm:$0xff] -inf
        %602 = vst [vmem:[%s579 + $0xd8] sm:$0xff] -inf
        %603 = vst [vmem:[%s579 + $0xf8] sm:$0xff] -inf
        %604 = vst [vmem:[%s579 + $0x118] sm:$0xff] -inf
        %605 = vst [vmem:[%s579 + $0x138] sm:$0xff] -inf
        %606 = vst [vmem:[%s579 + $0x158] sm:$0xff] -inf
        %607 = vst [vmem:[%s579 + $0x178] sm:$0xff] -inf
        %608 = vst [vmem:[%s579 + $0x198] sm:$0xff] -inf
        %609 = vst [vmem:[%s579 + $0x1b8] sm:$0xff] -inf
        %610 = vst [vmem:[%s579 + $0x1d8] sm:$0xff] -inf
        %611 = vst [vmem:[%s579 + $0x1f8] sm:$0xff] -inf
        %v612 = vld [vmem:[%s336] sm:$0xff]
        %v613 = vld [vmem:[%s336 + $0x8] sm:$0xff]
        %v614 = vld [vmem:[%s336 + $0x10] sm:$0xff]
        %v615 = vld [vmem:[%s336 + $0x18] sm:$0xff]
        %v616 = vld [vmem:[%s336 + $0x20] sm:$0xff]
        %v617 = vld [vmem:[%s336 + $0x28] sm:$0xff]
        %v618 = vld [vmem:[%s336 + $0x30] sm:$0xff]
        %v619 = vld [vmem:[%s336 + $0x38] sm:$0xff]
        %v620 = vld [vmem:[%s336 + $0x40] sm:$0xff]
        %v621 = vld [vmem:[%s336 + $0x48] sm:$0xff]
        %v622 = vld [vmem:[%s336 + $0x50] sm:$0xff]
        %v623 = vld [vmem:[%s336 + $0x58] sm:$0xff]
        %v624 = vld [vmem:[%s336 + $0x60] sm:$0xff]
        %v625 = vld [vmem:[%s336 + $0x68] sm:$0xff]
        %v626 = vld [vmem:[%s336 + $0x70] sm:$0xff]
        %v627 = vld [vmem:[%s336 + $0x78] sm:$0xff]
        %v628 = vld [vmem:[%s336 + $0x80] sm:$0xff]
        %v629 = vld [vmem:[%s336 + $0x88] sm:$0xff]
        %v630 = vld [vmem:[%s336 + $0x90] sm:$0xff]
        %v631 = vld [vmem:[%s336 + $0x98] sm:$0xff]
        %v632 = vld [vmem:[%s336 + $0xa0] sm:$0xff]
        %v633 = vld [vmem:[%s336 + $0xa8] sm:$0xff]
        %v634 = vld [vmem:[%s336 + $0xb0] sm:$0xff]
        %v635 = vld [vmem:[%s336 + $0xb8] sm:$0xff]
        %v636 = vld [vmem:[%s336 + $0xc0] sm:$0xff]
        %v637 = vld [vmem:[%s336 + $0xc8] sm:$0xff]
        %v638 = vld [vmem:[%s336 + $0xd0] sm:$0xff]
        %v639 = vld [vmem:[%s336 + $0xd8] sm:$0xff]
        %v640 = vld [vmem:[%s336 + $0xe0] sm:$0xff]
        %v641 = vld [vmem:[%s336 + $0xe8] sm:$0xff]
        %v642 = vld [vmem:[%s336 + $0xf0] sm:$0xff]
        %v643 = vld [vmem:[%s336 + $0xf8] sm:$0xff]
        %644 = vst [vmem:[%s579 + $0x8] sm:$0xff] %v612
        %645 = vst [vmem:[%s579 + $0x10] sm:$0xff] %v613
        %646 = vst [vmem:[%s579 + $0x28] sm:$0xff] %v614
        %647 = vst [vmem:[%s579 + $0x30] sm:$0xff] %v615
        %648 = vst [vmem:[%s579 + $0x48] sm:$0xff] %v616
        %649 = vst [vmem:[%s579 + $0x50] sm:$0xff] %v617
        %650 = vst [vmem:[%s579 + $0x68] sm:$0xff] %v618
        %651 = vst [vmem:[%s579 + $0x70] sm:$0xff] %v619
        %652 = vst [vmem:[%s579 + $0x88] sm:$0xff] %v620
        %653 = vst [vmem:[%s579 + $0x90] sm:$0xff] %v621
        %654 = vst [vmem:[%s579 + $0xa8] sm:$0xff] %v622
        %655 = vst [vmem:[%s579 + $0xb0] sm:$0xff] %v623
        %656 = vst [vmem:[%s579 + $0xc8] sm:$0xff] %v624
        %657 = vst [vmem:[%s579 + $0xd0] sm:$0xff] %v625
        %658 = vst [vmem:[%s579 + $0xe8] sm:$0xff] %v626
        %659 = vst [vmem:[%s579 + $0xf0] sm:$0xff] %v627
        %660 = vst [vmem:[%s579 + $0x108] sm:$0xff] %v628
        %661 = vst [vmem:[%s579 + $0x110] sm:$0xff] %v629
        %662 = vst [vmem:[%s579 + $0x128] sm:$0xff] %v630
        %663 = vst [vmem:[%s579 + $0x130] sm:$0xff] %v631
        %664 = vst [vmem:[%s579 + $0x148] sm:$0xff] %v632
        %665 = vst [vmem:[%s579 + $0x150] sm:$0xff] %v633
        %666 = vst [vmem:[%s579 + $0x168] sm:$0xff] %v634
        %667 = vst [vmem:[%s579 + $0x170] sm:$0xff] %v635
        %668 = vst [vmem:[%s579 + $0x188] sm:$0xff] %v636
        %669 = vst [vmem:[%s579 + $0x190] sm:$0xff] %v637
        %670 = vst [vmem:[%s579 + $0x1a8] sm:$0xff] %v638
        %671 = vst [vmem:[%s579 + $0x1b0] sm:$0xff] %v639
        %672 = vst [vmem:[%s579 + $0x1c8] sm:$0xff] %v640
        %673 = vst [vmem:[%s579 + $0x1d0] sm:$0xff] %v641
        %674 = vst [vmem:[%s579 + $0x1e8] sm:$0xff] %v642
        %675 = vst [vmem:[%s579 + $0x1f0] sm:$0xff] %v643
        %676 = vst [vmem:[#allocation4] sm:$0xff] 0.0
        %677 = vst [vmem:[#allocation4 + $0x8] sm:$0xff] 0.0
        %678 = vst [vmem:[#allocation4 + $0x10] sm:$0xff] 0.0
        %679 = vst [vmem:[#allocation4 + $0x18] sm:$0xff] 0.0
        %s680 = scalar_lea.vmem [#allocation4], 544
        %681 = vst [vmem:[%s680] sm:$0xff] 0.0
        %682 = vst [vmem:[%s680 + $0x8] sm:$0xff] 0.0
        %683 = vst [vmem:[%s680 + $0x10] sm:$0xff] 0.0
        %684 = vst [vmem:[%s680 + $0x18] sm:$0xff] 0.0
        %s685 = scalar_lea.vmem [#allocation4], 32
        %686 = vst [vmem:[%s685] sm:$0xff] 0.0
        %687 = vst [vmem:[%s685 + $0x20] sm:$0xff] 0.0
        %688 = vst [vmem:[%s685 + $0x40] sm:$0xff] 0.0
        %689 = vst [vmem:[%s685 + $0x60] sm:$0xff] 0.0
        %690 = vst [vmem:[%s685 + $0x80] sm:$0xff] 0.0
        %691 = vst [vmem:[%s685 + $0xa0] sm:$0xff] 0.0
        %692 = vst [vmem:[%s685 + $0xc0] sm:$0xff] 0.0
        %693 = vst [vmem:[%s685 + $0xe0] sm:$0xff] 0.0
        %694 = vst [vmem:[%s685 + $0x100] sm:$0xff] 0.0
        %695 = vst [vmem:[%s685 + $0x120] sm:$0xff] 0.0
        %696 = vst [vmem:[%s685 + $0x140] sm:$0xff] 0.0
        %697 = vst [vmem:[%s685 + $0x160] sm:$0xff] 0.0
        %698 = vst [vmem:[%s685 + $0x180] sm:$0xff] 0.0
        %699 = vst [vmem:[%s685 + $0x1a0] sm:$0xff] 0.0
        %700 = vst [vmem:[%s685 + $0x1c0] sm:$0xff] 0.0
        %701 = vst [vmem:[%s685 + $0x1e0] sm:$0xff] 0.0
        %702 = vst [vmem:[%s685 + $0x18] sm:$0xff] 0.0
        %703 = vst [vmem:[%s685 + $0x38] sm:$0xff] 0.0
        %704 = vst [vmem:[%s685 + $0x58] sm:$0xff] 0.0
        %705 = vst [vmem:[%s685 + $0x78] sm:$0xff] 0.0
        %706 = vst [vmem:[%s685 + $0x98] sm:$0xff] 0.0
        %707 = vst [vmem:[%s685 + $0xb8] sm:$0xff] 0.0
        %708 = vst [vmem:[%s685 + $0xd8] sm:$0xff] 0.0
        %709 = vst [vmem:[%s685 + $0xf8] sm:$0xff] 0.0
        %710 = vst [vmem:[%s685 + $0x118] sm:$0xff] 0.0
        %711 = vst [vmem:[%s685 + $0x138] sm:$0xff] 0.0
        %712 = vst [vmem:[%s685 + $0x158] sm:$0xff] 0.0
        %713 = vst [vmem:[%s685 + $0x178] sm:$0xff] 0.0
        %714 = vst [vmem:[%s685 + $0x198] sm:$0xff] 0.0
        %715 = vst [vmem:[%s685 + $0x1b8] sm:$0xff] 0.0
        %716 = vst [vmem:[%s685 + $0x1d8] sm:$0xff] 0.0
        %717 = vst [vmem:[%s685 + $0x1f8] sm:$0xff] 0.0
        %v718 = vld [vmem:[%s354] sm:$0xff]
        %v719 = vld [vmem:[%s354 + $0x8] sm:$0xff]
        %v720 = vld [vmem:[%s354 + $0x10] sm:$0xff]
        %v721 = vld [vmem:[%s354 + $0x18] sm:$0xff]
        %v722 = vld [vmem:[%s354 + $0x20] sm:$0xff]
        %v723 = vld [vmem:[%s354 + $0x28] sm:$0xff]
        %v724 = vld [vmem:[%s354 + $0x30] sm:$0xff]
        %v725 = vld [vmem:[%s354 + $0x38] sm:$0xff]
        %v726 = vld [vmem:[%s354 + $0x40] sm:$0xff]
        %v727 = vld [vmem:[%s354 + $0x48] sm:$0xff]
        %v728 = vld [vmem:[%s354 + $0x50] sm:$0xff]
        %v729 = vld [vmem:[%s354 + $0x58] sm:$0xff]
        %v730 = vld [vmem:[%s354 + $0x60] sm:$0xff]
        %v731 = vld [vmem:[%s354 + $0x68] sm:$0xff]
        %v732 = vld [vmem:[%s354 + $0x70] sm:$0xff]
        %v733 = vld [vmem:[%s354 + $0x78] sm:$0xff]
        %v734 = vld [vmem:[%s354 + $0x80] sm:$0xff]
        %v735 = vld [vmem:[%s354 + $0x88] sm:$0xff]
        %v736 = vld [vmem:[%s354 + $0x90] sm:$0xff]
        %v737 = vld [vmem:[%s354 + $0x98] sm:$0xff]
        %v738 = vld [vmem:[%s354 + $0xa0] sm:$0xff]
        %v739 = vld [vmem:[%s354 + $0xa8] sm:$0xff]
        %v740 = vld [vmem:[%s354 + $0xb0] sm:$0xff]
        %v741 = vld [vmem:[%s354 + $0xb8] sm:$0xff]
        %v742 = vld [vmem:[%s354 + $0xc0] sm:$0xff]
        %v743 = vld [vmem:[%s354 + $0xc8] sm:$0xff]
        %v744 = vld [vmem:[%s354 + $0xd0] sm:$0xff]
        %v745 = vld [vmem:[%s354 + $0xd8] sm:$0xff]
        %v746 = vld [vmem:[%s354 + $0xe0] sm:$0xff]
        %v747 = vld [vmem:[%s354 + $0xe8] sm:$0xff]
        %v748 = vld [vmem:[%s354 + $0xf0] sm:$0xff]
        %v749 = vld [vmem:[%s354 + $0xf8] sm:$0xff]
        %750 = vst [vmem:[%s685 + $0x8] sm:$0xff] %v718
        %751 = vst [vmem:[%s685 + $0x10] sm:$0xff] %v719
        %752 = vst [vmem:[%s685 + $0x28] sm:$0xff] %v720
        %753 = vst [vmem:[%s685 + $0x30] sm:$0xff] %v721
        %754 = vst [vmem:[%s685 + $0x48] sm:$0xff] %v722
        %755 = vst [vmem:[%s685 + $0x50] sm:$0xff] %v723
        %756 = vst [vmem:[%s685 + $0x68] sm:$0xff] %v724
        %757 = vst [vmem:[%s685 + $0x70] sm:$0xff] %v725
        %758 = vst [vmem:[%s685 + $0x88] sm:$0xff] %v726
        %759 = vst [vmem:[%s685 + $0x90] sm:$0xff] %v727
        %760 = vst [vmem:[%s685 + $0xa8] sm:$0xff] %v728
        %761 = vst [vmem:[%s685 + $0xb0] sm:$0xff] %v729
        %762 = vst [vmem:[%s685 + $0xc8] sm:$0xff] %v730
        %763 = vst [vmem:[%s685 + $0xd0] sm:$0xff] %v731
        %764 = vst [vmem:[%s685 + $0xe8] sm:$0xff] %v732
        %765 = vst [vmem:[%s685 + $0xf0] sm:$0xff] %v733
        %766 = vst [vmem:[%s685 + $0x108] sm:$0xff] %v734
        %767 = vst [vmem:[%s685 + $0x110] sm:$0xff] %v735
        %768 = vst [vmem:[%s685 + $0x128] sm:$0xff] %v736
        %769 = vst [vmem:[%s685 + $0x130] sm:$0xff] %v737
        %770 = vst [vmem:[%s685 + $0x148] sm:$0xff] %v738
        %771 = vst [vmem:[%s685 + $0x150] sm:$0xff] %v739
        %772 = vst [vmem:[%s685 + $0x168] sm:$0xff] %v740
        %773 = vst [vmem:[%s685 + $0x170] sm:$0xff] %v741
        %774 = vst [vmem:[%s685 + $0x188] sm:$0xff] %v742
        %775 = vst [vmem:[%s685 + $0x190] sm:$0xff] %v743
        %776 = vst [vmem:[%s685 + $0x1a8] sm:$0xff] %v744
        %777 = vst [vmem:[%s685 + $0x1b0] sm:$0xff] %v745
        %778 = vst [vmem:[%s685 + $0x1c8] sm:$0xff] %v746
        %779 = vst [vmem:[%s685 + $0x1d0] sm:$0xff] %v747
        %780 = vst [vmem:[%s685 + $0x1e8] sm:$0xff] %v748
        %781 = vst [vmem:[%s685 + $0x1f0] sm:$0xff] %v749
        %782 = vst [vmem:[#allocation3] sm:$0xff] 0.0
        %783 = vst [vmem:[#allocation3 + $0x8] sm:$0xff] 0.0
        %784 = vst [vmem:[#allocation3 + $0x10] sm:$0xff] 0.0
        %785 = vst [vmem:[#allocation3 + $0x18] sm:$0xff] 0.0
        %786 = vst [vmem:[#allocation3 + $0x20] sm:$0xff] 0.0
        %787 = vst [vmem:[#allocation3 + $0x28] sm:$0xff] 0.0
        %788 = vst [vmem:[#allocation3 + $0x30] sm:$0xff] 0.0
        %789 = vst [vmem:[#allocation3 + $0x38] sm:$0xff] 0.0
        %s790 = scalar_lea.vmem [#allocation3], 576
        %791 = vst [vmem:[%s790] sm:$0xff] 0.0
        %792 = vst [vmem:[%s790 + $0x8] sm:$0xff] 0.0
        %793 = vst [vmem:[%s790 + $0x10] sm:$0xff] 0.0
        %794 = vst [vmem:[%s790 + $0x18] sm:$0xff] 0.0
        %795 = vst [vmem:[%s790 + $0x20] sm:$0xff] 0.0
        %796 = vst [vmem:[%s790 + $0x28] sm:$0xff] 0.0
        %797 = vst [vmem:[%s790 + $0x30] sm:$0xff] 0.0
        %798 = vst [vmem:[%s790 + $0x38] sm:$0xff] 0.0
        %s799 = scalar_lea.vmem [#allocation3], 64
        %800 = vst [vmem:[%s799] sm:$0xff] 0.0
        %801 = vst [vmem:[%s799 + $0x20] sm:$0xff] 0.0
        %802 = vst [vmem:[%s799 + $0x40] sm:$0xff] 0.0
        %803 = vst [vmem:[%s799 + $0x60] sm:$0xff] 0.0
        %804 = vst [vmem:[%s799 + $0x80] sm:$0xff] 0.0
        %805 = vst [vmem:[%s799 + $0xa0] sm:$0xff] 0.0
        %806 = vst [vmem:[%s799 + $0xc0] sm:$0xff] 0.0
        %807 = vst [vmem:[%s799 + $0xe0] sm:$0xff] 0.0
        %808 = vst [vmem:[%s799 + $0x100] sm:$0xff] 0.0
        %809 = vst [vmem:[%s799 + $0x120] sm:$0xff] 0.0
        %810 = vst [vmem:[%s799 + $0x140] sm:$0xff] 0.0
        %811 = vst [vmem:[%s799 + $0x160] sm:$0xff] 0.0
        %812 = vst [vmem:[%s799 + $0x180] sm:$0xff] 0.0
        %813 = vst [vmem:[%s799 + $0x1a0] sm:$0xff] 0.0
        %814 = vst [vmem:[%s799 + $0x1c0] sm:$0xff] 0.0
        %815 = vst [vmem:[%s799 + $0x1e0] sm:$0xff] 0.0
        %816 = vst [vmem:[%s799 + $0x18] sm:$0xff] 0.0
        %817 = vst [vmem:[%s799 + $0x38] sm:$0xff] 0.0
        %818 = vst [vmem:[%s799 + $0x58] sm:$0xff] 0.0
        %819 = vst [vmem:[%s799 + $0x78] sm:$0xff] 0.0
        %820 = vst [vmem:[%s799 + $0x98] sm:$0xff] 0.0
        %821 = vst [vmem:[%s799 + $0xb8] sm:$0xff] 0.0
        %822 = vst [vmem:[%s799 + $0xd8] sm:$0xff] 0.0
        %823 = vst [vmem:[%s799 + $0xf8] sm:$0xff] 0.0
        %824 = vst [vmem:[%s799 + $0x118] sm:$0xff] 0.0
        %825 = vst [vmem:[%s799 + $0x138] sm:$0xff] 0.0
        %826 = vst [vmem:[%s799 + $0x158] sm:$0xff] 0.0
        %827 = vst [vmem:[%s799 + $0x178] sm:$0xff] 0.0
        %828 = vst [vmem:[%s799 + $0x198] sm:$0xff] 0.0
        %829 = vst [vmem:[%s799 + $0x1b8] sm:$0xff] 0.0
        %830 = vst [vmem:[%s799 + $0x1d8] sm:$0xff] 0.0
        %831 = vst [vmem:[%s799 + $0x1f8] sm:$0xff] 0.0
        %v832 = vld [vmem:[%s345] sm:$0xff]
        %v833 = vld [vmem:[%s345 + $0x8] sm:$0xff]
        %v834 = vld [vmem:[%s345 + $0x10] sm:$0xff]
        %v835 = vld [vmem:[%s345 + $0x18] sm:$0xff]
        %v836 = vld [vmem:[%s345 + $0x20] sm:$0xff]
        %v837 = vld [vmem:[%s345 + $0x28] sm:$0xff]
        %v838 = vld [vmem:[%s345 + $0x30] sm:$0xff]
        %v839 = vld [vmem:[%s345 + $0x38] sm:$0xff]
        %v840 = vld [vmem:[%s345 + $0x40] sm:$0xff]
        %v841 = vld [vmem:[%s345 + $0x48] sm:$0xff]
        %v842 = vld [vmem:[%s345 + $0x50] sm:$0xff]
        %v843 = vld [vmem:[%s345 + $0x58] sm:$0xff]
        %v844 = vld [vmem:[%s345 + $0x60] sm:$0xff]
        %v845 = vld [vmem:[%s345 + $0x68] sm:$0xff]
        %v846 = vld [vmem:[%s345 + $0x70] sm:$0xff]
        %v847 = vld [vmem:[%s345 + $0x78] sm:$0xff]
        %v848 = vld [vmem:[%s345 + $0x80] sm:$0xff]
        %v849 = vld [vmem:[%s345 + $0x88] sm:$0xff]
        %v850 = vld [vmem:[%s345 + $0x90] sm:$0xff]
        %v851 = vld [vmem:[%s345 + $0x98] sm:$0xff]
        %v852 = vld [vmem:[%s345 + $0xa0] sm:$0xff]
        %v853 = vld [vmem:[%s345 + $0xa8] sm:$0xff]
        %v854 = vld [vmem:[%s345 + $0xb0] sm:$0xff]
        %v855 = vld [vmem:[%s345 + $0xb8] sm:$0xff]
        %v856 = vld [vmem:[%s345 + $0xc0] sm:$0xff]
        %v857 = vld [vmem:[%s345 + $0xc8] sm:$0xff]
        %v858 = vld [vmem:[%s345 + $0xd0] sm:$0xff]
        %v859 = vld [vmem:[%s345 + $0xd8] sm:$0xff]
        %v860 = vld [vmem:[%s345 + $0xe0] sm:$0xff]
        %v861 = vld [vmem:[%s345 + $0xe8] sm:$0xff]
        %v862 = vld [vmem:[%s345 + $0xf0] sm:$0xff]
        %v863 = vld [vmem:[%s345 + $0xf8] sm:$0xff]
        %v864 = vmax.f32 %v832, 0.0
        %v865 = vmax.f32 %v833, 0.0
        %v866 = vmax.f32 %v834, 0.0
        %v867 = vmax.f32 %v835, 0.0
        %v868 = vmax.f32 %v836, 0.0
        %v869 = vmax.f32 %v837, 0.0
        %v870 = vmax.f32 %v838, 0.0
        %v871 = vmax.f32 %v839, 0.0
        %v872 = vmax.f32 %v840, 0.0
        %v873 = vmax.f32 %v841, 0.0
        %v874 = vmax.f32 %v842, 0.0
        %v875 = vmax.f32 %v843, 0.0
        %v876 = vmax.f32 %v844, 0.0
        %v877 = vmax.f32 %v845, 0.0
        %v878 = vmax.f32 %v846, 0.0
        %v879 = vmax.f32 %v847, 0.0
        %v880 = vmax.f32 %v848, 0.0
        %v881 = vmax.f32 %v849, 0.0
        %v882 = vmax.f32 %v850, 0.0
        %v883 = vmax.f32 %v851, 0.0
        %v884 = vmax.f32 %v852, 0.0
        %v885 = vmax.f32 %v853, 0.0
        %v886 = vmax.f32 %v854, 0.0
        %v887 = vmax.f32 %v855, 0.0
        %v888 = vmax.f32 %v856, 0.0
        %v889 = vmax.f32 %v857, 0.0
        %v890 = vmax.f32 %v858, 0.0
        %v891 = vmax.f32 %v859, 0.0
        %v892 = vmax.f32 %v860, 0.0
        %v893 = vmax.f32 %v861, 0.0
        %v894 = vmax.f32 %v862, 0.0
        %v895 = vmax.f32 %v863, 0.0
        %896 = vst [vmem:[%s799 + $0x8] sm:$0xff] %v864
        %897 = vst [vmem:[%s799 + $0x10] sm:$0xff] %v865
        %898 = vst [vmem:[%s799 + $0x28] sm:$0xff] %v866
        %899 = vst [vmem:[%s799 + $0x30] sm:$0xff] %v867
        %900 = vst [vmem:[%s799 + $0x48] sm:$0xff] %v868
        %901 = vst [vmem:[%s799 + $0x50] sm:$0xff] %v869
        %902 = vst [vmem:[%s799 + $0x68] sm:$0xff] %v870
        %903 = vst [vmem:[%s799 + $0x70] sm:$0xff] %v871
        %904 = vst [vmem:[%s799 + $0x88] sm:$0xff] %v872
        %905 = vst [vmem:[%s799 + $0x90] sm:$0xff] %v873
        %906 = vst [vmem:[%s799 + $0xa8] sm:$0xff] %v874
        %907 = vst [vmem:[%s799 + $0xb0] sm:$0xff] %v875
        %908 = vst [vmem:[%s799 + $0xc8] sm:$0xff] %v876
        %909 = vst [vmem:[%s799 + $0xd0] sm:$0xff] %v877
        %910 = vst [vmem:[%s799 + $0xe8] sm:$0xff] %v878
        %911 = vst [vmem:[%s799 + $0xf0] sm:$0xff] %v879
        %912 = vst [vmem:[%s799 + $0x108] sm:$0xff] %v880
        %913 = vst [vmem:[%s799 + $0x110] sm:$0xff] %v881
        %914 = vst [vmem:[%s799 + $0x128] sm:$0xff] %v882
        %915 = vst [vmem:[%s799 + $0x130] sm:$0xff] %v883
        %916 = vst [vmem:[%s799 + $0x148] sm:$0xff] %v884
        %917 = vst [vmem:[%s799 + $0x150] sm:$0xff] %v885
        %918 = vst [vmem:[%s799 + $0x168] sm:$0xff] %v886
        %919 = vst [vmem:[%s799 + $0x170] sm:$0xff] %v887
        %920 = vst [vmem:[%s799 + $0x188] sm:$0xff] %v888
        %921 = vst [vmem:[%s799 + $0x190] sm:$0xff] %v889
        %922 = vst [vmem:[%s799 + $0x1a8] sm:$0xff] %v890
        %923 = vst [vmem:[%s799 + $0x1b0] sm:$0xff] %v891
        %924 = vst [vmem:[%s799 + $0x1c8] sm:$0xff] %v892
        %925 = vst [vmem:[%s799 + $0x1d0] sm:$0xff] %v893
        %926 = vst [vmem:[%s799 + $0x1e8] sm:$0xff] %v894
        %927 = vst [vmem:[%s799 + $0x1f0] sm:$0xff] %v895
        %v928 = vld [vmem:[%s4] sm:$0x7]
        %v929 = vld [vmem:[%s4 + $0x4] sm:$0x7]
        %v930 = vld [vmem:[%s4 + $0x8] sm:$0x7]
        %v931 = vld [vmem:[#allocation2 + $0x7] sm:$0xff]
        %v932 = vld [vmem:[#allocation2 + $0xf] sm:$0xff]
        %v933 = vld [vmem:[#allocation2 + $0x27] sm:$0xff]
        %v934 = vld [vmem:[#allocation2 + $0x2f] sm:$0xff]
        %v935 = vld [vmem:[#allocation2 + $0x47] sm:$0xff]
        %v936 = vld [vmem:[#allocation2 + $0x4f] sm:$0xff]
        %v937 = vld [vmem:[#allocation2 + $0x67] sm:$0xff]
        %v938 = vld [vmem:[#allocation2 + $0x6f] sm:$0xff]
        %v939 = vld [vmem:[#allocation2 + $0x87] sm:$0xff]
        %v940 = vld [vmem:[#allocation2 + $0x8f] sm:$0xff]
        %v941 = vld [vmem:[#allocation2 + $0xa7] sm:$0xff]
        %v942 = vld [vmem:[#allocation2 + $0xaf] sm:$0xff]
        %v943 = vld [vmem:[#allocation2 + $0xc7] sm:$0xff]
        %v944 = vld [vmem:[#allocation2 + $0xcf] sm:$0xff]
        %v945 = vld [vmem:[#allocation2 + $0xe7] sm:$0xff]
        %v946 = vld [vmem:[#allocation2 + $0xef] sm:$0xff]
        %v947 = vld [vmem:[#allocation2 + $0x107] sm:$0xff]
        %v948 = vld [vmem:[#allocation2 + $0x10f] sm:$0xff]
        %v949 = vld [vmem:[#allocation2 + $0x127] sm:$0xff]
        %v950 = vld [vmem:[#allocation2 + $0x12f] sm:$0xff]
        %v951 = vld [vmem:[#allocation2 + $0x8] sm:$0xff]
        %v952 = vld [vmem:[#allocation2 + $0x10] sm:$0xff]
        %v953 = vld [vmem:[#allocation2 + $0x28] sm:$0xff]
        %v954 = vld [vmem:[#allocation2 + $0x30] sm:$0xff]
        %v955 = vld [vmem:[#allocation2 + $0x48] sm:$0xff]
        %v956 = vld [vmem:[#allocation2 + $0x50] sm:$0xff]
        %v957 = vld [vmem:[#allocation2 + $0x68] sm:$0xff]
        %v958 = vld [vmem:[#allocation2 + $0x70] sm:$0xff]
        %v959 = vld [vmem:[#allocation2 + $0x88] sm:$0xff]
        %v960 = vld [vmem:[#allocation2 + $0x90] sm:$0xff]
        %v961 = vld [vmem:[#allocation2 + $0xa8] sm:$0xff]
        %v962 = vld [vmem:[#allocation2 + $0xb0] sm:$0xff]
        %v963 = vld [vmem:[#allocation2 + $0xc8] sm:$0xff]
        %v964 = vld [vmem:[#allocation2 + $0xd0] sm:$0xff]
        %v965 = vld [vmem:[#allocation2 + $0xe8] sm:$0xff]
        %v966 = vld [vmem:[#allocation2 + $0xf0] sm:$0xff]
        %v967 = vld [vmem:[#allocation2 + $0x108] sm:$0xff]
        %v968 = vld [vmem:[#allocation2 + $0x110] sm:$0xff]
        %v969 = vld [vmem:[#allocation2 + $0x128] sm:$0xff]
        %v970 = vld [vmem:[#allocation2 + $0x130] sm:$0xff]
        %v971 = vmax.f32 %v931, %v951
        %v972 = vmax.f32 %v932, %v952
        %v973 = vmax.f32 %v933, %v953
        %v974 = vmax.f32 %v934, %v954
        %v975 = vmax.f32 %v935, %v955
        %v976 = vmax.f32 %v936, %v956
        %v977 = vmax.f32 %v937, %v957
        %v978 = vmax.f32 %v938, %v958
        %v979 = vmax.f32 %v939, %v959
        %v980 = vmax.f32 %v940, %v960
        %v981 = vmax.f32 %v941, %v961
        %v982 = vmax.f32 %v942, %v962
        %v983 = vmax.f32 %v943, %v963
        %v984 = vmax.f32 %v944, %v964
        %v985 = vmax.f32 %v945, %v965
        %v986 = vmax.f32 %v946, %v966
        %v987 = vmax.f32 %v947, %v967
        %v988 = vmax.f32 %v948, %v968
        %v989 = vmax.f32 %v949, %v969
        %v990 = vmax.f32 %v950, %v970
        %v991 = vld [vmem:[#allocation2 + $0x9] sm:$0xff]
        %v992 = vld [vmem:[#allocation2 + $0x11] sm:$0xff]
        %v993 = vld [vmem:[#allocation2 + $0x29] sm:$0xff]
        %v994 = vld [vmem:[#allocation2 + $0x31] sm:$0xff]
        %v995 = vld [vmem:[#allocation2 + $0x49] sm:$0xff]
        %v996 = vld [vmem:[#allocation2 + $0x51] sm:$0xff]
        %v997 = vld [vmem:[#allocation2 + $0x69] sm:$0xff]
        %v998 = vld [vmem:[#allocation2 + $0x71] sm:$0xff]
        %v999 = vld [vmem:[#allocation2 + $0x89] sm:$0xff]
        %v1000 = vld [vmem:[#allocation2 + $0x91] sm:$0xff]
        %v1001 = vld [vmem:[#allocation2 + $0xa9] sm:$0xff]
        %v1002 = vld [vmem:[#allocation2 + $0xb1] sm:$0xff]
        %v1003 = vld [vmem:[#allocation2 + $0xc9] sm:$0xff]
        %v1004 = vld [vmem:[#allocation2 + $0xd1] sm:$0xff]
        %v1005 = vld [vmem:[#allocation2 + $0xe9] sm:$0xff]
        %v1006 = vld [vmem:[#allocation2 + $0xf1] sm:$0xff]
        %v1007 = vld [vmem:[#allocation2 + $0x109] sm:$0xff]
        %v1008 = vld [vmem:[#allocation2 + $0x111] sm:$0xff]
        %v1009 = vld [vmem:[#allocation2 + $0x129] sm:$0xff]
        %v1010 = vld [vmem:[#allocation2 + $0x131] sm:$0xff]
        %v1011 = vmax.f32 %v971, %v991
        %v1012 = vmax.f32 %v972, %v992
        %v1013 = vmax.f32 %v973, %v993
        %v1014 = vmax.f32 %v974, %v994
        %v1015 = vmax.f32 %v975, %v995
        %v1016 = vmax.f32 %v976, %v996
        %v1017 = vmax.f32 %v977, %v997
        %v1018 = vmax.f32 %v978, %v998
        %v1019 = vmax.f32 %v979, %v999
        %v1020 = vmax.f32 %v980, %v1000
        %v1021 = vmax.f32 %v981, %v1001
        %v1022 = vmax.f32 %v982, %v1002
        %v1023 = vmax.f32 %v983, %v1003
        %v1024 = vmax.f32 %v984, %v1004
        %v1025 = vmax.f32 %v985, %v1005
        %v1026 = vmax.f32 %v986, %v1006
        %v1027 = vmax.f32 %v987, %v1007
        %v1028 = vmax.f32 %v988, %v1008
        %v1029 = vmax.f32 %v989, %v1009
        %v1030 = vmax.f32 %v990, %v1010
        %v1031 = vmax.f32 %v1011, %v1013
        %v1032 = vmax.f32 %v1012, %v1014
        %v1033 = vmax.f32 %v1013, %v1015
        %v1034 = vmax.f32 %v1014, %v1016
        %v1035 = vmax.f32 %v1015, %v1017
        %v1036 = vmax.f32 %v1016, %v1018
        %v1037 = vmax.f32 %v1017, %v1019
        %v1038 = vmax.f32 %v1018, %v1020
        %v1039 = vmax.f32 %v1019, %v1021
        %v1040 = vmax.f32 %v1020, %v1022
        %v1041 = vmax.f32 %v1021, %v1023
        %v1042 = vmax.f32 %v1022, %v1024
        %v1043 = vmax.f32 %v1023, %v1025
        %v1044 = vmax.f32 %v1024, %v1026
        %v1045 = vmax.f32 %v1025, %v1027
        %v1046 = vmax.f32 %v1026, %v1028
        %v1047 = vmax.f32 %v1031, %v1015
        %v1048 = vmax.f32 %v1032, %v1016
        %v1049 = vmax.f32 %v1033, %v1017
        %v1050 = vmax.f32 %v1034, %v1018
        %v1051 = vmax.f32 %v1035, %v1019
        %v1052 = vmax.f32 %v1036, %v1020
        %v1053 = vmax.f32 %v1037, %v1021
        %v1054 = vmax.f32 %v1038, %v1022
        %v1055 = vmax.f32 %v1039, %v1023
        %v1056 = vmax.f32 %v1040, %v1024
        %v1057 = vmax.f32 %v1041, %v1025
        %v1058 = vmax.f32 %v1042, %v1026
        %v1059 = vmax.f32 %v1043, %v1027
        %v1060 = vmax.f32 %v1044, %v1028
        %v1061 = vmax.f32 %v1045, %v1029
        %v1062 = vmax.f32 %v1046, %v1030
        %v1063 = vld [vmem:[#allocation4 + $0x7] sm:$0xff]
        %v1064 = vld [vmem:[#allocation4 + $0xf] sm:$0xff]
        %v1065 = vld [vmem:[#allocation4 + $0x27] sm:$0xff]
        %v1066 = vld [vmem:[#allocation4 + $0x2f] sm:$0xff]
        %v1067 = vld [vmem:[#allocation4 + $0x47] sm:$0xff]
        %v1068 = vld [vmem:[#allocation4 + $0x4f] sm:$0xff]
        %v1069 = vld [vmem:[#allocation4 + $0x67] sm:$0xff]
        %v1070 = vld [vmem:[#allocation4 + $0x6f] sm:$0xff]
        %v1071 = vld [vmem:[#allocation4 + $0x87] sm:$0xff]
        %v1072 = vld [vmem:[#allocation4 + $0x8f] sm:$0xff]
        %v1073 = vld [vmem:[#allocation4 + $0xa7] sm:$0xff]
        %v1074 = vld [vmem:[#allocation4 + $0xaf] sm:$0xff]
        %v1075 = vld [vmem:[#allocation4 + $0xc7] sm:$0xff]
        %v1076 = vld [vmem:[#allocation4 + $0xcf] sm:$0xff]
        %v1077 = vld [vmem:[#allocation4 + $0xe7] sm:$0xff]
        %v1078 = vld [vmem:[#allocation4 + $0xef] sm:$0xff]
        %v1079 = vld [vmem:[#allocation4 + $0x107] sm:$0xff]
        %v1080 = vld [vmem:[#allocation4 + $0x10f] sm:$0xff]
        %v1081 = vld [vmem:[#allocation4 + $0x127] sm:$0xff]
        %v1082 = vld [vmem:[#allocation4 + $0x12f] sm:$0xff]
        %v1083 = vld [vmem:[#allocation4 + $0x8] sm:$0xff]
        %v1084 = vld [vmem:[#allocation4 + $0x10] sm:$0xff]
        %v1085 = vld [vmem:[#allocation4 + $0x28] sm:$0xff]
        %v1086 = vld [vmem:[#allocation4 + $0x30] sm:$0xff]
        %v1087 = vld [vmem:[#allocation4 + $0x48] sm:$0xff]
        %v1088 = vld [vmem:[#allocation4 + $0x50] sm:$0xff]
        %v1089 = vld [vmem:[#allocation4 + $0x68] sm:$0xff]
        %v1090 = vld [vmem:[#allocation4 + $0x70] sm:$0xff]
        %v1091 = vld [vmem:[#allocation4 + $0x88] sm:$0xff]
        %v1092 = vld [vmem:[#allocation4 + $0x90] sm:$0xff]
        %v1093 = vld [vmem:[#allocation4 + $0xa8] sm:$0xff]
        %v1094 = vld [vmem:[#allocation4 + $0xb0] sm:$0xff]
        %v1095 = vld [vmem:[#allocation4 + $0xc8] sm:$0xff]
        %v1096 = vld [vmem:[#allocation4 + $0xd0] sm:$0xff]
        %v1097 = vld [vmem:[#allocation4 + $0xe8] sm:$0xff]
        %v1098 = vld [vmem:[#allocation4 + $0xf0] sm:$0xff]
        %v1099 = vld [vmem:[#allocation4 + $0x108] sm:$0xff]
        %v1100 = vld [vmem:[#allocation4 + $0x110] sm:$0xff]
        %v1101 = vld [vmem:[#allocation4 + $0x128] sm:$0xff]
        %v1102 = vld [vmem:[#allocation4 + $0x130] sm:$0xff]
        %v1103 = vadd.f32 %v1063, %v1083
        %v1104 = vadd.f32 %v1064, %v1084
        %v1105 = vadd.f32 %v1065, %v1085
        %v1106 = vadd.f32 %v1066, %v1086
        %v1107 = vadd.f32 %v1067, %v1087
        %v1108 = vadd.f32 %v1068, %v1088
        %v1109 = vadd.f32 %v1069, %v1089
        %v1110 = vadd.f32 %v1070, %v1090
        %v1111 = vadd.f32 %v1071, %v1091
        %v1112 = vadd.f32 %v1072, %v1092
        %v1113 = vadd.f32 %v1073, %v1093
        %v1114 = vadd.f32 %v1074, %v1094
        %v1115 = vadd.f32 %v1075, %v1095
        %v1116 = vadd.f32 %v1076, %v1096
        %v1117 = vadd.f32 %v1077, %v1097
        %v1118 = vadd.f32 %v1078, %v1098
        %v1119 = vadd.f32 %v1079, %v1099
        %v1120 = vadd.f32 %v1080, %v1100
        %v1121 = vadd.f32 %v1081, %v1101
        %v1122 = vadd.f32 %v1082, %v1102
        %v1123 = vld [vmem:[#allocation4 + $0x9] sm:$0xff]
        %v1124 = vld [vmem:[#allocation4 + $0x11] sm:$0xff]
        %v1125 = vld [vmem:[#allocation4 + $0x29] sm:$0xff]
        %v1126 = vld [vmem:[#allocation4 + $0x31] sm:$0xff]
        %v1127 = vld [vmem:[#allocation4 + $0x49] sm:$0xff]
        %v1128 = vld [vmem:[#allocation4 + $0x51] sm:$0xff]
        %v1129 = vld [vmem:[#allocation4 + $0x69] sm:$0xff]
        %v1130 = vld [vmem:[#allocation4 + $0x71] sm:$0xff]
        %v1131 = vld [vmem:[#allocation4 + $0x89] sm:$0xff]
        %v1132 = vld [vmem:[#allocation4 + $0x91] sm:$0xff]
        %v1133 = vld [vmem:[#allocation4 + $0xa9] sm:$0xff]
        %v1134 = vld [vmem:[#allocation4 + $0xb1] sm:$0xff]
        %v1135 = vld [vmem:[#allocation4 + $0xc9] sm:$0xff]
        %v1136 = vld [vmem:[#allocation4 + $0xd1] sm:$0xff]
        %v1137 = vld [vmem:[#allocation4 + $0xe9] sm:$0xff]
        %v1138 = vld [vmem:[#allocation4 + $0xf1] sm:$0xff]
        %v1139 = vld [vmem:[#allocation4 + $0x109] sm:$0xff]
        %v1140 = vld [vmem:[#allocation4 + $0x111] sm:$0xff]
        %v1141 = vld [vmem:[#allocation4 + $0x129] sm:$0xff]
        %v1142 = vld [vmem:[#allocation4 + $0x131] sm:$0xff]
        %v1143 = vadd.f32 %v1103, %v1123
        %v1144 = vadd.f32 %v1104, %v1124
        %v1145 = vadd.f32 %v1105, %v1125
        %v1146 = vadd.f32 %v1106, %v1126
        %v1147 = vadd.f32 %v1107, %v1127
        %v1148 = vadd.f32 %v1108, %v1128
        %v1149 = vadd.f32 %v1109, %v1129
        %v1150 = vadd.f32 %v1110, %v1130
        %v1151 = vadd.f32 %v1111, %v1131
        %v1152 = vadd.f32 %v1112, %v1132
        %v1153 = vadd.f32 %v1113, %v1133
        %v1154 = vadd.f32 %v1114, %v1134
        %v1155 = vadd.f32 %v1115, %v1135
        %v1156 = vadd.f32 %v1116, %v1136
        %v1157 = vadd.f32 %v1117, %v1137
        %v1158 = vadd.f32 %v1118, %v1138
        %v1159 = vadd.f32 %v1119, %v1139
        %v1160 = vadd.f32 %v1120, %v1140
        %v1161 = vadd.f32 %v1121, %v1141
        %v1162 = vadd.f32 %v1122, %v1142
        %v1163 = vadd.f32 %v1143, %v1145
        %v1164 = vadd.f32 %v1144, %v1146
        %v1165 = vadd.f32 %v1145, %v1147
        %v1166 = vadd.f32 %v1146, %v1148
        %v1167 = vadd.f32 %v1147, %v1149
        %v1168 = vadd.f32 %v1148, %v1150
        %v1169 = vadd.f32 %v1149, %v1151
        %v1170 = vadd.f32 %v1150, %v1152
        %v1171 = vadd.f32 %v1151, %v1153
        %v1172 = vadd.f32 %v1152, %v1154
        %v1173 = vadd.f32 %v1153, %v1155
        %v1174 = vadd.f32 %v1154, %v1156
        %v1175 = vadd.f32 %v1155, %v1157
        %v1176 = vadd.f32 %v1156, %v1158
        %v1177 = vadd.f32 %v1157, %v1159
        %v1178 = vadd.f32 %v1158, %v1160
        %v1179 = vadd.f32 %v1163, %v1147
        %v1180 = vadd.f32 %v1164, %v1148
        %v1181 = vadd.f32 %v1165, %v1149
        %v1182 = vadd.f32 %v1166, %v1150
        %v1183 = vadd.f32 %v1167, %v1151
        %v1184 = vadd.f32 %v1168, %v1152
        %v1185 = vadd.f32 %v1169, %v1153
        %v1186 = vadd.f32 %v1170, %v1154
        %v1187 = vadd.f32 %v1171, %v1155
        %v1188 = vadd.f32 %v1172, %v1156
        %v1189 = vadd.f32 %v1173, %v1157
        %v1190 = vadd.f32 %v1174, %v1158
        %v1191 = vadd.f32 %v1175, %v1159
        %v1192 = vadd.f32 %v1176, %v1160
        %v1193 = vadd.f32 %v1177, %v1161
        %v1194 = vadd.f32 %v1178, %v1162
        %v1195 = vld [vmem:[#allocation12] sm:$0xff]
        %v1196 = vld [vmem:[#allocation12 + $0x8] sm:$0xff]
        %v1197 = vld [vmem:[#allocation12 + $0x10] sm:$0xff]
        %v1198 = vld [vmem:[#allocation12 + $0x18] sm:$0xff]
        %v1199 = vld [vmem:[#allocation12 + $0x20] sm:$0xff]
        %v1200 = vld [vmem:[#allocation12 + $0x28] sm:$0xff]
        %v1201 = vld [vmem:[#allocation12 + $0x30] sm:$0xff]
        %v1202 = vld [vmem:[#allocation12 + $0x38] sm:$0xff]
        %v1203 = vld [vmem:[#allocation12 + $0x40] sm:$0xff]
        %v1204 = vld [vmem:[#allocation12 + $0x48] sm:$0xff]
        %v1205 = vld [vmem:[#allocation12 + $0x50] sm:$0xff]
        %v1206 = vld [vmem:[#allocation12 + $0x58] sm:$0xff]
        %v1207 = vld [vmem:[#allocation12 + $0x60] sm:$0xff]
        %v1208 = vld [vmem:[#allocation12 + $0x68] sm:$0xff]
        %v1209 = vld [vmem:[#allocation12 + $0x70] sm:$0xff]
        %v1210 = vld [vmem:[#allocation12 + $0x78] sm:$0xff]
        %v1211 = vmul.f32 %v1179, %v1195
        %v1212 = vmul.f32 %v1180, %v1196
        %v1213 = vmul.f32 %v1181, %v1197
        %v1214 = vmul.f32 %v1182, %v1198
        %v1215 = vmul.f32 %v1183, %v1199
        %v1216 = vmul.f32 %v1184, %v1200
        %v1217 = vmul.f32 %v1185, %v1201
        %v1218 = vmul.f32 %v1186, %v1202
        %v1219 = vmul.f32 %v1187, %v1203
        %v1220 = vmul.f32 %v1188, %v1204
        %v1221 = vmul.f32 %v1189, %v1205
        %v1222 = vmul.f32 %v1190, %v1206
        %v1223 = vmul.f32 %v1191, %v1207
        %v1224 = vmul.f32 %v1192, %v1208
        %v1225 = vmul.f32 %v1193, %v1209
        %v1226 = vmul.f32 %v1194, %v1210
        %v1227 = vadd.f32 %v1047, %v1211
        %v1228 = vadd.f32 %v1048, %v1212
        %v1229 = vadd.f32 %v1049, %v1213
        %v1230 = vadd.f32 %v1050, %v1214
        %v1231 = vadd.f32 %v1051, %v1215
        %v1232 = vadd.f32 %v1052, %v1216
        %v1233 = vadd.f32 %v1053, %v1217
        %v1234 = vadd.f32 %v1054, %v1218
        %v1235 = vadd.f32 %v1055, %v1219
        %v1236 = vadd.f32 %v1056, %v1220
        %v1237 = vadd.f32 %v1057, %v1221
        %v1238 = vadd.f32 %v1058, %v1222
        %v1239 = vadd.f32 %v1059, %v1223
        %v1240 = vadd.f32 %v1060, %v1224
        %v1241 = vadd.f32 %v1061, %v1225
        %v1242 = vadd.f32 %v1062, %v1226
        %v1243 = vld [vmem:[#allocation3 + $0x6] sm:$0xff]
        %v1244 = vld [vmem:[#allocation3 + $0xe] sm:$0xff]
        %v1245 = vld [vmem:[#allocation3 + $0x26] sm:$0xff]
        %v1246 = vld [vmem:[#allocation3 + $0x2e] sm:$0xff]
        %v1247 = vld [vmem:[#allocation3 + $0x46] sm:$0xff]
        %v1248 = vld [vmem:[#allocation3 + $0x4e] sm:$0xff]
        %v1249 = vld [vmem:[#allocation3 + $0x66] sm:$0xff]
        %v1250 = vld [vmem:[#allocation3 + $0x6e] sm:$0xff]
        %v1251 = vld [vmem:[#allocation3 + $0x86] sm:$0xff]
        %v1252 = vld [vmem:[#allocation3 + $0x8e] sm:$0xff]
        %v1253 = vld [vmem:[#allocation3 + $0xa6] sm:$0xff]
        %v1254 = vld [vmem:[#allocation3 + $0xae] sm:$0xff]
        %v1255 = vld [vmem:[#allocation3 + $0xc6] sm:$0xff]
        %v1256 = vld [vmem:[#allocation3 + $0xce] sm:$0xff]
        %v1257 = vld [vmem:[#allocation3 + $0xe6] sm:$0xff]
        %v1258 = vld [vmem:[#allocation3 + $0xee] sm:$0xff]
        %v1259 = vlaneseq
        %v1260 = vshrl.u32 %v1259, 7
        %v1261 = vsub.s32 0, %v1260
        %v1262 = vrot.slane %v928, %v1261
        %v1263 = vmul.f32 %v1243, %v1262
        %v1264 = vmul.f32 %v1244, %v1262
        %v1265 = vmul.f32 %v1245, %v1262
        %v1266 = vmul.f32 %v1246, %v1262
        %v1267 = vmul.f32 %v1247, %v1262
        %v1268 = vmul.f32 %v1248, %v1262
        %v1269 = vmul.f32 %v1249, %v1262
        %v1270 = vmul.f32 %v1250, %v1262
        %v1271 = vmul.f32 %v1251, %v1262
        %v1272 = vmul.f32 %v1252, %v1262
        %v1273 = vmul.f32 %v1253, %v1262
        %v1274 = vmul.f32 %v1254, %v1262
        %v1275 = vmul.f32 %v1255, %v1262
        %v1276 = vmul.f32 %v1256, %v1262
        %v1277 = vmul.f32 %v1257, %v1262
        %v1278 = vmul.f32 %v1258, %v1262
        %v1279 = vld [vmem:[#allocation3 + $0x8] sm:$0xff]
        %v1280 = vld [vmem:[#allocation3 + $0x10] sm:$0xff]
        %v1281 = vld [vmem:[#allocation3 + $0x28] sm:$0xff]
        %v1282 = vld [vmem:[#allocation3 + $0x30] sm:$0xff]
        %v1283 = vld [vmem:[#allocation3 + $0x48] sm:$0xff]
        %v1284 = vld [vmem:[#allocation3 + $0x50] sm:$0xff]
        %v1285 = vld [vmem:[#allocation3 + $0x68] sm:$0xff]
        %v1286 = vld [vmem:[#allocation3 + $0x70] sm:$0xff]
        %v1287 = vld [vmem:[#allocation3 + $0x88] sm:$0xff]
        %v1288 = vld [vmem:[#allocation3 + $0x90] sm:$0xff]
        %v1289 = vld [vmem:[#allocation3 + $0xa8] sm:$0xff]
        %v1290 = vld [vmem:[#allocation3 + $0xb0] sm:$0xff]
        %v1291 = vld [vmem:[#allocation3 + $0xc8] sm:$0xff]
        %v1292 = vld [vmem:[#allocation3 + $0xd0] sm:$0xff]
        %v1293 = vld [vmem:[#allocation3 + $0xe8] sm:$0xff]
        %v1294 = vld [vmem:[#allocation3 + $0xf0] sm:$0xff]
        %v1295 = vlaneseq
        %v1296 = vshrl.u32 %v1295, 7
        %v1297 = vsub.s32 1, %v1296
        %v1298 = vrot.slane %v928, %v1297
        %v1299 = vmul.f32 %v1279, %v1298
        %v1300 = vmul.f32 %v1280, %v1298
        %v1301 = vmul.f32 %v1281, %v1298
        %v1302 = vmul.f32 %v1282, %v1298
        %v1303 = vmul.f32 %v1283, %v1298
        %v1304 = vmul.f32 %v1284, %v1298
        %v1305 = vmul.f32 %v1285, %v1298
        %v1306 = vmul.f32 %v1286, %v1298
        %v1307 = vmul.f32 %v1287, %v1298
        %v1308 = vmul.f32 %v1288, %v1298
        %v1309 = vmul.f32 %v1289, %v1298
        %v1310 = vmul.f32 %v1290, %v1298
        %v1311 = vmul.f32 %v1291, %v1298
        %v1312 = vmul.f32 %v1292, %v1298
        %v1313 = vmul.f32 %v1293, %v1298
        %v1314 = vmul.f32 %v1294, %v1298
        %v1315 = vadd.f32 %v1263, %v1299
        %v1316 = vadd.f32 %v1264, %v1300
        %v1317 = vadd.f32 %v1265, %v1301
        %v1318 = vadd.f32 %v1266, %v1302
        %v1319 = vadd.f32 %v1267, %v1303
        %v1320 = vadd.f32 %v1268, %v1304
        %v1321 = vadd.f32 %v1269, %v1305
        %v1322 = vadd.f32 %v1270, %v1306
        %v1323 = vadd.f32 %v1271, %v1307
        %v1324 = vadd.f32 %v1272, %v1308
        %v1325 = vadd.f32 %v1273, %v1309
        %v1326 = vadd.f32 %v1274, %v1310
        %v1327 = vadd.f32 %v1275, %v1311
        %v1328 = vadd.f32 %v1276, %v1312
        %v1329 = vadd.f32 %v1277, %v1313
        %v1330 = vadd.f32 %v1278, %v1314
        %v1331 = vld [vmem:[#allocation3 + $0xa] sm:$0xff]
        %v1332 = vld [vmem:[#allocation3 + $0x12] sm:$0xff]
        %v1333 = vld [vmem:[#allocation3 + $0x2a] sm:$0xff]
        %v1334 = vld [vmem:[#allocation3 + $0x32] sm:$0xff]
        %v1335 = vld [vmem:[#allocation3 + $0x4a] sm:$0xff]
        %v1336 = vld [vmem:[#allocation3 + $0x52] sm:$0xff]
        %v1337 = vld [vmem:[#allocation3 + $0x6a] sm:$0xff]
        %v1338 = vld [vmem:[#allocation3 + $0x72] sm:$0xff]
        %v1339 = vld [vmem:[#allocation3 + $0x8a] sm:$0xff]
        %v1340 = vld [vmem:[#allocation3 + $0x92] sm:$0xff]
        %v1341 = vld [vmem:[#allocation3 + $0xaa] sm:$0xff]
        %v1342 = vld [vmem:[#allocation3 + $0xb2] sm:$0xff]
        %v1343 = vld [vmem:[#allocation3 + $0xca] sm:$0xff]
        %v1344 = vld [vmem:[#allocation3 + $0xd2] sm:$0xff]
        %v1345 = vld [vmem:[#allocation3 + $0xea] sm:$0xff]
        %v1346 = vld [vmem:[#allocation3 + $0xf2] sm:$0xff]
        %v1347 = vlaneseq
        %v1348 = vshrl.u32 %v1347, 7
        %v1349 = vsub.s32 2, %v1348
        %v1350 = vrot.slane %v928, %v1349
        %v1351 = vmul.f32 %v1331, %v1350
        %v1352 = vmul.f32 %v1332, %v1350
        %v1353 = vmul.f32 %v1333, %v1350
        %v1354 = vmul.f32 %v1334, %v1350
        %v1355 = vmul.f32 %v1335, %v1350
        %v1356 = vmul.f32 %v1336, %v1350
        %v1357 = vmul.f32 %v1337, %v1350
        %v1358 = vmul.f32 %v1338, %v1350
        %v1359 = vmul.f32 %v1339, %v1350
        %v1360 = vmul.f32 %v1340, %v1350
        %v1361 = vmul.f32 %v1341, %v1350
        %v1362 = vmul.f32 %v1342, %v1350
        %v1363 = vmul.f32 %v1343, %v1350
        %v1364 = vmul.f32 %v1344, %v1350
        %v1365 = vmul.f32 %v1345, %v1350
        %v1366 = vmul.f32 %v1346, %v1350
        %v1367 = vadd.f32 %v1315, %v1351
        %v1368 = vadd.f32 %v1316, %v1352
        %v1369 = vadd.f32 %v1317, %v1353
        %v1370 = vadd.f32 %v1318, %v1354
        %v1371 = vadd.f32 %v1319, %v1355
        %v1372 = vadd.f32 %v1320, %v1356
        %v1373 = vadd.f32 %v1321, %v1357
        %v1374 = vadd.f32 %v1322, %v1358
        %v1375 = vadd.f32 %v1323, %v1359
        %v1376 = vadd.f32 %v1324, %v1360
        %v1377 = vadd.f32 %v1325, %v1361
        %v1378 = vadd.f32 %v1326, %v1362
        %v1379 = vadd.f32 %v1327, %v1363
        %v1380 = vadd.f32 %v1328, %v1364
        %v1381 = vadd.f32 %v1329, %v1365
        %v1382 = vadd.f32 %v1330, %v1366
        %v1383 = vld [vmem:[%s799 + $0x6] sm:$0xff]
        %v1384 = vld [vmem:[%s799 + $0xe] sm:$0xff]
        %v1385 = vld [vmem:[%s799 + $0x26] sm:$0xff]
        %v1386 = vld [vmem:[%s799 + $0x2e] sm:$0xff]
        %v1387 = vld [vmem:[%s799 + $0x46] sm:$0xff]
        %v1388 = vld [vmem:[%s799 + $0x4e] sm:$0xff]
        %v1389 = vld [vmem:[%s799 + $0x66] sm:$0xff]
        %v1390 = vld [vmem:[%s799 + $0x6e] sm:$0xff]
        %v1391 = vld [vmem:[%s799 + $0x86] sm:$0xff]
        %v1392 = vld [vmem:[%s799 + $0x8e] sm:$0xff]
        %v1393 = vld [vmem:[%s799 + $0xa6] sm:$0xff]
        %v1394 = vld [vmem:[%s799 + $0xae] sm:$0xff]
        %v1395 = vld [vmem:[%s799 + $0xc6] sm:$0xff]
        %v1396 = vld [vmem:[%s799 + $0xce] sm:$0xff]
        %v1397 = vld [vmem:[%s799 + $0xe6] sm:$0xff]
        %v1398 = vld [vmem:[%s799 + $0xee] sm:$0xff]
        %v1399 = vlaneseq
        %v1400 = vshrl.u32 %v1399, 7
        %v1401 = vsub.s32 0, %v1400
        %v1402 = vrot.slane %v929, %v1401
        %v1403 = vmul.f32 %v1383, %v1402
        %v1404 = vmul.f32 %v1384, %v1402
        %v1405 = vmul.f32 %v1385, %v1402
        %v1406 = vmul.f32 %v1386, %v1402
        %v1407 = vmul.f32 %v1387, %v1402
        %v1408 = vmul.f32 %v1388, %v1402
        %v1409 = vmul.f32 %v1389, %v1402
        %v1410 = vmul.f32 %v1390, %v1402
        %v1411 = vmul.f32 %v1391, %v1402
        %v1412 = vmul.f32 %v1392, %v1402
        %v1413 = vmul.f32 %v1393, %v1402
        %v1414 = vmul.f32 %v1394, %v1402
        %v1415 = vmul.f32 %v1395, %v1402
        %v1416 = vmul.f32 %v1396, %v1402
        %v1417 = vmul.f32 %v1397, %v1402
        %v1418 = vmul.f32 %v1398, %v1402
        %v1419 = vadd.f32 %v1367, %v1403
        %v1420 = vadd.f32 %v1368, %v1404
        %v1421 = vadd.f32 %v1369, %v1405
        %v1422 = vadd.f32 %v1370, %v1406
        %v1423 = vadd.f32 %v1371, %v1407
        %v1424 = vadd.f32 %v1372, %v1408
        %v1425 = vadd.f32 %v1373, %v1409
        %v1426 = vadd.f32 %v1374, %v1410
        %v1427 = vadd.f32 %v1375, %v1411
        %v1428 = vadd.f32 %v1376, %v1412
        %v1429 = vadd.f32 %v1377, %v1413
        %v1430 = vadd.f32 %v1378, %v1414
        %v1431 = vadd.f32 %v1379, %v1415
        %v1432 = vadd.f32 %v1380, %v1416
        %v1433 = vadd.f32 %v1381, %v1417
        %v1434 = vadd.f32 %v1382, %v1418
        %v1435 = vld [vmem:[%s799 + $0x8] sm:$0xff]
        %v1436 = vld [vmem:[%s799 + $0x10] sm:$0xff]
        %v1437 = vld [vmem:[%s799 + $0x28] sm:$0xff]
        %v1438 = vld [vmem:[%s799 + $0x30] sm:$0xff]
        %v1439 = vld [vmem:[%s799 + $0x48] sm:$0xff]
        %v1440 = vld [vmem:[%s799 + $0x50] sm:$0xff]
        %v1441 = vld [vmem:[%s799 + $0x68] sm:$0xff]
        %v1442 = vld [vmem:[%s799 + $0x70] sm:$0xff]
        %v1443 = vld [vmem:[%s799 + $0x88] sm:$0xff]
        %v1444 = vld [vmem:[%s799 + $0x90] sm:$0xff]
        %v1445 = vld [vmem:[%s799 + $0xa8] sm:$0xff]
        %v1446 = vld [vmem:[%s799 + $0xb0] sm:$0xff]
        %v1447 = vld [vmem:[%s799 + $0xc8] sm:$0xff]
        %v1448 = vld [vmem:[%s799 + $0xd0] sm:$0xff]
        %v1449 = vld [vmem:[%s799 + $0xe8] sm:$0xff]
        %v1450 = vld [vmem:[%s799 + $0xf0] sm:$0xff]
        %v1451 = vlaneseq
        %v1452 = vshrl.u32 %v1451, 7
        %v1453 = vsub.s32 1, %v1452
        %v1454 = vrot.slane %v929, %v1453
        %v1455 = vmul.f32 %v1435, %v1454
        %v1456 = vmul.f32 %v1436, %v1454
        %v1457 = vmul.f32 %v1437, %v1454
        %v1458 = vmul.f32 %v1438, %v1454
        %v1459 = vmul.f32 %v1439, %v1454
        %v1460 = vmul.f32 %v1440, %v1454
        %v1461 = vmul.f32 %v1441, %v1454
        %v1462 = vmul.f32 %v1442, %v1454
        %v1463 = vmul.f32 %v1443, %v1454
        %v1464 = vmul.f32 %v1444, %v1454
        %v1465 = vmul.f32 %v1445, %v1454
        %v1466 = vmul.f32 %v1446, %v1454
        %v1467 = vmul.f32 %v1447, %v1454
        %v1468 = vmul.f32 %v1448, %v1454
        %v1469 = vmul.f32 %v1449, %v1454
        %v1470 = vmul.f32 %v1450, %v1454
        %v1471 = vadd.f32 %v1419, %v1455
        %v1472 = vadd.f32 %v1420, %v1456
        %v1473 = vadd.f32 %v1421, %v1457
        %v1474 = vadd.f32 %v1422, %v1458
        %v1475 = vadd.f32 %v1423, %v1459
        %v1476 = vadd.f32 %v1424, %v1460
        %v1477 = vadd.f32 %v1425, %v1461
        %v1478 = vadd.f32 %v1426, %v1462
        %v1479 = vadd.f32 %v1427, %v1463
        %v1480 = vadd.f32 %v1428, %v1464
        %v1481 = vadd.f32 %v1429, %v1465
        %v1482 = vadd.f32 %v1430, %v1466
        %v1483 = vadd.f32 %v1431, %v1467
        %v1484 = vadd.f32 %v1432, %v1468
        %v1485 = vadd.f32 %v1433, %v1469
        %v1486 = vadd.f32 %v1434, %v1470
        %v1487 = vld [vmem:[%s799 + $0xa] sm:$0xff]
        %v1488 = vld [vmem:[%s799 + $0x12] sm:$0xff]
        %v1489 = vld [vmem:[%s799 + $0x2a] sm:$0xff]
        %v1490 = vld [vmem:[%s799 + $0x32] sm:$0xff]
        %v1491 = vld [vmem:[%s799 + $0x4a] sm:$0xff]
        %v1492 = vld [vmem:[%s799 + $0x52] sm:$0xff]
        %v1493 = vld [vmem:[%s799 + $0x6a] sm:$0xff]
        %v1494 = vld [vmem:[%s799 + $0x72] sm:$0xff]
        %v1495 = vld [vmem:[%s799 + $0x8a] sm:$0xff]
        %v1496 = vld [vmem:[%s799 + $0x92] sm:$0xff]
        %v1497 = vld [vmem:[%s799 + $0xaa] sm:$0xff]
        %v1498 = vld [vmem:[%s799 + $0xb2] sm:$0xff]
        %v1499 = vld [vmem:[%s799 + $0xca] sm:$0xff]
        %v1500 = vld [vmem:[%s799 + $0xd2] sm:$0xff]
        %v1501 = vld [vmem:[%s799 + $0xea] sm:$0xff]
        %v1502 = vld [vmem:[%s799 + $0xf2] sm:$0xff]
        %v1503 = vlaneseq
        %v1504 = vshrl.u32 %v1503, 7
        %v1505 = vsub.s32 2, %v1504
        %v1506 = vrot.slane %v929, %v1505
        %v1507 = vmul.f32 %v1487, %v1506
        %v1508 = vmul.f32 %v1488, %v1506
        %v1509 = vmul.f32 %v1489, %v1506
        %v1510 = vmul.f32 %v1490, %v1506
        %v1511 = vmul.f32 %v1491, %v1506
        %v1512 = vmul.f32 %v1492, %v1506
        %v1513 = vmul.f32 %v1493, %v1506
        %v1514 = vmul.f32 %v1494, %v1506
        %v1515 = vmul.f32 %v1495, %v1506
        %v1516 = vmul.f32 %v1496, %v1506
        %v1517 = vmul.f32 %v1497, %v1506
        %v1518 = vmul.f32 %v1498, %v1506
        %v1519 = vmul.f32 %v1499, %v1506
        %v1520 = vmul.f32 %v1500, %v1506
        %v1521 = vmul.f32 %v1501, %v1506
        %v1522 = vmul.f32 %v1502, %v1506
        %v1523 = vadd.f32 %v1471, %v1507
        %v1524 = vadd.f32 %v1472, %v1508
        %v1525 = vadd.f32 %v1473, %v1509
        %v1526 = vadd.f32 %v1474, %v1510
        %v1527 = vadd.f32 %v1475, %v1511
        %v1528 = vadd.f32 %v1476, %v1512
        %v1529 = vadd.f32 %v1477, %v1513
        %v1530 = vadd.f32 %v1478, %v1514
        %v1531 = vadd.f32 %v1479, %v1515
        %v1532 = vadd.f32 %v1480, %v1516
        %v1533 = vadd.f32 %v1481, %v1517
        %v1534 = vadd.f32 %v1482, %v1518
        %v1535 = vadd.f32 %v1483, %v1519
        %v1536 = vadd.f32 %v1484, %v1520
        %v1537 = vadd.f32 %v1485, %v1521
        %v1538 = vadd.f32 %v1486, %v1522
        %s1539 = scalar_lea.vmem [#allocation3], 128
        %v1540 = vld [vmem:[%s1539 + $0x6] sm:$0xff]
        %v1541 = vld [vmem:[%s1539 + $0xe] sm:$0xff]
        %v1542 = vld [vmem:[%s1539 + $0x26] sm:$0xff]
        %v1543 = vld [vmem:[%s1539 + $0x2e] sm:$0xff]
        %v1544 = vld [vmem:[%s1539 + $0x46] sm:$0xff]
        %v1545 = vld [vmem:[%s1539 + $0x4e] sm:$0xff]
        %v1546 = vld [vmem:[%s1539 + $0x66] sm:$0xff]
        %v1547 = vld [vmem:[%s1539 + $0x6e] sm:$0xff]
        %v1548 = vld [vmem:[%s1539 + $0x86] sm:$0xff]
        %v1549 = vld [vmem:[%s1539 + $0x8e] sm:$0xff]
        %v1550 = vld [vmem:[%s1539 + $0xa6] sm:$0xff]
        %v1551 = vld [vmem:[%s1539 + $0xae] sm:$0xff]
        %v1552 = vld [vmem:[%s1539 + $0xc6] sm:$0xff]
        %v1553 = vld [vmem:[%s1539 + $0xce] sm:$0xff]
        %v1554 = vld [vmem:[%s1539 + $0xe6] sm:$0xff]
        %v1555 = vld [vmem:[%s1539 + $0xee] sm:$0xff]
        %v1556 = vlaneseq
        %v1557 = vshrl.u32 %v1556, 7
        %v1558 = vsub.s32 0, %v1557
        %v1559 = vrot.slane %v930, %v1558
        %v1560 = vmul.f32 %v1540, %v1559
        %v1561 = vmul.f32 %v1541, %v1559
        %v1562 = vmul.f32 %v1542, %v1559
        %v1563 = vmul.f32 %v1543, %v1559
        %v1564 = vmul.f32 %v1544, %v1559
        %v1565 = vmul.f32 %v1545, %v1559
        %v1566 = vmul.f32 %v1546, %v1559
        %v1567 = vmul.f32 %v1547, %v1559
        %v1568 = vmul.f32 %v1548, %v1559
        %v1569 = vmul.f32 %v1549, %v1559
        %v1570 = vmul.f32 %v1550, %v1559
        %v1571 = vmul.f32 %v1551, %v1559
        %v1572 = vmul.f32 %v1552, %v1559
        %v1573 = vmul.f32 %v1553, %v1559
        %v1574 = vmul.f32 %v1554, %v1559
        %v1575 = vmul.f32 %v1555, %v1559
        %v1576 = vadd.f32 %v1523, %v1560
        %v1577 = vadd.f32 %v1524, %v1561
        %v1578 = vadd.f32 %v1525, %v1562
        %v1579 = vadd.f32 %v1526, %v1563
        %v1580 = vadd.f32 %v1527, %v1564
        %v1581 = vadd.f32 %v1528, %v1565
        %v1582 = vadd.f32 %v1529, %v1566
        %v1583 = vadd.f32 %v1530, %v1567
        %v1584 = vadd.f32 %v1531, %v1568
        %v1585 = vadd.f32 %v1532, %v1569
        %v1586 = vadd.f32 %v1533, %v1570
        %v1587 = vadd.f32 %v1534, %v1571
        %v1588 = vadd.f32 %v1535, %v1572
        %v1589 = vadd.f32 %v1536, %v1573
        %v1590 = vadd.f32 %v1537, %v1574
        %v1591 = vadd.f32 %v1538, %v1575
        %v1592 = vld [vmem:[%s1539 + $0x8] sm:$0xff]
        %v1593 = vld [vmem:[%s1539 + $0x10] sm:$0xff]
        %v1594 = vld [vmem:[%s1539 + $0x28] sm:$0xff]
        %v1595 = vld [vmem:[%s1539 + $0x30] sm:$0xff]
        %v1596 = vld [vmem:[%s1539 + $0x48] sm:$0xff]
        %v1597 = vld [vmem:[%s1539 + $0x50] sm:$0xff]
        %v1598 = vld [vmem:[%s1539 + $0x68] sm:$0xff]
        %v1599 = vld [vmem:[%s1539 + $0x70] sm:$0xff]
        %v1600 = vld [vmem:[%s1539 + $0x88] sm:$0xff]
        %v1601 = vld [vmem:[%s1539 + $0x90] sm:$0xff]
        %v1602 = vld [vmem:[%s1539 + $0xa8] sm:$0xff]
        %v1603 = vld [vmem:[%s1539 + $0xb0] sm:$0xff]
        %v1604 = vld [vmem:[%s1539 + $0xc8] sm:$0xff]
        %v1605 = vld [vmem:[%s1539 + $0xd0] sm:$0xff]
        %v1606 = vld [vmem:[%s1539 + $0xe8] sm:$0xff]
        %v1607 = vld [vmem:[%s1539 + $0xf0] sm:$0xff]
        %v1608 = vlaneseq
        %v1609 = vshrl.u32 %v1608, 7
        %v1610 = vsub.s32 1, %v1609
        %v1611 = vrot.slane %v930, %v1610
        %v1612 = vmul.f32 %v1592, %v1611
        %v1613 = vmul.f32 %v1593, %v1611
        %v1614 = vmul.f32 %v1594, %v1611
        %v1615 = vmul.f32 %v1595, %v1611
        %v1616 = vmul.f32 %v1596, %v1611
        %v1617 = vmul.f32 %v1597, %v1611
        %v1618 = vmul.f32 %v1598, %v1611
        %v1619 = vmul.f32 %v1599, %v1611
        %v1620 = vmul.f32 %v1600, %v1611
        %v1621 = vmul.f32 %v1601, %v1611
        %v1622 = vmul.f32 %v1602, %v1611
        %v1623 = vmul.f32 %v1603, %v1611
        %v1624 = vmul.f32 %v1604, %v1611
        %v1625 = vmul.f32 %v1605, %v1611
        %v1626 = vmul.f32 %v1606, %v1611
        %v1627 = vmul.f32 %v1607, %v1611
        %v1628 = vadd.f32 %v1576, %v1612
        %v1629 = vadd.f32 %v1577, %v1613
        %v1630 = vadd.f32 %v1578, %v1614
        %v1631 = vadd.f32 %v1579, %v1615
        %v1632 = vadd.f32 %v1580, %v1616
        %v1633 = vadd.f32 %v1581, %v1617
        %v1634 = vadd.f32 %v1582, %v1618
        %v1635 = vadd.f32 %v1583, %v1619
        %v1636 = vadd.f32 %v1584, %v1620
        %v1637 = vadd.f32 %v1585, %v1621
        %v1638 = vadd.f32 %v1586, %v1622
        %v1639 = vadd.f32 %v1587, %v1623
        %v1640 = vadd.f32 %v1588, %v1624
        %v1641 = vadd.f32 %v1589, %v1625
        %v1642 = vadd.f32 %v1590, %v1626
        %v1643 = vadd.f32 %v1591, %v1627
        %v1644 = vld [vmem:[%s1539 + $0xa] sm:$0xff]
        %v1645 = vld [vmem:[%s1539 + $0x12] sm:$0xff]
        %v1646 = vld [vmem:[%s1539 + $0x2a] sm:$0xff]
        %v1647 = vld [vmem:[%s1539 + $0x32] sm:$0xff]
        %v1648 = vld [vmem:[%s1539 + $0x4a] sm:$0xff]
        %v1649 = vld [vmem:[%s1539 + $0x52] sm:$0xff]
        %v1650 = vld [vmem:[%s1539 + $0x6a] sm:$0xff]
        %v1651 = vld [vmem:[%s1539 + $0x72] sm:$0xff]
        %v1652 = vld [vmem:[%s1539 + $0x8a] sm:$0xff]
        %v1653 = vld [vmem:[%s1539 + $0x92] sm:$0xff]
        %v1654 = vld [vmem:[%s1539 + $0xaa] sm:$0xff]
        %v1655 = vld [vmem:[%s1539 + $0xb2] sm:$0xff]
        %v1656 = vld [vmem:[%s1539 + $0xca] sm:$0xff]
        %v1657 = vld [vmem:[%s1539 + $0xd2] sm:$0xff]
        %v1658 = vld [vmem:[%s1539 + $0xea] sm:$0xff]
        %v1659 = vld [vmem:[%s1539 + $0xf2] sm:$0xff]
        %v1660 = vlaneseq
        %v1661 = vshrl.u32 %v1660, 7
        %v1662 = vsub.s32 2, %v1661
        %v1663 = vrot.slane %v930, %v1662
        %v1664 = vmul.f32 %v1644, %v1663
        %v1665 = vmul.f32 %v1645, %v1663
        %v1666 = vmul.f32 %v1646, %v1663
        %v1667 = vmul.f32 %v1647, %v1663
        %v1668 = vmul.f32 %v1648, %v1663
        %v1669 = vmul.f32 %v1649, %v1663
        %v1670 = vmul.f32 %v1650, %v1663
        %v1671 = vmul.f32 %v1651, %v1663
        %v1672 = vmul.f32 %v1652, %v1663
        %v1673 = vmul.f32 %v1653, %v1663
        %v1674 = vmul.f32 %v1654, %v1663
        %v1675 = vmul.f32 %v1655, %v1663
        %v1676 = vmul.f32 %v1656, %v1663
        %v1677 = vmul.f32 %v1657, %v1663
        %v1678 = vmul.f32 %v1658, %v1663
        %v1679 = vmul.f32 %v1659, %v1663
        %v1680 = vadd.f32 %v1628, %v1664
        %v1681 = vadd.f32 %v1629, %v1665
        %v1682 = vadd.f32 %v1630, %v1666
        %v1683 = vadd.f32 %v1631, %v1667
        %v1684 = vadd.f32 %v1632, %v1668
        %v1685 = vadd.f32 %v1633, %v1669
        %v1686 = vadd.f32 %v1634, %v1670
        %v1687 = vadd.f32 %v1635, %v1671
        %v1688 = vadd.f32 %v1636, %v1672
        %v1689 = vadd.f32 %v1637, %v1673
        %v1690 = vadd.f32 %v1638, %v1674
        %v1691 = vadd.f32 %v1639, %v1675
        %v1692 = vadd.f32 %v1640, %v1676
        %v1693 = vadd.f32 %v1641, %v1677
        %v1694 = vadd.f32 %v1642, %v1678
        %v1695 = vadd.f32 %v1643, %v1679
        %v1696 = vpack.c.bf16 %v1681, %v1680
        %v1697 = vpack.c.bf16 %v1683, %v1682
        %v1698 = vpack.c.bf16 %v1685, %v1684
        %v1699 = vpack.c.bf16 %v1687, %v1686
        %v1700 = vpack.c.bf16 %v1689, %v1688
        %v1701 = vpack.c.bf16 %v1691, %v1690
        %v1702 = vpack.c.bf16 %v1693, %v1692
        %v1703 = vpack.c.bf16 %v1695, %v1694
        %v1704 = vld [vmem:[#allocation14] sm:$0xf]
        %v1705 = vld [vmem:[#allocation14 + $0x4] sm:$0xf]
        %v1706 = vld [vmem:[#allocation14 + $0x8] sm:$0xf]
        %v1707 = vld [vmem:[#allocation14 + $0xc] sm:$0xf]
        %v1708 = vld [vmem:[#allocation14 + $0x10] sm:$0xf]
        %v1709 = vld [vmem:[#allocation14 + $0x14] sm:$0xf]
        %v1710 = vld [vmem:[#allocation14 + $0x18] sm:$0xf]
        %v1711 = vld [vmem:[#allocation14 + $0x1c] sm:$0xf]
        %v1712 = vld [vmem:[#allocation14 + $0x20] sm:$0xf]
        %v1713 = vld [vmem:[#allocation14 + $0x24] sm:$0xf]
        %v1714 = vld [vmem:[#allocation14 + $0x28] sm:$0xf]
        %v1715 = vld [vmem:[#allocation14 + $0x2c] sm:$0xf]
        %v1716 = vld [vmem:[#allocation14 + $0x30] sm:$0xf]
        %v1717 = vld [vmem:[#allocation14 + $0x34] sm:$0xf]
        %v1718 = vld [vmem:[#allocation14 + $0x38] sm:$0xf]
        %v1719 = vld [vmem:[#allocation14 + $0x3c] sm:$0xf]
        %v1720 = vld [vmem:[%s6] sm:$0x1]
        %v1722 = vlaneseq
        %v1723 = vshrl.u32 %v1722, 7
        %v1724 = vsub.s32 0, %v1723
        %v1725 = vrot.slane %v1720, %v1724
        %v1743 = vunpack.c.l.b16 %v1704
        %v1744 = vunpack.c.l.b16 %v1705
        %v1745 = vunpack.c.l.b16 %v1706
        %v1746 = vunpack.c.l.b16 %v1707
        %v1747 = vunpack.c.l.b16 %v1708
        %v1748 = vunpack.c.l.b16 %v1709
        %v1749 = vunpack.c.l.b16 %v1710
        %v1750 = vunpack.c.l.b16 %v1711
        %v1751 = vunpack.c.l.b16 %v1712
        %v1752 = vunpack.c.l.b16 %v1713
        %v1753 = vunpack.c.l.b16 %v1714
        %v1754 = vunpack.c.l.b16 %v1715
        %v1755 = vunpack.c.l.b16 %v1716
        %v1756 = vunpack.c.l.b16 %v1717
        %v1757 = vunpack.c.l.b16 %v1718
        %v1758 = vunpack.c.l.b16 %v1719
        %v1759 = vpack.c.b16 %v1744, %v1743
        %v1760 = vpack.c.b16 %v1746, %v1745
        %v1761 = vpack.c.b16 %v1748, %v1747
        %v1762 = vpack.c.b16 %v1750, %v1749
        %v1763 = vpack.c.b16 %v1752, %v1751
        %v1764 = vpack.c.b16 %v1754, %v1753
        %v1765 = vpack.c.b16 %v1756, %v1755
        %v1766 = vpack.c.b16 %v1758, %v1757
        %1775 = vmatprep.subr.bf16.mxu0 0
        %1776 = vmatpush1.bf16.msra.mxu0 %v1759
        %1777 = vmatprep.subr.bf16.mxu0 0
        %1778 = vmatpush1.bf16.msra.mxu0 %v1760
        %1779 = vmatprep.subr.bf16.mxu0 0
        %1780 = vmatpush1.bf16.msra.mxu0 %v1761
        %1781 = vmatprep.subr.bf16.mxu0 0
        %1782 = vmatpush1.bf16.msra.mxu0 %v1762
        %1783 = vmatprep.subr.bf16.mxu0 0
        %1784 = vmatpush1.bf16.msra.mxu0 %v1763
        %1785 = vmatprep.subr.bf16.mxu0 0
        %1786 = vmatpush1.bf16.msra.mxu0 %v1764
        %1787 = vmatprep.subr.bf16.mxu0 0
        %1788 = vmatpush1.bf16.msra.mxu0 %v1765
        %1789 = vmatprep.subr.bf16.mxu0 0
        %1790 = vmatpush1.bf16.msra.mxu0 %v1766
        %1791 = vmatprep.subr.bf16.mxu0 0
        %1792 = vmatpush1.bf16.msra.mxu0 0
        %1793 = vmatprep.subr.bf16.mxu0 0
        %1794 = vmatpush1.bf16.msra.mxu0 0
        %1795 = vmatprep.subr.bf16.mxu0 0
        %1796 = vmatpush1.bf16.msra.mxu0 0
        %1797 = vmatprep.subr.bf16.mxu0 0
        %1798 = vmatpush1.bf16.msra.mxu0 0
        %1799 = vmatprep.subr.bf16.mxu0 0
        %1800 = vmatpush1.bf16.msra.mxu0 0
        %1801 = vmatprep.subr.bf16.mxu0 0
        %1802 = vmatpush1.bf16.msra.mxu0 0
        %1803 = vmatprep.subr.bf16.mxu0 0
        %1804 = vmatpush1.bf16.msra.mxu0 0
        %1805 = vmatprep.subr.bf16.mxu0 0
        %1806 = vmatpush1.bf16.msra.mxu0 0
        %1807 = vmatprep.mubr.bf16.mxu0 0
        %1808 = vmatmul.mubr.bf16.gmra.mrb[0].mxu0 %v1696
        %v1809 = vpop.f32.mrb[0].mxu0
        %v1810 = vadd.f32 %v1725, %v1809
        %v1811 = vpop.f32.mrb[0].mxu0
        %v1812 = vpop.f32.mrb[0].mxu0
        %v1813 = vadd.f32 %v1725, %v1812
        %v1814 = vpop.f32.mrb[0].mxu0
        %1815 = vmatprep.mubr.bf16.mxu0 0
        %1816 = vmatmul.mubr.bf16.gmra.mrb[0].mxu0 %v1697
        %v1817 = vpop.f32.mrb[0].mxu0
        %v1818 = vadd.f32 %v1725, %v1817
        %v1819 = vpop.f32.mrb[0].mxu0
        %v1820 = vpop.f32.mrb[0].mxu0
        %v1821 = vadd.f32 %v1725, %v1820
        %v1822 = vpop.f32.mrb[0].mxu0
        %1823 = vmatprep.mubr.bf16.mxu0 0
        %1824 = vmatmul.mubr.bf16.gmra.mrb[0].mxu0 %v1698
        %v1825 = vpop.f32.mrb[0].mxu0
        %v1826 = vadd.f32 %v1725, %v1825
        %v1827 = vpop.f32.mrb[0].mxu0
        %v1828 = vpop.f32.mrb[0].mxu0
        %v1829 = vadd.f32 %v1725, %v1828
        %v1830 = vpop.f32.mrb[0].mxu0
        %1831 = vmatprep.mubr.bf16.mxu0 0
        %1832 = vmatmul.mubr.bf16.gmra.mrb[0].mxu0 %v1699
        %v1833 = vpop.f32.mrb[0].mxu0
        %v1834 = vadd.f32 %v1725, %v1833
        %v1835 = vpop.f32.mrb[0].mxu0
        %v1836 = vpop.f32.mrb[0].mxu0
        %v1837 = vadd.f32 %v1725, %v1836
        %v1838 = vpop.f32.mrb[0].mxu0
        %1839 = vmatprep.mubr.bf16.mxu0 0
        %1840 = vmatmul.mubr.bf16.gmra.mrb[0].mxu0 %v1700
        %v1841 = vpop.f32.mrb[0].mxu0
        %v1842 = vadd.f32 %v1725, %v1841
        %v1843 = vpop.f32.mrb[0].mxu0
        %v1844 = vpop.f32.mrb[0].mxu0
        %v1845 = vadd.f32 %v1725, %v1844
        %v1846 = vpop.f32.mrb[0].mxu0
        %1847 = vmatprep.mubr.bf16.mxu0 0
        %1848 = vmatmul.mubr.bf16.gmra.mrb[0].mxu0 %v1701
        %v1849 = vpop.f32.mrb[0].mxu0
        %v1850 = vadd.f32 %v1725, %v1849
        %v1851 = vpop.f32.mrb[0].mxu0
        %v1852 = vpop.f32.mrb[0].mxu0
        %v1853 = vadd.f32 %v1725, %v1852
        %v1854 = vpop.f32.mrb[0].mxu0
        %1855 = vmatprep.mubr.bf16.mxu0 0
        %1856 = vmatmul.mubr.bf16.gmra.mrb[0].mxu0 %v1702
        %v1857 = vpop.f32.mrb[0].mxu0
        %v1858 = vadd.f32 %v1725, %v1857
        %v1859 = vpop.f32.mrb[0].mxu0
        %v1860 = vpop.f32.mrb[0].mxu0
        %v1861 = vadd.f32 %v1725, %v1860
        %v1862 = vpop.f32.mrb[0].mxu0
        %1863 = vmatprep.mubr.bf16.mxu0 0
        %1864 = vmatmul.mubr.bf16.gmra.mrb[0].mxu0 %v1703
        %v1865 = vpop.f32.mrb[0].mxu0
        %v1866 = vadd.f32 %v1725, %v1865
        %v1867 = vpop.f32.mrb[0].mxu0
        %v1868 = vpop.f32.mrb[0].mxu0
        %v1869 = vadd.f32 %v1725, %v1868
        %v1870 = vpop.f32.mrb[0].mxu0
        %1871 = vdwg.mxu0
        %v1872 = vadd.f32 %v1227, %v1810
        %v1873 = vadd.f32 %v1228, %v1813
        %v1874 = vadd.f32 %v1229, %v1818
        %v1875 = vadd.f32 %v1230, %v1821
        %v1876 = vadd.f32 %v1231, %v1826
        %v1877 = vadd.f32 %v1232, %v1829
        %v1878 = vadd.f32 %v1233, %v1834
        %v1879 = vadd.f32 %v1234, %v1837
        %v1880 = vadd.f32 %v1235, %v1842
        %v1881 = vadd.f32 %v1236, %v1845
        %v1882 = vadd.f32 %v1237, %v1850
        %v1883 = vadd.f32 %v1238, %v1853
        %v1884 = vadd.f32 %v1239, %v1858
        %v1885 = vadd.f32 %v1240, %v1861
        %v1886 = vadd.f32 %v1241, %v1866
        %v1887 = vadd.f32 %v1242, %v1869
        %1888 = vst [vmem:[%s402 + $0x8] sm:$0xff] %v1872
        %1889 = vst [vmem:[%s402 + $0x18] sm:$0xff] %v1873
        %1890 = vst [vmem:[%s402 + $0x28] sm:$0xff] %v1874
        %1891 = vst [vmem:[%s402 + $0x38] sm:$0xff] %v1875
        %1892 = vst [vmem:[%s402 + $0x48] sm:$0xff] %v1876
        %1893 = vst [vmem:[%s402 + $0x58] sm:$0xff] %v1877
        %1894 = vst [vmem:[%s402 + $0x68] sm:$0xff] %v1878
        %1895 = vst [vmem:[%s402 + $0x78] sm:$0xff] %v1879
        %1896 = vst [vmem:[%s402 + $0x88] sm:$0xff] %v1880
        %1897 = vst [vmem:[%s402 + $0x98] sm:$0xff] %v1881
        %1898 = vst [vmem:[%s402 + $0xa8] sm:$0xff] %v1882
        %1899 = vst [vmem:[%s402 + $0xb8] sm:$0xff] %v1883
        %1900 = vst [vmem:[%s402 + $0xc8] sm:$0xff] %v1884
        %1901 = vst [vmem:[%s402 + $0xd8] sm:$0xff] %v1885
        %1902 = vst [vmem:[%s402 + $0xe8] sm:$0xff] %v1886
        %1903 = vst [vmem:[%s402 + $0xf8] sm:$0xff] %v1887
        %s1904 = scalar_lea.vmem [#allocation2], 256
        %v1905 = vld [vmem:[%s1904 + $0x7] sm:$0xff]
        %v1906 = vld [vmem:[%s1904 + $0xf] sm:$0xff]
        %v1907 = vld [vmem:[%s1904 + $0x27] sm:$0xff]
        %v1908 = vld [vmem:[%s1904 + $0x2f] sm:$0xff]
        %v1909 = vld [vmem:[%s1904 + $0x47] sm:$0xff]
        %v1910 = vld [vmem:[%s1904 + $0x4f] sm:$0xff]
        %v1911 = vld [vmem:[%s1904 + $0x67] sm:$0xff]
        %v1912 = vld [vmem:[%s1904 + $0x6f] sm:$0xff]
        %v1913 = vld [vmem:[%s1904 + $0x87] sm:$0xff]
        %v1914 = vld [vmem:[%s1904 + $0x8f] sm:$0xff]
        %v1915 = vld [vmem:[%s1904 + $0xa7] sm:$0xff]
        %v1916 = vld [vmem:[%s1904 + $0xaf] sm:$0xff]
        %v1917 = vld [vmem:[%s1904 + $0xc7] sm:$0xff]
        %v1918 = vld [vmem:[%s1904 + $0xcf] sm:$0xff]
        %v1919 = vld [vmem:[%s1904 + $0xe7] sm:$0xff]
        %v1920 = vld [vmem:[%s1904 + $0xef] sm:$0xff]
        %v1921 = vld [vmem:[%s1904 + $0x107] sm:$0xff]
        %v1922 = vld [vmem:[%s1904 + $0x10f] sm:$0xff]
        %v1923 = vld [vmem:[%s1904 + $0x127] sm:$0xff]
        %v1924 = vld [vmem:[%s1904 + $0x12f] sm:$0xff]
        %v1925 = vld [vmem:[%s1904 + $0x8] sm:$0xff]
        %v1926 = vld [vmem:[%s1904 + $0x10] sm:$0xff]
        %v1927 = vld [vmem:[%s1904 + $0x28] sm:$0xff]
        %v1928 = vld [vmem:[%s1904 + $0x30] sm:$0xff]
        %v1929 = vld [vmem:[%s1904 + $0x48] sm:$0xff]
        %v1930 = vld [vmem:[%s1904 + $0x50] sm:$0xff]
        %v1931 = vld [vmem:[%s1904 + $0x68] sm:$0xff]
        %v1932 = vld [vmem:[%s1904 + $0x70] sm:$0xff]
        %v1933 = vld [vmem:[%s1904 + $0x88] sm:$0xff]
        %v1934 = vld [vmem:[%s1904 + $0x90] sm:$0xff]
        %v1935 = vld [vmem:[%s1904 + $0xa8] sm:$0xff]
        %v1936 = vld [vmem:[%s1904 + $0xb0] sm:$0xff]
        %v1937 = vld [vmem:[%s1904 + $0xc8] sm:$0xff]
        %v1938 = vld [vmem:[%s1904 + $0xd0] sm:$0xff]
        %v1939 = vld [vmem:[%s1904 + $0xe8] sm:$0xff]
        %v1940 = vld [vmem:[%s1904 + $0xf0] sm:$0xff]
        %v1941 = vld [vmem:[%s1904 + $0x108] sm:$0xff]
        %v1942 = vld [vmem:[%s1904 + $0x110] sm:$0xff]
        %v1943 = vld [vmem:[%s1904 + $0x128] sm:$0xff]
        %v1944 = vld [vmem:[%s1904 + $0x130] sm:$0xff]
        %v1945 = vmax.f32 %v1905, %v1925
        %v1946 = vmax.f32 %v1906, %v1926
        %v1947 = vmax.f32 %v1907, %v1927
        %v1948 = vmax.f32 %v1908, %v1928
        %v1949 = vmax.f32 %v1909, %v1929
        %v1950 = vmax.f32 %v1910, %v1930
        %v1951 = vmax.f32 %v1911, %v1931
        %v1952 = vmax.f32 %v1912, %v1932
        %v1953 = vmax.f32 %v1913, %v1933
        %v1954 = vmax.f32 %v1914, %v1934
        %v1955 = vmax.f32 %v1915, %v1935
        %v1956 = vmax.f32 %v1916, %v1936
        %v1957 = vmax.f32 %v1917, %v1937
        %v1958 = vmax.f32 %v1918, %v1938
        %v1959 = vmax.f32 %v1919, %v1939
        %v1960 = vmax.f32 %v1920, %v1940
        %v1961 = vmax.f32 %v1921, %v1941
        %v1962 = vmax.f32 %v1922, %v1942
        %v1963 = vmax.f32 %v1923, %v1943
        %v1964 = vmax.f32 %v1924, %v1944
        %v1965 = vld [vmem:[%s1904 + $0x9] sm:$0xff]
        %v1966 = vld [vmem:[%s1904 + $0x11] sm:$0xff]
        %v1967 = vld [vmem:[%s1904 + $0x29] sm:$0xff]
        %v1968 = vld [vmem:[%s1904 + $0x31] sm:$0xff]
        %v1969 = vld [vmem:[%s1904 + $0x49] sm:$0xff]
        %v1970 = vld [vmem:[%s1904 + $0x51] sm:$0xff]
        %v1971 = vld [vmem:[%s1904 + $0x69] sm:$0xff]
        %v1972 = vld [vmem:[%s1904 + $0x71] sm:$0xff]
        %v1973 = vld [vmem:[%s1904 + $0x89] sm:$0xff]
        %v1974 = vld [vmem:[%s1904 + $0x91] sm:$0xff]
        %v1975 = vld [vmem:[%s1904 + $0xa9] sm:$0xff]
        %v1976 = vld [vmem:[%s1904 + $0xb1] sm:$0xff]
        %v1977 = vld [vmem:[%s1904 + $0xc9] sm:$0xff]
        %v1978 = vld [vmem:[%s1904 + $0xd1] sm:$0xff]
        %v1979 = vld [vmem:[%s1904 + $0xe9] sm:$0xff]
        %v1980 = vld [vmem:[%s1904 + $0xf1] sm:$0xff]
        %v1981 = vld [vmem:[%s1904 + $0x109] sm:$0xff]
        %v1982 = vld [vmem:[%s1904 + $0x111] sm:$0xff]
        %v1983 = vld [vmem:[%s1904 + $0x129] sm:$0xff]
        %v1984 = vld [vmem:[%s1904 + $0x131] sm:$0xff]
        %v1985 = vmax.f32 %v1945, %v1965
        %v1986 = vmax.f32 %v1946, %v1966
        %v1987 = vmax.f32 %v1947, %v1967
        %v1988 = vmax.f32 %v1948, %v1968
        %v1989 = vmax.f32 %v1949, %v1969
        %v1990 = vmax.f32 %v1950, %v1970
        %v1991 = vmax.f32 %v1951, %v1971
        %v1992 = vmax.f32 %v1952, %v1972
        %v1993 = vmax.f32 %v1953, %v1973
        %v1994 = vmax.f32 %v1954, %v1974
        %v1995 = vmax.f32 %v1955, %v1975
        %v1996 = vmax.f32 %v1956, %v1976
        %v1997 = vmax.f32 %v1957, %v1977
        %v1998 = vmax.f32 %v1958, %v1978
        %v1999 = vmax.f32 %v1959, %v1979
        %v2000 = vmax.f32 %v1960, %v1980
        %v2001 = vmax.f32 %v1961, %v1981
        %v2002 = vmax.f32 %v1962, %v1982
        %v2003 = vmax.f32 %v1963, %v1983
        %v2004 = vmax.f32 %v1964, %v1984
        %v2005 = vmax.f32 %v1985, %v1987
        %v2006 = vmax.f32 %v1986, %v1988
        %v2007 = vmax.f32 %v1987, %v1989
        %v2008 = vmax.f32 %v1988, %v1990
        %v2009 = vmax.f32 %v1989, %v1991
        %v2010 = vmax.f32 %v1990, %v1992
        %v2011 = vmax.f32 %v1991, %v1993
        %v2012 = vmax.f32 %v1992, %v1994
        %v2013 = vmax.f32 %v1993, %v1995
        %v2014 = vmax.f32 %v1994, %v1996
        %v2015 = vmax.f32 %v1995, %v1997
        %v2016 = vmax.f32 %v1996, %v1998
        %v2017 = vmax.f32 %v1997, %v1999
        %v2018 = vmax.f32 %v1998, %v2000
        %v2019 = vmax.f32 %v1999, %v2001
        %v2020 = vmax.f32 %v2000, %v2002
        %v2021 = vmax.f32 %v2005, %v1989
        %v2022 = vmax.f32 %v2006, %v1990
        %v2023 = vmax.f32 %v2007, %v1991
        %v2024 = vmax.f32 %v2008, %v1992
        %v2025 = vmax.f32 %v2009, %v1993
        %v2026 = vmax.f32 %v2010, %v1994
        %v2027 = vmax.f32 %v2011, %v1995
        %v2028 = vmax.f32 %v2012, %v1996
        %v2029 = vmax.f32 %v2013, %v1997
        %v2030 = vmax.f32 %v2014, %v1998
        %v2031 = vmax.f32 %v2015, %v1999
        %v2032 = vmax.f32 %v2016, %v2000
        %v2033 = vmax.f32 %v2017, %v2001
        %v2034 = vmax.f32 %v2018, %v2002
        %v2035 = vmax.f32 %v2019, %v2003
        %v2036 = vmax.f32 %v2020, %v2004
        %s2037 = scalar_lea.vmem [#allocation4], 256
        %v2038 = vld [vmem:[%s2037 + $0x7] sm:$0xff]
        %v2039 = vld [vmem:[%s2037 + $0xf] sm:$0xff]
        %v2040 = vld [vmem:[%s2037 + $0x27] sm:$0xff]
        %v2041 = vld [vmem:[%s2037 + $0x2f] sm:$0xff]
        %v2042 = vld [vmem:[%s2037 + $0x47] sm:$0xff]
        %v2043 = vld [vmem:[%s2037 + $0x4f] sm:$0xff]
        %v2044 = vld [vmem:[%s2037 + $0x67] sm:$0xff]
        %v2045 = vld [vmem:[%s2037 + $0x6f] sm:$0xff]
        %v2046 = vld [vmem:[%s2037 + $0x87] sm:$0xff]
        %v2047 = vld [vmem:[%s2037 + $0x8f] sm:$0xff]
        %v2048 = vld [vmem:[%s2037 + $0xa7] sm:$0xff]
        %v2049 = vld [vmem:[%s2037 + $0xaf] sm:$0xff]
        %v2050 = vld [vmem:[%s2037 + $0xc7] sm:$0xff]
        %v2051 = vld [vmem:[%s2037 + $0xcf] sm:$0xff]
        %v2052 = vld [vmem:[%s2037 + $0xe7] sm:$0xff]
        %v2053 = vld [vmem:[%s2037 + $0xef] sm:$0xff]
        %v2054 = vld [vmem:[%s2037 + $0x107] sm:$0xff]
        %v2055 = vld [vmem:[%s2037 + $0x10f] sm:$0xff]
        %v2056 = vld [vmem:[%s2037 + $0x127] sm:$0xff]
        %v2057 = vld [vmem:[%s2037 + $0x12f] sm:$0xff]
        %v2058 = vld [vmem:[%s2037 + $0x8] sm:$0xff]
        %v2059 = vld [vmem:[%s2037 + $0x10] sm:$0xff]
        %v2060 = vld [vmem:[%s2037 + $0x28] sm:$0xff]
        %v2061 = vld [vmem:[%s2037 + $0x30] sm:$0xff]
        %v2062 = vld [vmem:[%s2037 + $0x48] sm:$0xff]
        %v2063 = vld [vmem:[%s2037 + $0x50] sm:$0xff]
        %v2064 = vld [vmem:[%s2037 + $0x68] sm:$0xff]
        %v2065 = vld [vmem:[%s2037 + $0x70] sm:$0xff]
        %v2066 = vld [vmem:[%s2037 + $0x88] sm:$0xff]
        %v2067 = vld [vmem:[%s2037 + $0x90] sm:$0xff]
        %v2068 = vld [vmem:[%s2037 + $0xa8] sm:$0xff]
        %v2069 = vld [vmem:[%s2037 + $0xb0] sm:$0xff]
        %v2070 = vld [vmem:[%s2037 + $0xc8] sm:$0xff]
        %v2071 = vld [vmem:[%s2037 + $0xd0] sm:$0xff]
        %v2072 = vld [vmem:[%s2037 + $0xe8] sm:$0xff]
        %v2073 = vld [vmem:[%s2037 + $0xf0] sm:$0xff]
        %v2074 = vld [vmem:[%s2037 + $0x108] sm:$0xff]
        %v2075 = vld [vmem:[%s2037 + $0x110] sm:$0xff]
        %v2076 = vld [vmem:[%s2037 + $0x128] sm:$0xff]
        %v2077 = vld [vmem:[%s2037 + $0x130] sm:$0xff]
        %v2078 = vadd.f32 %v2038, %v2058
        %v2079 = vadd.f32 %v2039, %v2059
        %v2080 = vadd.f32 %v2040, %v2060
        %v2081 = vadd.f32 %v2041, %v2061
        %v2082 = vadd.f32 %v2042, %v2062
        %v2083 = vadd.f32 %v2043, %v2063
        %v2084 = vadd.f32 %v2044, %v2064
        %v2085 = vadd.f32 %v2045, %v2065
        %v2086 = vadd.f32 %v2046, %v2066
        %v2087 = vadd.f32 %v2047, %v2067
        %v2088 = vadd.f32 %v2048, %v2068
        %v2089 = vadd.f32 %v2049, %v2069
        %v2090 = vadd.f32 %v2050, %v2070
        %v2091 = vadd.f32 %v2051, %v2071
        %v2092 = vadd.f32 %v2052, %v2072
        %v2093 = vadd.f32 %v2053, %v2073
        %v2094 = vadd.f32 %v2054, %v2074
        %v2095 = vadd.f32 %v2055, %v2075
        %v2096 = vadd.f32 %v2056, %v2076
        %v2097 = vadd.f32 %v2057, %v2077
        %v2098 = vld [vmem:[%s2037 + $0x9] sm:$0xff]
        %v2099 = vld [vmem:[%s2037 + $0x11] sm:$0xff]
        %v2100 = vld [vmem:[%s2037 + $0x29] sm:$0xff]
        %v2101 = vld [vmem:[%s2037 + $0x31] sm:$0xff]
        %v2102 = vld [vmem:[%s2037 + $0x49] sm:$0xff]
        %v2103 = vld [vmem:[%s2037 + $0x51] sm:$0xff]
        %v2104 = vld [vmem:[%s2037 + $0x69] sm:$0xff]
        %v2105 = vld [vmem:[%s2037 + $0x71] sm:$0xff]
        %v2106 = vld [vmem:[%s2037 + $0x89] sm:$0xff]
        %v2107 = vld [vmem:[%s2037 + $0x91] sm:$0xff]
        %v2108 = vld [vmem:[%s2037 + $0xa9] sm:$0xff]
        %v2109 = vld [vmem:[%s2037 + $0xb1] sm:$0xff]
        %v2110 = vld [vmem:[%s2037 + $0xc9] sm:$0xff]
        %v2111 = vld [vmem:[%s2037 + $0xd1] sm:$0xff]
        %v2112 = vld [vmem:[%s2037 + $0xe9] sm:$0xff]
        %v2113 = vld [vmem:[%s2037 + $0xf1] sm:$0xff]
        %v2114 = vld [vmem:[%s2037 + $0x109] sm:$0xff]
        %v2115 = vld [vmem:[%s2037 + $0x111] sm:$0xff]
        %v2116 = vld [vmem:[%s2037 + $0x129] sm:$0xff]
        %v2117 = vld [vmem:[%s2037 + $0x131] sm:$0xff]
        %v2118 = vadd.f32 %v2078, %v2098
        %v2119 = vadd.f32 %v2079, %v2099
        %v2120 = vadd.f32 %v2080, %v2100
        %v2121 = vadd.f32 %v2081, %v2101
        %v2122 = vadd.f32 %v2082, %v2102
        %v2123 = vadd.f32 %v2083, %v2103
        %v2124 = vadd.f32 %v2084, %v2104
        %v2125 = vadd.f32 %v2085, %v2105
        %v2126 = vadd.f32 %v2086, %v2106
        %v2127 = vadd.f32 %v2087, %v2107
        %v2128 = vadd.f32 %v2088, %v2108
        %v2129 = vadd.f32 %v2089, %v2109
        %v2130 = vadd.f32 %v2090, %v2110
        %v2131 = vadd.f32 %v2091, %v2111
        %v2132 = vadd.f32 %v2092, %v2112
        %v2133 = vadd.f32 %v2093, %v2113
        %v2134 = vadd.f32 %v2094, %v2114
        %v2135 = vadd.f32 %v2095, %v2115
        %v2136 = vadd.f32 %v2096, %v2116
        %v2137 = vadd.f32 %v2097, %v2117
        %v2138 = vadd.f32 %v2118, %v2120
        %v2139 = vadd.f32 %v2119, %v2121
        %v2140 = vadd.f32 %v2120, %v2122
        %v2141 = vadd.f32 %v2121, %v2123
        %v2142 = vadd.f32 %v2122, %v2124
        %v2143 = vadd.f32 %v2123, %v2125
        %v2144 = vadd.f32 %v2124, %v2126
        %v2145 = vadd.f32 %v2125, %v2127
        %v2146 = vadd.f32 %v2126, %v2128
        %v2147 = vadd.f32 %v2127, %v2129
        %v2148 = vadd.f32 %v2128, %v2130
        %v2149 = vadd.f32 %v2129, %v2131
        %v2150 = vadd.f32 %v2130, %v2132
        %v2151 = vadd.f32 %v2131, %v2133
        %v2152 = vadd.f32 %v2132, %v2134
        %v2153 = vadd.f32 %v2133, %v2135
        %v2154 = vadd.f32 %v2138, %v2122
        %v2155 = vadd.f32 %v2139, %v2123
        %v2156 = vadd.f32 %v2140, %v2124
        %v2157 = vadd.f32 %v2141, %v2125
        %v2158 = vadd.f32 %v2142, %v2126
        %v2159 = vadd.f32 %v2143, %v2127
        %v2160 = vadd.f32 %v2144, %v2128
        %v2161 = vadd.f32 %v2145, %v2129
        %v2162 = vadd.f32 %v2146, %v2130
        %v2163 = vadd.f32 %v2147, %v2131
        %v2164 = vadd.f32 %v2148, %v2132
        %v2165 = vadd.f32 %v2149, %v2133
        %v2166 = vadd.f32 %v2150, %v2134
        %v2167 = vadd.f32 %v2151, %v2135
        %v2168 = vadd.f32 %v2152, %v2136
        %v2169 = vadd.f32 %v2153, %v2137
        %s2170 = scalar_lea.vmem [#allocation12], 128
        %v2171 = vld [vmem:[%s2170] sm:$0xff]
        %v2172 = vld [vmem:[%s2170 + $0x8] sm:$0xff]
        %v2173 = vld [vmem:[%s2170 + $0x10] sm:$0xff]
        %v2174 = vld [vmem:[%s2170 + $0x18] sm:$0xff]
        %v2175 = vld [vmem:[%s2170 + $0x20] sm:$0xff]
        %v2176 = vld [vmem:[%s2170 + $0x28] sm:$0xff]
        %v2177 = vld [vmem:[%s2170 + $0x30] sm:$0xff]
        %v2178 = vld [vmem:[%s2170 + $0x38] sm:$0xff]
        %v2179 = vld [vmem:[%s2170 + $0x40] sm:$0xff]
        %v2180 = vld [vmem:[%s2170 + $0x48] sm:$0xff]
        %v2181 = vld [vmem:[%s2170 + $0x50] sm:$0xff]
        %v2182 = vld [vmem:[%s2170 + $0x58] sm:$0xff]
        %v2183 = vld [vmem:[%s2170 + $0x60] sm:$0xff]
        %v2184 = vld [vmem:[%s2170 + $0x68] sm:$0xff]
        %v2185 = vld [vmem:[%s2170 + $0x70] sm:$0xff]
        %v2186 = vld [vmem:[%s2170 + $0x78] sm:$0xff]
        %v2187 = vmul.f32 %v2154, %v2171
        %v2188 = vmul.f32 %v2155, %v2172
        %v2189 = vmul.f32 %v2156, %v2173
        %v2190 = vmul.f32 %v2157, %v2174
        %v2191 = vmul.f32 %v2158, %v2175
        %v2192 = vmul.f32 %v2159, %v2176
        %v2193 = vmul.f32 %v2160, %v2177
        %v2194 = vmul.f32 %v2161, %v2178
        %v2195 = vmul.f32 %v2162, %v2179
        %v2196 = vmul.f32 %v2163, %v2180
        %v2197 = vmul.f32 %v2164, %v2181
        %v2198 = vmul.f32 %v2165, %v2182
        %v2199 = vmul.f32 %v2166, %v2183
        %v2200 = vmul.f32 %v2167, %v2184
        %v2201 = vmul.f32 %v2168, %v2185
        %v2202 = vmul.f32 %v2169, %v2186
        %v2203 = vadd.f32 %v2021, %v2187
        %v2204 = vadd.f32 %v2022, %v2188
        %v2205 = vadd.f32 %v2023, %v2189
        %v2206 = vadd.f32 %v2024, %v2190
        %v2207 = vadd.f32 %v2025, %v2191
        %v2208 = vadd.f32 %v2026, %v2192
        %v2209 = vadd.f32 %v2027, %v2193
        %v2210 = vadd.f32 %v2028, %v2194
        %v2211 = vadd.f32 %v2029, %v2195
        %v2212 = vadd.f32 %v2030, %v2196
        %v2213 = vadd.f32 %v2031, %v2197
        %v2214 = vadd.f32 %v2032, %v2198
        %v2215 = vadd.f32 %v2033, %v2199
        %v2216 = vadd.f32 %v2034, %v2200
        %v2217 = vadd.f32 %v2035, %v2201
        %v2218 = vadd.f32 %v2036, %v2202
        %s2219 = scalar_lea.vmem [#allocation3], 256
        %v2220 = vld [vmem:[%s2219 + $0x6] sm:$0xff]
        %v2221 = vld [vmem:[%s2219 + $0xe] sm:$0xff]
        %v2222 = vld [vmem:[%s2219 + $0x26] sm:$0xff]
        %v2223 = vld [vmem:[%s2219 + $0x2e] sm:$0xff]
        %v2224 = vld [vmem:[%s2219 + $0x46] sm:$0xff]
        %v2225 = vld [vmem:[%s2219 + $0x4e] sm:$0xff]
        %v2226 = vld [vmem:[%s2219 + $0x66] sm:$0xff]
        %v2227 = vld [vmem:[%s2219 + $0x6e] sm:$0xff]
        %v2228 = vld [vmem:[%s2219 + $0x86] sm:$0xff]
        %v2229 = vld [vmem:[%s2219 + $0x8e] sm:$0xff]
        %v2230 = vld [vmem:[%s2219 + $0xa6] sm:$0xff]
        %v2231 = vld [vmem:[%s2219 + $0xae] sm:$0xff]
        %v2232 = vld [vmem:[%s2219 + $0xc6] sm:$0xff]
        %v2233 = vld [vmem:[%s2219 + $0xce] sm:$0xff]
        %v2234 = vld [vmem:[%s2219 + $0xe6] sm:$0xff]
        %v2235 = vld [vmem:[%s2219 + $0xee] sm:$0xff]
        %v2236 = vmul.f32 %v2220, %v1262
        %v2237 = vmul.f32 %v2221, %v1262
        %v2238 = vmul.f32 %v2222, %v1262
        %v2239 = vmul.f32 %v2223, %v1262
        %v2240 = vmul.f32 %v2224, %v1262
        %v2241 = vmul.f32 %v2225, %v1262
        %v2242 = vmul.f32 %v2226, %v1262
        %v2243 = vmul.f32 %v2227, %v1262
        %v2244 = vmul.f32 %v2228, %v1262
        %v2245 = vmul.f32 %v2229, %v1262
        %v2246 = vmul.f32 %v2230, %v1262
        %v2247 = vmul.f32 %v2231, %v1262
        %v2248 = vmul.f32 %v2232, %v1262
        %v2249 = vmul.f32 %v2233, %v1262
        %v2250 = vmul.f32 %v2234, %v1262
        %v2251 = vmul.f32 %v2235, %v1262
        %v2252 = vld [vmem:[%s2219 + $0x8] sm:$0xff]
        %v2253 = vld [vmem:[%s2219 + $0x10] sm:$0xff]
        %v2254 = vld [vmem:[%s2219 + $0x28] sm:$0xff]
        %v2255 = vld [vmem:[%s2219 + $0x30] sm:$0xff]
        %v2256 = vld [vmem:[%s2219 + $0x48] sm:$0xff]
        %v2257 = vld [vmem:[%s2219 + $0x50] sm:$0xff]
        %v2258 = vld [vmem:[%s2219 + $0x68] sm:$0xff]
        %v2259 = vld [vmem:[%s2219 + $0x70] sm:$0xff]
        %v2260 = vld [vmem:[%s2219 + $0x88] sm:$0xff]
        %v2261 = vld [vmem:[%s2219 + $0x90] sm:$0xff]
        %v2262 = vld [vmem:[%s2219 + $0xa8] sm:$0xff]
        %v2263 = vld [vmem:[%s2219 + $0xb0] sm:$0xff]
        %v2264 = vld [vmem:[%s2219 + $0xc8] sm:$0xff]
        %v2265 = vld [vmem:[%s2219 + $0xd0] sm:$0xff]
        %v2266 = vld [vmem:[%s2219 + $0xe8] sm:$0xff]
        %v2267 = vld [vmem:[%s2219 + $0xf0] sm:$0xff]
        %v2268 = vmul.f32 %v2252, %v1298
        %v2269 = vmul.f32 %v2253, %v1298
        %v2270 = vmul.f32 %v2254, %v1298
        %v2271 = vmul.f32 %v2255, %v1298
        %v2272 = vmul.f32 %v2256, %v1298
        %v2273 = vmul.f32 %v2257, %v1298
        %v2274 = vmul.f32 %v2258, %v1298
        %v2275 = vmul.f32 %v2259, %v1298
        %v2276 = vmul.f32 %v2260, %v1298
        %v2277 = vmul.f32 %v2261, %v1298
        %v2278 = vmul.f32 %v2262, %v1298
        %v2279 = vmul.f32 %v2263, %v1298
        %v2280 = vmul.f32 %v2264, %v1298
        %v2281 = vmul.f32 %v2265, %v1298
        %v2282 = vmul.f32 %v2266, %v1298
        %v2283 = vmul.f32 %v2267, %v1298
        %v2284 = vadd.f32 %v2236, %v2268
        %v2285 = vadd.f32 %v2237, %v2269
        %v2286 = vadd.f32 %v2238, %v2270
        %v2287 = vadd.f32 %v2239, %v2271
        %v2288 = vadd.f32 %v2240, %v2272
        %v2289 = vadd.f32 %v2241, %v2273
        %v2290 = vadd.f32 %v2242, %v2274
        %v2291 = vadd.f32 %v2243, %v2275
        %v2292 = vadd.f32 %v2244, %v2276
        %v2293 = vadd.f32 %v2245, %v2277
        %v2294 = vadd.f32 %v2246, %v2278
        %v2295 = vadd.f32 %v2247, %v2279
        %v2296 = vadd.f32 %v2248, %v2280
        %v2297 = vadd.f32 %v2249, %v2281
        %v2298 = vadd.f32 %v2250, %v2282
        %v2299 = vadd.f32 %v2251, %v2283
        %v2300 = vld [vmem:[%s2219 + $0xa] sm:$0xff]
        %v2301 = vld [vmem:[%s2219 + $0x12] sm:$0xff]
        %v2302 = vld [vmem:[%s2219 + $0x2a] sm:$0xff]
        %v2303 = vld [vmem:[%s2219 + $0x32] sm:$0xff]
        %v2304 = vld [vmem:[%s2219 + $0x4a] sm:$0xff]
        %v2305 = vld [vmem:[%s2219 + $0x52] sm:$0xff]
        %v2306 = vld [vmem:[%s2219 + $0x6a] sm:$0xff]
        %v2307 = vld [vmem:[%s2219 + $0x72] sm:$0xff]
        %v2308 = vld [vmem:[%s2219 + $0x8a] sm:$0xff]
        %v2309 = vld [vmem:[%s2219 + $0x92] sm:$0xff]
        %v2310 = vld [vmem:[%s2219 + $0xaa] sm:$0xff]
        %v2311 = vld [vmem:[%s2219 + $0xb2] sm:$0xff]
        %v2312 = vld [vmem:[%s2219 + $0xca] sm:$0xff]
        %v2313 = vld [vmem:[%s2219 + $0xd2] sm:$0xff]
        %v2314 = vld [vmem:[%s2219 + $0xea] sm:$0xff]
        %v2315 = vld [vmem:[%s2219 + $0xf2] sm:$0xff]
        %v2316 = vmul.f32 %v2300, %v1350
        %v2317 = vmul.f32 %v2301, %v1350
        %v2318 = vmul.f32 %v2302, %v1350
        %v2319 = vmul.f32 %v2303, %v1350
        %v2320 = vmul.f32 %v2304, %v1350
        %v2321 = vmul.f32 %v2305, %v1350
        %v2322 = vmul.f32 %v2306, %v1350
        %v2323 = vmul.f32 %v2307, %v1350
        %v2324 = vmul.f32 %v2308, %v1350
        %v2325 = vmul.f32 %v2309, %v1350
        %v2326 = vmul.f32 %v2310, %v1350
        %v2327 = vmul.f32 %v2311, %v1350
        %v2328 = vmul.f32 %v2312, %v1350
        %v2329 = vmul.f32 %v2313, %v1350
        %v2330 = vmul.f32 %v2314, %v1350
        %v2331 = vmul.f32 %v2315, %v1350
        %v2332 = vadd.f32 %v2284, %v2316
        %v2333 = vadd.f32 %v2285, %v2317
        %v2334 = vadd.f32 %v2286, %v2318
        %v2335 = vadd.f32 %v2287, %v2319
        %v2336 = vadd.f32 %v2288, %v2320
        %v2337 = vadd.f32 %v2289, %v2321
        %v2338 = vadd.f32 %v2290, %v2322
        %v2339 = vadd.f32 %v2291, %v2323
        %v2340 = vadd.f32 %v2292, %v2324
        %v2341 = vadd.f32 %v2293, %v2325
        %v2342 = vadd.f32 %v2294, %v2326
        %v2343 = vadd.f32 %v2295, %v2327
        %v2344 = vadd.f32 %v2296, %v2328
        %v2345 = vadd.f32 %v2297, %v2329
        %v2346 = vadd.f32 %v2298, %v2330
        %v2347 = vadd.f32 %v2299, %v2331
        %s2348 = scalar_lea.vmem [#allocation3], 320
        %v2349 = vld [vmem:[%s2348 + $0x6] sm:$0xff]
        %v2350 = vld [vmem:[%s2348 + $0xe] sm:$0xff]
        %v2351 = vld [vmem:[%s2348 + $0x26] sm:$0xff]
        %v2352 = vld [vmem:[%s2348 + $0x2e] sm:$0xff]
        %v2353 = vld [vmem:[%s2348 + $0x46] sm:$0xff]
        %v2354 = vld [vmem:[%s2348 + $0x4e] sm:$0xff]
        %v2355 = vld [vmem:[%s2348 + $0x66] sm:$0xff]
        %v2356 = vld [vmem:[%s2348 + $0x6e] sm:$0xff]
        %v2357 = vld [vmem:[%s2348 + $0x86] sm:$0xff]
        %v2358 = vld [vmem:[%s2348 + $0x8e] sm:$0xff]
        %v2359 = vld [vmem:[%s2348 + $0xa6] sm:$0xff]
        %v2360 = vld [vmem:[%s2348 + $0xae] sm:$0xff]
        %v2361 = vld [vmem:[%s2348 + $0xc6] sm:$0xff]
        %v2362 = vld [vmem:[%s2348 + $0xce] sm:$0xff]
        %v2363 = vld [vmem:[%s2348 + $0xe6] sm:$0xff]
        %v2364 = vld [vmem:[%s2348 + $0xee] sm:$0xff]
        %v2365 = vmul.f32 %v2349, %v1402
        %v2366 = vmul.f32 %v2350, %v1402
        %v2367 = vmul.f32 %v2351, %v1402
        %v2368 = vmul.f32 %v2352, %v1402
        %v2369 = vmul.f32 %v2353, %v1402
        %v2370 = vmul.f32 %v2354, %v1402
        %v2371 = vmul.f32 %v2355, %v1402
        %v2372 = vmul.f32 %v2356, %v1402
        %v2373 = vmul.f32 %v2357, %v1402
        %v2374 = vmul.f32 %v2358, %v1402
        %v2375 = vmul.f32 %v2359, %v1402
        %v2376 = vmul.f32 %v2360, %v1402
        %v2377 = vmul.f32 %v2361, %v1402
        %v2378 = vmul.f32 %v2362, %v1402
        %v2379 = vmul.f32 %v2363, %v1402
        %v2380 = vmul.f32 %v2364, %v1402
        %v2381 = vadd.f32 %v2332, %v2365
        %v2382 = vadd.f32 %v2333, %v2366
        %v2383 = vadd.f32 %v2334, %v2367
        %v2384 = vadd.f32 %v2335, %v2368
        %v2385 = vadd.f32 %v2336, %v2369
        %v2386 = vadd.f32 %v2337, %v2370
        %v2387 = vadd.f32 %v2338, %v2371
        %v2388 = vadd.f32 %v2339, %v2372
        %v2389 = vadd.f32 %v2340, %v2373
        %v2390 = vadd.f32 %v2341, %v2374
        %v2391 = vadd.f32 %v2342, %v2375
        %v2392 = vadd.f32 %v2343, %v2376
        %v2393 = vadd.f32 %v2344, %v2377
        %v2394 = vadd.f32 %v2345, %v2378
        %v2395 = vadd.f32 %v2346, %v2379
        %v2396 = vadd.f32 %v2347, %v2380
        %v2397 = vld [vmem:[%s2348 + $0x8] sm:$0xff]
        %v2398 = vld [vmem:[%s2348 + $0x10] sm:$0xff]
        %v2399 = vld [vmem:[%s2348 + $0x28] sm:$0xff]
        %v2400 = vld [vmem:[%s2348 + $0x30] sm:$0xff]
        %v2401 = vld [vmem:[%s2348 + $0x48] sm:$0xff]
        %v2402 = vld [vmem:[%s2348 + $0x50] sm:$0xff]
        %v2403 = vld [vmem:[%s2348 + $0x68] sm:$0xff]
        %v2404 = vld [vmem:[%s2348 + $0x70] sm:$0xff]
        %v2405 = vld [vmem:[%s2348 + $0x88] sm:$0xff]
        %v2406 = vld [vmem:[%s2348 + $0x90] sm:$0xff]
        %v2407 = vld [vmem:[%s2348 + $0xa8] sm:$0xff]
        %v2408 = vld [vmem:[%s2348 + $0xb0] sm:$0xff]
        %v2409 = vld [vmem:[%s2348 + $0xc8] sm:$0xff]
        %v2410 = vld [vmem:[%s2348 + $0xd0] sm:$0xff]
        %v2411 = vld [vmem:[%s2348 + $0xe8] sm:$0xff]
        %v2412 = vld [vmem:[%s2348 + $0xf0] sm:$0xff]
        %v2413 = vmul.f32 %v2397, %v1454
        %v2414 = vmul.f32 %v2398, %v1454
        %v2415 = vmul.f32 %v2399, %v1454
        %v2416 = vmul.f32 %v2400, %v1454
        %v2417 = vmul.f32 %v2401, %v1454
        %v2418 = vmul.f32 %v2402, %v1454
        %v2419 = vmul.f32 %v2403, %v1454
        %v2420 = vmul.f32 %v2404, %v1454
        %v2421 = vmul.f32 %v2405, %v1454
        %v2422 = vmul.f32 %v2406, %v1454
        %v2423 = vmul.f32 %v2407, %v1454
        %v2424 = vmul.f32 %v2408, %v1454
        %v2425 = vmul.f32 %v2409, %v1454
        %v2426 = vmul.f32 %v2410, %v1454
        %v2427 = vmul.f32 %v2411, %v1454
        %v2428 = vmul.f32 %v2412, %v1454
        %v2429 = vadd.f32 %v2381, %v2413
        %v2430 = vadd.f32 %v2382, %v2414
        %v2431 = vadd.f32 %v2383, %v2415
        %v2432 = vadd.f32 %v2384, %v2416
        %v2433 = vadd.f32 %v2385, %v2417
        %v2434 = vadd.f32 %v2386, %v2418
        %v2435 = vadd.f32 %v2387, %v2419
        %v2436 = vadd.f32 %v2388, %v2420
        %v2437 = vadd.f32 %v2389, %v2421
        %v2438 = vadd.f32 %v2390, %v2422
        %v2439 = vadd.f32 %v2391, %v2423
        %v2440 = vadd.f32 %v2392, %v2424
        %v2441 = vadd.f32 %v2393, %v2425
        %v2442 = vadd.f32 %v2394, %v2426
        %v2443 = vadd.f32 %v2395, %v2427
        %v2444 = vadd.f32 %v2396, %v2428
        %v2445 = vld [vmem:[%s2348 + $0xa] sm:$0xff]
        %v2446 = vld [vmem:[%s2348 + $0x12] sm:$0xff]
        %v2447 = vld [vmem:[%s2348 + $0x2a] sm:$0xff]
        %v2448 = vld [vmem:[%s2348 + $0x32] sm:$0xff]
        %v2449 = vld [vmem:[%s2348 + $0x4a] sm:$0xff]
        %v2450 = vld [vmem:[%s2348 + $0x52] sm:$0xff]
        %v2451 = vld [vmem:[%s2348 + $0x6a] sm:$0xff]
        %v2452 = vld [vmem:[%s2348 + $0x72] sm:$0xff]
        %v2453 = vld [vmem:[%s2348 + $0x8a] sm:$0xff]
        %v2454 = vld [vmem:[%s2348 + $0x92] sm:$0xff]
        %v2455 = vld [vmem:[%s2348 + $0xaa] sm:$0xff]
        %v2456 = vld [vmem:[%s2348 + $0xb2] sm:$0xff]
        %v2457 = vld [vmem:[%s2348 + $0xca] sm:$0xff]
        %v2458 = vld [vmem:[%s2348 + $0xd2] sm:$0xff]
        %v2459 = vld [vmem:[%s2348 + $0xea] sm:$0xff]
        %v2460 = vld [vmem:[%s2348 + $0xf2] sm:$0xff]
        %v2461 = vmul.f32 %v2445, %v1506
        %v2462 = vmul.f32 %v2446, %v1506
        %v2463 = vmul.f32 %v2447, %v1506
        %v2464 = vmul.f32 %v2448, %v1506
        %v2465 = vmul.f32 %v2449, %v1506
        %v2466 = vmul.f32 %v2450, %v1506
        %v2467 = vmul.f32 %v2451, %v1506
        %v2468 = vmul.f32 %v2452, %v1506
        %v2469 = vmul.f32 %v2453, %v1506
        %v2470 = vmul.f32 %v2454, %v1506
        %v2471 = vmul.f32 %v2455, %v1506
        %v2472 = vmul.f32 %v2456, %v1506
        %v2473 = vmul.f32 %v2457, %v1506
        %v2474 = vmul.f32 %v2458, %v1506
        %v2475 = vmul.f32 %v2459, %v1506
        %v2476 = vmul.f32 %v2460, %v1506
        %v2477 = vadd.f32 %v2429, %v2461
        %v2478 = vadd.f32 %v2430, %v2462
        %v2479 = vadd.f32 %v2431, %v2463
        %v2480 = vadd.f32 %v2432, %v2464
        %v2481 = vadd.f32 %v2433, %v2465
        %v2482 = vadd.f32 %v2434, %v2466
        %v2483 = vadd.f32 %v2435, %v2467
        %v2484 = vadd.f32 %v2436, %v2468
        %v2485 = vadd.f32 %v2437, %v2469
        %v2486 = vadd.f32 %v2438, %v2470
        %v2487 = vadd.f32 %v2439, %v2471
        %v2488 = vadd.f32 %v2440, %v2472
        %v2489 = vadd.f32 %v2441, %v2473
        %v2490 = vadd.f32 %v2442, %v2474
        %v2491 = vadd.f32 %v2443, %v2475
        %v2492 = vadd.f32 %v2444, %v2476
        %s2493 = scalar_lea.vmem [#allocation3], 384
        %v2494 = vld [vmem:[%s2493 + $0x6] sm:$0xff]
        %v2495 = vld [vmem:[%s2493 + $0xe] sm:$0xff]
        %v2496 = vld [vmem:[%s2493 + $0x26] sm:$0xff]
        %v2497 = vld [vmem:[%s2493 + $0x2e] sm:$0xff]
        %v2498 = vld [vmem:[%s2493 + $0x46] sm:$0xff]
        %v2499 = vld [vmem:[%s2493 + $0x4e] sm:$0xff]
        %v2500 = vld [vmem:[%s2493 + $0x66] sm:$0xff]
        %v2501 = vld [vmem:[%s2493 + $0x6e] sm:$0xff]
        %v2502 = vld [vmem:[%s2493 + $0x86] sm:$0xff]
        %v2503 = vld [vmem:[%s2493 + $0x8e] sm:$0xff]
        %v2504 = vld [vmem:[%s2493 + $0xa6] sm:$0xff]
        %v2505 = vld [vmem:[%s2493 + $0xae] sm:$0xff]
        %v2506 = vld [vmem:[%s2493 + $0xc6] sm:$0xff]
        %v2507 = vld [vmem:[%s2493 + $0xce] sm:$0xff]
        %v2508 = vld [vmem:[%s2493 + $0xe6] sm:$0xff]
        %v2509 = vld [vmem:[%s2493 + $0xee] sm:$0xff]
        %v2510 = vmul.f32 %v2494, %v1559
        %v2511 = vmul.f32 %v2495, %v1559
        %v2512 = vmul.f32 %v2496, %v1559
        %v2513 = vmul.f32 %v2497, %v1559
        %v2514 = vmul.f32 %v2498, %v1559
        %v2515 = vmul.f32 %v2499, %v1559
        %v2516 = vmul.f32 %v2500, %v1559
        %v2517 = vmul.f32 %v2501, %v1559
        %v2518 = vmul.f32 %v2502, %v1559
        %v2519 = vmul.f32 %v2503, %v1559
        %v2520 = vmul.f32 %v2504, %v1559
        %v2521 = vmul.f32 %v2505, %v1559
        %v2522 = vmul.f32 %v2506, %v1559
        %v2523 = vmul.f32 %v2507, %v1559
        %v2524 = vmul.f32 %v2508, %v1559
        %v2525 = vmul.f32 %v2509, %v1559
        %v2526 = vadd.f32 %v2477, %v2510
        %v2527 = vadd.f32 %v2478, %v2511
        %v2528 = vadd.f32 %v2479, %v2512
        %v2529 = vadd.f32 %v2480, %v2513
        %v2530 = vadd.f32 %v2481, %v2514
        %v2531 = vadd.f32 %v2482, %v2515
        %v2532 = vadd.f32 %v2483, %v2516
        %v2533 = vadd.f32 %v2484, %v2517
        %v2534 = vadd.f32 %v2485, %v2518
        %v2535 = vadd.f32 %v2486, %v2519
        %v2536 = vadd.f32 %v2487, %v2520
        %v2537 = vadd.f32 %v2488, %v2521
        %v2538 = vadd.f32 %v2489, %v2522
        %v2539 = vadd.f32 %v2490, %v2523
        %v2540 = vadd.f32 %v2491, %v2524
        %v2541 = vadd.f32 %v2492, %v2525
        %v2542 = vld [vmem:[%s2493 + $0x8] sm:$0xff]
        %v2543 = vld [vmem:[%s2493 + $0x10] sm:$0xff]
        %v2544 = vld [vmem:[%s2493 + $0x28] sm:$0xff]
        %v2545 = vld [vmem:[%s2493 + $0x30] sm:$0xff]
        %v2546 = vld [vmem:[%s2493 + $0x48] sm:$0xff]
        %v2547 = vld [vmem:[%s2493 + $0x50] sm:$0xff]
        %v2548 = vld [vmem:[%s2493 + $0x68] sm:$0xff]
        %v2549 = vld [vmem:[%s2493 + $0x70] sm:$0xff]
        %v2550 = vld [vmem:[%s2493 + $0x88] sm:$0xff]
        %v2551 = vld [vmem:[%s2493 + $0x90] sm:$0xff]
        %v2552 = vld [vmem:[%s2493 + $0xa8] sm:$0xff]
        %v2553 = vld [vmem:[%s2493 + $0xb0] sm:$0xff]
        %v2554 = vld [vmem:[%s2493 + $0xc8] sm:$0xff]
        %v2555 = vld [vmem:[%s2493 + $0xd0] sm:$0xff]
        %v2556 = vld [vmem:[%s2493 + $0xe8] sm:$0xff]
        %v2557 = vld [vmem:[%s2493 + $0xf0] sm:$0xff]
        %v2558 = vmul.f32 %v2542, %v1611
        %v2559 = vmul.f32 %v2543, %v1611
        %v2560 = vmul.f32 %v2544, %v1611
        %v2561 = vmul.f32 %v2545, %v1611
        %v2562 = vmul.f32 %v2546, %v1611
        %v2563 = vmul.f32 %v2547, %v1611
        %v2564 = vmul.f32 %v2548, %v1611
        %v2565 = vmul.f32 %v2549, %v1611
        %v2566 = vmul.f32 %v2550, %v1611
        %v2567 = vmul.f32 %v2551, %v1611
        %v2568 = vmul.f32 %v2552, %v1611
        %v2569 = vmul.f32 %v2553, %v1611
        %v2570 = vmul.f32 %v2554, %v1611
        %v2571 = vmul.f32 %v2555, %v1611
        %v2572 = vmul.f32 %v2556, %v1611
        %v2573 = vmul.f32 %v2557, %v1611
        %v2574 = vadd.f32 %v2526, %v2558
        %v2575 = vadd.f32 %v2527, %v2559
        %v2576 = vadd.f32 %v2528, %v2560
        %v2577 = vadd.f32 %v2529, %v2561
        %v2578 = vadd.f32 %v2530, %v2562
        %v2579 = vadd.f32 %v2531, %v2563
        %v2580 = vadd.f32 %v2532, %v2564
        %v2581 = vadd.f32 %v2533, %v2565
        %v2582 = vadd.f32 %v2534, %v2566
        %v2583 = vadd.f32 %v2535, %v2567
        %v2584 = vadd.f32 %v2536, %v2568
        %v2585 = vadd.f32 %v2537, %v2569
        %v2586 = vadd.f32 %v2538, %v2570
        %v2587 = vadd.f32 %v2539, %v2571
        %v2588 = vadd.f32 %v2540, %v2572
        %v2589 = vadd.f32 %v2541, %v2573
        %v2590 = vld [vmem:[%s2493 + $0xa] sm:$0xff]
        %v2591 = vld [vmem:[%s2493 + $0x12] sm:$0xff]
        %v2592 = vld [vmem:[%s2493 + $0x2a] sm:$0xff]
        %v2593 = vld [vmem:[%s2493 + $0x32] sm:$0xff]
        %v2594 = vld [vmem:[%s2493 + $0x4a] sm:$0xff]
        %v2595 = vld [vmem:[%s2493 + $0x52] sm:$0xff]
        %v2596 = vld [vmem:[%s2493 + $0x6a] sm:$0xff]
        %v2597 = vld [vmem:[%s2493 + $0x72] sm:$0xff]
        %v2598 = vld [vmem:[%s2493 + $0x8a] sm:$0xff]
        %v2599 = vld [vmem:[%s2493 + $0x92] sm:$0xff]
        %v2600 = vld [vmem:[%s2493 + $0xaa] sm:$0xff]
        %v2601 = vld [vmem:[%s2493 + $0xb2] sm:$0xff]
        %v2602 = vld [vmem:[%s2493 + $0xca] sm:$0xff]
        %v2603 = vld [vmem:[%s2493 + $0xd2] sm:$0xff]
        %v2604 = vld [vmem:[%s2493 + $0xea] sm:$0xff]
        %v2605 = vld [vmem:[%s2493 + $0xf2] sm:$0xff]
        %v2606 = vmul.f32 %v2590, %v1663
        %v2607 = vmul.f32 %v2591, %v1663
        %v2608 = vmul.f32 %v2592, %v1663
        %v2609 = vmul.f32 %v2593, %v1663
        %v2610 = vmul.f32 %v2594, %v1663
        %v2611 = vmul.f32 %v2595, %v1663
        %v2612 = vmul.f32 %v2596, %v1663
        %v2613 = vmul.f32 %v2597, %v1663
        %v2614 = vmul.f32 %v2598, %v1663
        %v2615 = vmul.f32 %v2599, %v1663
        %v2616 = vmul.f32 %v2600, %v1663
        %v2617 = vmul.f32 %v2601, %v1663
        %v2618 = vmul.f32 %v2602, %v1663
        %v2619 = vmul.f32 %v2603, %v1663
        %v2620 = vmul.f32 %v2604, %v1663
        %v2621 = vmul.f32 %v2605, %v1663
        %v2622 = vadd.f32 %v2574, %v2606
        %v2623 = vadd.f32 %v2575, %v2607
        %v2624 = vadd.f32 %v2576, %v2608
        %v2625 = vadd.f32 %v2577, %v2609
        %v2626 = vadd.f32 %v2578, %v2610
        %v2627 = vadd.f32 %v2579, %v2611
        %v2628 = vadd.f32 %v2580, %v2612
        %v2629 = vadd.f32 %v2581, %v2613
        %v2630 = vadd.f32 %v2582, %v2614
        %v2631 = vadd.f32 %v2583, %v2615
        %v2632 = vadd.f32 %v2584, %v2616
        %v2633 = vadd.f32 %v2585, %v2617
        %v2634 = vadd.f32 %v2586, %v2618
        %v2635 = vadd.f32 %v2587, %v2619
        %v2636 = vadd.f32 %v2588, %v2620
        %v2637 = vadd.f32 %v2589, %v2621
        %v2638 = vpack.c.bf16 %v2623, %v2622
        %v2639 = vpack.c.bf16 %v2625, %v2624
        %v2640 = vpack.c.bf16 %v2627, %v2626
        %v2641 = vpack.c.bf16 %v2629, %v2628
        %v2642 = vpack.c.bf16 %v2631, %v2630
        %v2643 = vpack.c.bf16 %v2633, %v2632
        %v2644 = vpack.c.bf16 %v2635, %v2634
        %v2645 = vpack.c.bf16 %v2637, %v2636
        %v2646 = vld [vmem:[#allocation14] sm:$0xf]
        %v2647 = vld [vmem:[#allocation14 + $0x4] sm:$0xf]
        %v2648 = vld [vmem:[#allocation14 + $0x8] sm:$0xf]
        %v2649 = vld [vmem:[#allocation14 + $0xc] sm:$0xf]
        %v2650 = vld [vmem:[#allocation14 + $0x10] sm:$0xf]
        %v2651 = vld [vmem:[#allocation14 + $0x14] sm:$0xf]
        %v2652 = vld [vmem:[#allocation14 + $0x18] sm:$0xf]
        %v2653 = vld [vmem:[#allocation14 + $0x1c] sm:$0xf]
        %v2654 = vld [vmem:[#allocation14 + $0x20] sm:$0xf]
        %v2655 = vld [vmem:[#allocation14 + $0x24] sm:$0xf]
        %v2656 = vld [vmem:[#allocation14 + $0x28] sm:$0xf]
        %v2657 = vld [vmem:[#allocation14 + $0x2c] sm:$0xf]
        %v2658 = vld [vmem:[#allocation14 + $0x30] sm:$0xf]
        %v2659 = vld [vmem:[#allocation14 + $0x34] sm:$0xf]
        %v2660 = vld [vmem:[#allocation14 + $0x38] sm:$0xf]
        %v2661 = vld [vmem:[#allocation14 + $0x3c] sm:$0xf]
        %v2662 = vld [vmem:[%s6] sm:$0x1]
        %v2664 = vlaneseq
        %v2665 = vshrl.u32 %v2664, 7
        %v2666 = vsub.s32 0, %v2665
        %v2667 = vrot.slane %v2662, %v2666
        %v2685 = vunpack.c.l.b16 %v2646
        %v2686 = vunpack.c.l.b16 %v2647
        %v2687 = vunpack.c.l.b16 %v2648
        %v2688 = vunpack.c.l.b16 %v2649
        %v2689 = vunpack.c.l.b16 %v2650
        %v2690 = vunpack.c.l.b16 %v2651
        %v2691 = vunpack.c.l.b16 %v2652
        %v2692 = vunpack.c.l.b16 %v2653
        %v2693 = vunpack.c.l.b16 %v2654
        %v2694 = vunpack.c.l.b16 %v2655
        %v2695 = vunpack.c.l.b16 %v2656
        %v2696 = vunpack.c.l.b16 %v2657
        %v2697 = vunpack.c.l.b16 %v2658
        %v2698 = vunpack.c.l.b16 %v2659
        %v2699 = vunpack.c.l.b16 %v2660
        %v2700 = vunpack.c.l.b16 %v2661
        %v2701 = vpack.c.b16 %v2686, %v2685
        %v2702 = vpack.c.b16 %v2688, %v2687
        %v2703 = vpack.c.b16 %v2690, %v2689
        %v2704 = vpack.c.b16 %v2692, %v2691
        %v2705 = vpack.c.b16 %v2694, %v2693
        %v2706 = vpack.c.b16 %v2696, %v2695
        %v2707 = vpack.c.b16 %v2698, %v2697
        %v2708 = vpack.c.b16 %v2700, %v2699
        %2717 = vmatprep.subr.bf16.mxu0 0
        %2718 = vmatpush1.bf16.msra.mxu0 %v2701
        %2719 = vmatprep.subr.bf16.mxu0 0
        %2720 = vmatpush1.bf16.msra.mxu0 %v2702
        %2721 = vmatprep.subr.bf16.mxu0 0
        %2722 = vmatpush1.bf16.msra.mxu0 %v2703
        %2723 = vmatprep.subr.bf16.mxu0 0
        %2724 = vmatpush1.bf16.msra.mxu0 %v2704
        %2725 = vmatprep.subr.bf16.mxu0 0
        %2726 = vmatpush1.bf16.msra.mxu0 %v2705
        %2727 = vmatprep.subr.bf16.mxu0 0
        %2728 = vmatpush1.bf16.msra.mxu0 %v2706
        %2729 = vmatprep.subr.bf16.mxu0 0
        %2730 = vmatpush1.bf16.msra.mxu0 %v2707
        %2731 = vmatprep.subr.bf16.mxu0 0
        %2732 = vmatpush1.bf16.msra.mxu0 %v2708
        %2733 = vmatprep.subr.bf16.mxu0 0
        %2734 = vmatpush1.bf16.msra.mxu0 0
        %2735 = vmatprep.subr.bf16.mxu0 0
        %2736 = vmatpush1.bf16.msra.mxu0 0
        %2737 = vmatprep.subr.bf16.mxu0 0
        %2738 = vmatpush1.bf16.msra.mxu0 0
        %2739 = vmatprep.subr.bf16.mxu0 0
        %2740 = vmatpush1.bf16.msra.mxu0 0
        %2741 = vmatprep.subr.bf16.mxu0 0
        %2742 = vmatpush1.bf16.msra.mxu0 0
        %2743 = vmatprep.subr.bf16.mxu0 0
        %2744 = vmatpush1.bf16.msra.mxu0 0
        %2745 = vmatprep.subr.bf16.mxu0 0
        %2746 = vmatpush1.bf16.msra.mxu0 0
        %2747 = vmatprep.subr.bf16.mxu0 0
        %2748 = vmatpush1.bf16.msra.mxu0 0
        %2749 = vmatprep.mubr.bf16.mxu0 0
        %2750 = vmatmul.mubr.bf16.gmra.mrb[0].mxu0 %v2638
        %v2751 = vpop.f32.mrb[0].mxu0
        %v2752 = vadd.f32 %v2667, %v2751
        %v2753 = vpop.f32.mrb[0].mxu0
        %v2754 = vpop.f32.mrb[0].mxu0
        %v2755 = vadd.f32 %v2667, %v2754
        %v2756 = vpop.f32.mrb[0].mxu0
        %2757 = vmatprep.mubr.bf16.mxu0 0
        %2758 = vmatmul.mubr.bf16.gmra.mrb[0].mxu0 %v2639
        %v2759 = vpop.f32.mrb[0].mxu0
        %v2760 = vadd.f32 %v2667, %v2759
        %v2761 = vpop.f32.mrb[0].mxu0
        %v2762 = vpop.f32.mrb[0].mxu0
        %v2763 = vadd.f32 %v2667, %v2762
        %v2764 = vpop.f32.mrb[0].mxu0
        %2765 = vmatprep.mubr.bf16.mxu0 0
        %2766 = vmatmul.mubr.bf16.gmra.mrb[0].mxu0 %v2640
        %v2767 = vpop.f32.mrb[0].mxu0
        %v2768 = vadd.f32 %v2667, %v2767
        %v2769 = vpop.f32.mrb[0].mxu0
        %v2770 = vpop.f32.mrb[0].mxu0
        %v2771 = vadd.f32 %v2667, %v2770
        %v2772 = vpop.f32.mrb[0].mxu0
        %2773 = vmatprep.mubr.bf16.mxu0 0
        %2774 = vmatmul.mubr.bf16.gmra.mrb[0].mxu0 %v2641
        %v2775 = vpop.f32.mrb[0].mxu0
        %v2776 = vadd.f32 %v2667, %v2775
        %v2777 = vpop.f32.mrb[0].mxu0
        %v2778 = vpop.f32.mrb[0].mxu0
        %v2779 = vadd.f32 %v2667, %v2778
        %v2780 = vpop.f32.mrb[0].mxu0
        %2781 = vmatprep.mubr.bf16.mxu0 0
        %2782 = vmatmul.mubr.bf16.gmra.mrb[0].mxu0 %v2642
        %v2783 = vpop.f32.mrb[0].mxu0
        %v2784 = vadd.f32 %v2667, %v2783
        %v2785 = vpop.f32.mrb[0].mxu0
        %v2786 = vpop.f32.mrb[0].mxu0
        %v2787 = vadd.f32 %v2667, %v2786
        %v2788 = vpop.f32.mrb[0].mxu0
        %2789 = vmatprep.mubr.bf16.mxu0 0
        %2790 = vmatmul.mubr.bf16.gmra.mrb[0].mxu0 %v2643
        %v2791 = vpop.f32.mrb[0].mxu0
        %v2792 = vadd.f32 %v2667, %v2791
        %v2793 = vpop.f32.mrb[0].mxu0
        %v2794 = vpop.f32.mrb[0].mxu0
        %v2795 = vadd.f32 %v2667, %v2794
        %v2796 = vpop.f32.mrb[0].mxu0
        %2797 = vmatprep.mubr.bf16.mxu0 0
        %2798 = vmatmul.mubr.bf16.gmra.mrb[0].mxu0 %v2644
        %v2799 = vpop.f32.mrb[0].mxu0
        %v2800 = vadd.f32 %v2667, %v2799
        %v2801 = vpop.f32.mrb[0].mxu0
        %v2802 = vpop.f32.mrb[0].mxu0
        %v2803 = vadd.f32 %v2667, %v2802
        %v2804 = vpop.f32.mrb[0].mxu0
        %2805 = vmatprep.mubr.bf16.mxu0 0
        %2806 = vmatmul.mubr.bf16.gmra.mrb[0].mxu0 %v2645
        %v2807 = vpop.f32.mrb[0].mxu0
        %v2808 = vadd.f32 %v2667, %v2807
        %v2809 = vpop.f32.mrb[0].mxu0
        %v2810 = vpop.f32.mrb[0].mxu0
        %v2811 = vadd.f32 %v2667, %v2810
        %v2812 = vpop.f32.mrb[0].mxu0
        %2813 = vdwg.mxu0
        %v2814 = vadd.f32 %v2203, %v2752
        %v2815 = vadd.f32 %v2204, %v2755
        %v2816 = vadd.f32 %v2205, %v2760
        %v2817 = vadd.f32 %v2206, %v2763
        %v2818 = vadd.f32 %v2207, %v2768
        %v2819 = vadd.f32 %v2208, %v2771
        %v2820 = vadd.f32 %v2209, %v2776
        %v2821 = vadd.f32 %v2210, %v2779
        %v2822 = vadd.f32 %v2211, %v2784
        %v2823 = vadd.f32 %v2212, %v2787
        %v2824 = vadd.f32 %v2213, %v2792
        %v2825 = vadd.f32 %v2214, %v2795
        %v2826 = vadd.f32 %v2215, %v2800
        %v2827 = vadd.f32 %v2216, %v2803
        %v2828 = vadd.f32 %v2217, %v2808
        %v2829 = vadd.f32 %v2218, %v2811
        %s2830 = scalar_lea.vmem %s402, 256 [#allocation15]
        %2831 = vst [vmem:[%s2830 + $0x8] sm:$0xff] %v2814
        %2832 = vst [vmem:[%s2830 + $0x18] sm:$0xff] %v2815
        %2833 = vst [vmem:[%s2830 + $0x28] sm:$0xff] %v2816
        %2834 = vst [vmem:[%s2830 + $0x38] sm:$0xff] %v2817
        %2835 = vst [vmem:[%s2830 + $0x48] sm:$0xff] %v2818
        %2836 = vst [vmem:[%s2830 + $0x58] sm:$0xff] %v2819
        %2837 = vst [vmem:[%s2830 + $0x68] sm:$0xff] %v2820
        %2838 = vst [vmem:[%s2830 + $0x78] sm:$0xff] %v2821
        %2839 = vst [vmem:[%s2830 + $0x88] sm:$0xff] %v2822
        %2840 = vst [vmem:[%s2830 + $0x98] sm:$0xff] %v2823
        %2841 = vst [vmem:[%s2830 + $0xa8] sm:$0xff] %v2824
        %2842 = vst [vmem:[%s2830 + $0xb8] sm:$0xff] %v2825
        %2843 = vst [vmem:[%s2830 + $0xc8] sm:$0xff] %v2826
        %2844 = vst [vmem:[%s2830 + $0xd8] sm:$0xff] %v2827
        %2845 = vst [vmem:[%s2830 + $0xe8] sm:$0xff] %v2828
        %2846 = vst [vmem:[%s2830 + $0xf8] sm:$0xff] %v2829
        %s2847 = smul.u32 8, 1
        %s2848 = smul.u32 %s2847, 16
        %s2849 = smul.u32 %s2848, 2
        %s2850 = smul.u32 %s2849, 1
        %s2851 = sshll.u32 %s2850, 4
        %2852 = dma.done [#allocation5], %s2851
        %s2853 = sand.u32 %s198, 1
        %s2854 = scalar_lea.sflag [#allocation8], %s2853
        %s2855 = sand.u32 %s198, 1
        %s2856 = smul.addr %s2855, 512
        %s2857 = scalar_lea.vmem [#allocation15], %s2856
        // Predicated region
        $region103: #{tpu_custom_call.1} parent=47 // pred_check
          %p2858 = pneg %p208
        $region104: #{tpu_custom_call.1} parent=47 // pred_check_branch
          %2860 = sbr.rel (%p2858) target = $region106
        $region105: #{tpu_custom_call.1} parent=47 // pred_region
          %s2862 = ssub.s32 8192, 8192
          %2863 = vsyncadd %s2854, %s2862
          %s2864 = smul.addr %s28, 64
          %s2865 = smul.addr %s2864, 128
          %s2866 = scalar_lea.hbm %s7, %s2865
          %s2867 = sshll.u32 %s2857, 4
          %s2868 = int_to_ptr.vmem [resolvable:$true] %s2867
          %2873 = dma.vmem_to_hbm [thread:$0]  %s2868, 8192, %s2866, %s2854, 256, 256, 16
        $region106: #{tpu_custom_call.1} parent=47 // pred_fallthru
          _
      $region48: #{tpu_custom_call.1} parent=5 // pred_fallthru
        _
      %p2874 = scmp.le.s32.totalorder 2, %s23
      // Predicated region
      $region107: #{tpu_custom_call.1} parent=5 // pred_check
        %p2875 = pneg %p2874
      $region108: #{tpu_custom_call.1} parent=5 // pred_check_branch
        %2877 = sbr.rel (%p2875) target = $region110
      $region109: #{tpu_custom_call.1} parent=5 // pred_region
        %s2878 = ssub.s32 %s23, 2
        // Predicated region
        $region111: #{tpu_custom_call.1} parent=109 // pred_check
          %p2879 = pneg %p214
        $region112: #{tpu_custom_call.1} parent=109 // pred_check_branch
          %2881 = sbr.rel (%p2879) target = $region114
        $region113: #{tpu_custom_call.1} parent=109 // pred_region
          %s2882 = sand.u32 %s199, 1
          %s2883 = scalar_lea.sflag [#allocation8], %s2882
          %s2884 = sand.u32 %s199, 1
          %s2885 = smul.addr %s2884, 512
          %s2886 = scalar_lea.vmem [#allocation15], %s2885
          %2887 = dma.done %s2883, 8192
        $region114: #{tpu_custom_call.1} parent=109 // pred_fallthru
          _
      $region110: #{tpu_custom_call.1} parent=5 // pred_fallthru
        _
    $region6: #{tpu_custom_call.1} parent=1 // loop_footer
      %s27 = sadd.s32 1, %s23
    $region7: #{tpu_custom_call.1} parent=1 // loop_footer_branch
      %22 = sbr.rel target = $region3
    $region8: #{tpu_custom_call.1} parent=1 // loop_exit
      _
    %2888 = vsyncpa [#allocation7], 1
    %s2889 = scalar_lea.sflag [#allocation7], 1
    %2890 = vsyncpa %s2889, 1
    %2891 = vsyncpa [#allocation10], 1
    %s2892 = scalar_lea.sflag [#allocation10], 1
    %2893 = vsyncpa %s2892, 1
    %2894 = vsyncpa [#allocation13], 1
    %2895 = vsyncpa [#allocation8], 1
    %s2896 = scalar_lea.sflag [#allocation8], 1
    %2897 = vsyncpa %s2896, 1
  %2898 = vsyncmov [#allocation5]
  %s2899 = vpop.sfrf %2898
  %p2900 = scmp.eq.s32.totalorder %s2899, 0
  %p2901 = pneg %p2900
  %2903 = shalt.err (%p2901)

</llo_original>
